<compile_context>
chip_gen: v7x
topology: tpu7x:2x2x1
jax: 0.10.0
libtpu: 0.0.40
codegen_flags: <defaults>
</compile_context>

<pallas_src>
import math
from functools import partial

import jax
import jax.numpy as jnp
import numpy as np
from jax.experimental import pallas as pl
from jax.experimental.pallas import tpu as pltpu


# ---------------- complex helpers on (re, im) float32 pairs -----------------
def cadd(a, b):
    return (a[0] + b[0], a[1] + b[1])


def csub(a, b):
    return (a[0] - b[0], a[1] - b[1])


def cneg(a):
    return (-a[0], -a[1])


def cmul(a, b):
    return (a[0] * b[0] - a[1] * b[1], a[0] * b[1] + a[1] * b[0])


def cscale(s, a):
    return (s * a[0], s * a[1])


def _rrecip(x):
    # EUP approximate reciprocal + one Newton step -> ~full f32 precision,
    # no f32 divide on the VALU.
    r = pl.reciprocal(x, approx=True)
    return r * (2.0 - x * r)


def crecip(z):
    inv = _rrecip(z[0] * z[0] + z[1] * z[1])
    return (z[0] * inv, -z[1] * inv)


def csqrt(a):
    # principal branch sqrt of complex (re, im)
    r = jnp.sqrt(a[0] * a[0] + a[1] * a[1])
    re = jnp.sqrt(jnp.maximum(0.5 * (r + a[0]), 0.0))
    im = jnp.sqrt(jnp.maximum(0.5 * (r - a[0]), 0.0))
    return (re, jnp.where(a[1] < 0, -im, im))


def matmul2(A, B):
    a00, a01, a10, a11 = A
    b00, b01, b10, b11 = B
    return (cadd(cmul(a00, b00), cmul(a01, b10)),
            cadd(cmul(a00, b01), cmul(a01, b11)),
            cadd(cmul(a10, b00), cmul(a11, b10)),
            cadd(cmul(a10, b01), cmul(a11, b11)))


def matmul2_sym_right(T, m0, m1):
    # T @ [[m0, m1], [m1, m0]]  (symmetric interface matrix on the right)
    t00, t01, t10, t11 = T
    return (cadd(cmul(t00, m0), cmul(t01, m1)),
            cadd(cmul(t00, m1), cmul(t01, m0)),
            cadd(cmul(t10, m0), cmul(t11, m1)),
            cadd(cmul(t10, m1), cmul(t11, m0)))


def layer_matrix(p0, p1, q0, q1, em, ep):
    # [[p0,p1],[p1,p0]] @ diag(em, ep) @ [[q0,q1],[q1,q0]]  (diag-aware: skips
    # the zero off-diagonal products of the propagation matrix).
    u0 = cmul(p0, em)
    u1 = cmul(p1, ep)
    v0 = cmul(p1, em)
    v1 = cmul(p0, ep)
    return (cadd(cmul(u0, q0), cmul(u1, q1)),
            cadd(cmul(u0, q1), cmul(u1, q0)),
            cadd(cmul(v0, q0), cmul(v1, q1)),
            cadd(cmul(v0, q1), cmul(v1, q0)))


# ------------------------------- Pallas kernel -------------------------------
def _tmm_kernel(num_layers, thick_ref, sinth_ref, wl_ref,
                ner_ref, nei_ref, nsr_ref, nsi_ref, lnr_ref, lni_ref, out_ref):
    sin_th = sinth_ref[...]                        # [A, 1]  real
    inv_wl = _rrecip(wl_ref[...])                  # [1, TL]
    n_env = (ner_ref[...], nei_ref[...])           # [1, TL] complex
    n_subs = (nsr_ref[...], nsi_ref[...])          # [1, TL] complex

    # in-plane wavevector nx = n_env * sin(theta)  -> [A, TL]
    nx = (n_env[0] * sin_th, n_env[1] * sin_th)
    nx2 = cmul(nx, nx)

    def kz_of(n2):                                 # sqrt(n^2 - nx^2)
        return csqrt(csub(n2, nx2))

    # ---- kz's shared across polarizations and interfaces (one csqrt each) --
    kz_air = csqrt((1.0 - nx2[0], -nx2[1]))        # n_air = 1
    n_env2 = cmul(n_env, n_env)
    n_subs2 = cmul(n_subs, n_subs)
    kz_env = kz_of(n_env2)
    kz_subs = kz_of(n_subs2)

    inv_2kz_air = crecip(cscale(2.0, kz_air))      # reused by every layer + subs
    inv_2kz_env = crecip(cscale(2.0, kz_env))
    inv_n_env = crecip(n_env)
    inv_n_subs = crecip(n_subs)

    # ---- environment interface (env -> air) --------------------------------
    # s-pol: (1/t) [[1, r],[r, 1]] = [[m0,m1],[m1,m0]], m = (kz_i +/- kz_j)/(2 kz_i)
    m0 = cmul(cadd(kz_env, kz_air), inv_2kz_env)
    m1 = cmul(csub(kz_env, kz_air), inv_2kz_env)
    T_s = (m0, m1, m1, m0)
    # p-pol: a = nj^2 kz_i = kz_env, b = ni^2 kz_j = n_env^2 kz_air,
    #        denominator 2 * n_env * n_air * kz_env
    b_env = cmul(n_env2, kz_air)
    inv_e = cmul(inv_n_env, inv_2kz_env)
    m0 = cmul(cadd(kz_env, b_env), inv_e)
    m1 = cmul(csub(kz_env, b_env), inv_e)
    T_p = (m0, m1, m1, m0)

    # ---- coherent layers ----------------------------------------------------
    two_pi = 2.0 * math.pi
    for l in range(num_layers):
        n_l = (lnr_ref[l], lni_ref[l])             # [1, TL]
        d = thick_ref[l]                           # SMEM scalar (no recompile on change)
        nl2 = cmul(n_l, n_l)
        kz_l = kz_of(nl2)                          # one csqrt per layer, shared s/p
        inv_n_l = crecip(n_l)
        inv_2kz_l = crecip(cscale(2.0, kz_l))

        # propagation phases (polarization independent, one exp per layer)
        coef = (two_pi * d) * inv_wl               # [1, TL]
        pr = coef * kz_l[0]
        pim = coef * kz_l[1]
        eg = jnp.exp(pim)
        egi = _rrecip(eg)                          # exp(-pim) without second exp
        cp = jnp.cos(pr)
        sp = jnp.sin(pr)
        em = (eg * cp, -eg * sp)                   # exp(-i*phi)
        ep = (egi * cp, egi * sp)                  # exp(+i*phi)

        # s-pol interfaces: air->l and l->air share sum/diff of kz's
        sum_s = cadd(kz_air, kz_l)
        dif_s = csub(kz_air, kz_l)
        p0 = cmul(sum_s, inv_2kz_air)
        p1 = cmul(dif_s, inv_2kz_air)
        q0 = cmul(sum_s, inv_2kz_l)
        q1 = cneg(cmul(dif_s, inv_2kz_l))
        T_s = matmul2(T_s, layer_matrix(p0, p1, q0, q1, em, ep))

        # p-pol interfaces
        a_p = cmul(nl2, kz_air)                    # n_l^2 kz_air
        sum_p = cadd(a_p, kz_l)
        dif_p = csub(a_p, kz_l)
        inv_a = cmul(inv_n_l, inv_2kz_air)         # 1/(2 n_l kz_air)
        inv_b = cmul(inv_n_l, inv_2kz_l)           # 1/(2 n_l kz_l)
        p0 = cmul(sum_p, inv_a)
        p1 = cmul(dif_p, inv_a)
        q0 = cmul(sum_p, inv_b)
        q1 = cneg(cmul(dif_p, inv_b))
        T_p = matmul2(T_p, layer_matrix(p0, p1, q0, q1, em, ep))

    # ---- substrate interface (air -> subs) ----------------------------------
    m0 = cmul(cadd(kz_air, kz_subs), inv_2kz_air)
    m1 = cmul(csub(kz_air, kz_subs), inv_2kz_air)
    T_s = matmul2_sym_right(T_s, m0, m1)
    a_s = cmul(n_subs2, kz_air)
    inv_s = cmul(inv_n_subs, inv_2kz_air)
    m0 = cmul(cadd(a_s, kz_subs), inv_s)
    m1 = cmul(csub(a_s, kz_subs), inv_s)
    T_p = matmul2_sym_right(T_p, m0, m1)

    # ---- packed, lane-dense output [16, A, TL] ------------------------------
    for k in range(4):
        out_ref[2 * k] = T_s[k][0]
        out_ref[2 * k + 1] = T_s[k][1]
        out_ref[8 + 2 * k] = T_p[k][0]
        out_ref[9 + 2 * k] = T_p[k][1]


# ------------------------------ wrapper (glue) -------------------------------
def tmm_forward(wavelengths, angles_deg, layer_ns, thicknesses, n_env, n_subs,
                *, tile_l=128):
    """Equivalent of Model.forward: returns dict mimicking OpticalCalculator."""
    L = int(wavelengths.shape[0])
    A = int(angles_deg.shape[0])
    NL = int(layer_ns.shape[0])

    n_tiles = max(1, -(-L // tile_l))
    Lp = n_tiles * tile_l
    pad = Lp - L

    wl_f = wavelengths.astype(jnp.float32)
    th = jnp.deg2rad(angles_deg.astype(jnp.float32))
    sin_th = jnp.sin(th)[:, None].astype(jnp.float32)              # [A, 1]

    def row(x):                                                    # [L] -> [1, Lp]
        if pad:
            x = jnp.pad(x, (0, pad), mode="edge")
        return x[None, :]

    wl_row = row(wl_f)
    ner = row(jnp.real(n_env).astype(jnp.float32))
    nei = row(jnp.imag(n_env).astype(jnp.float32))
    nsr = row(jnp.real(n_subs).astype(jnp.float32))
    nsi = row(jnp.imag(n_subs).astype(jnp.float32))

    ln = layer_ns
    if pad:
        ln = jnp.pad(ln, ((0, 0), (0, pad)), mode="edge")
    lnr = jnp.real(ln).astype(jnp.float32)[:, None, :]             # [NL, 1, Lp]
    lni = jnp.imag(ln).astype(jnp.float32)[:, None, :]

    thick = jnp.asarray(thicknesses, dtype=jnp.float32)            # [NL] -> SMEM

    row_spec = pl.BlockSpec((1, tile_l), lambda i: (0, i))
    ang_spec = pl.BlockSpec((A, 1), lambda i: (0, 0))
    ln_spec = pl.BlockSpec((NL, 1, tile_l), lambda i: (0, 0, i))
    smem_spec = pl.BlockSpec(memory_space=pltpu.MemorySpace.SMEM)
    out_spec = pl.BlockSpec((16, A, tile_l), lambda i: (0, 0, i))

    packed = pl.pallas_call(
        partial(_tmm_kernel, NL),
        grid=(n_tiles,),
        in_specs=[smem_spec, ang_spec, row_spec, row_spec, row_spec,
                  row_spec, row_spec, ln_spec, ln_spec],
        out_specs=out_spec,
        out_shape=jax.ShapeDtypeStruct((16, A, Lp), jnp.float32),
        compiler_params=pltpu.CompilerParams(dimension_semantics=("parallel",)),
    )(thick, sin_th, wl_row, ner, nei, nsr, nsi, lnr, lni)

    packed = packed[:, :, :L]                                      # [16, A, L]
    cplx = (packed[0::2] + 1j * packed[1::2]).astype(jnp.complex64)  # [8, A, L]
    cplx = jnp.transpose(cplx, (2, 1, 0))                          # [L, A, 8]
    Tm_s = cplx[..., 0:4].reshape(L, A, 2, 2)
    Tm_p = cplx[..., 4:8].reshape(L, A, 2, 2)

    nx = (n_env[:, None] * jnp.sin(th)[None, :]).astype(jnp.complex64)
    return {"Tm_s": Tm_s, "Tm_p": Tm_p, "n_env": n_env, "n_subs": n_subs, "nx": nx}


# -------------------------- pure-JAX reference (check) -----------------------
def tmm_reference(wavelengths, angles_deg, layer_ns, thicknesses, n_env, n_subs):
    wl = wavelengths.astype(jnp.float32)
    th = jnp.deg2rad(angles_deg.astype(jnp.float32))
    nx = (n_env[:, None] * jnp.sin(th)[None, :]).astype(jnp.complex64)
    n_air = jnp.ones_like(nx)

    def kz(n):
        return jnp.sqrt(n * n - nx * nx)

    def interface(pol, ni, nj):
        kzi, kzj = kz(ni), kz(nj)
        if pol == 's':
            r = (kzi - kzj) / (kzi + kzj)
            t = 2 * kzi / (kzi + kzj)
        else:
            a = nj * nj * kzi
            b = ni * ni * kzj
            r = (a - b) / (a + b)
            t = 2 * ni * nj * kzi / (a + b)
        row0 = jnp.stack([1 / t, r / t], -1)
        row1 = jnp.stack([r / t, 1 / t], -1)
        return jnp.stack([row0, row1], -2)

    def prop(n, d):
        phi = 2 * jnp.pi * d * kz(n) / wl[:, None]
        z = jnp.zeros_like(phi)
        row0 = jnp.stack([jnp.exp(-1j * phi), z], -1)
        row1 = jnp.stack([z, jnp.exp(1j * phi)], -1)
        return jnp.stack([row0, row1], -2)

    def stack(pol):
        ni_bc = jnp.broadcast_to(n_env[:, None], nx.shape)
        ns_bc = jnp.broadcast_to(n_subs[:, None], nx.shape)
        T = interface(pol, ni_bc, n_air)
        for l in range(layer_ns.shape[0]):
            nl = jnp.broadcast_to(layer_ns[l][:, None], nx.shape)
            T_l = interface(pol, n_air, nl) @ prop(nl, thicknesses[l]) @ interface(pol, nl, n_air)
            T = T @ T_l
        return T @ interface(pol, n_air, ns_bc)

    return stack('s'), stack('p')


if __name__ == "__main__":
    key = jax.random.PRNGKey(0)
    k1, k2 = jax.random.split(key)

    # L multiple of the 128-lane tile -> grid length 2 (both TCs on v7x).
    L, A = 256, 8
    wavelengths = 400.0 + 400.0 * jax.random.uniform(k1, (L,), dtype=jnp.float32)  # nm
    angles = 80.0 * jax.random.uniform(k2, (A,), dtype=jnp.float32)                # deg

    # deterministic synthetic stack: env=air, 2 coherent films, glass substrate
    wl = wavelengths
    n_env = jnp.ones((L,), dtype=jnp.complex64)
    n_subs = (1.50 + 4200.0 / wl ** 2).astype(jnp.complex64)
    layer_ns = jnp.stack([
        (2.00 + 1.0e4 / wl ** 2) + 1j * 0.01,   # absorbing high-index film, d = 120 nm
        (1.46 + 3.6e3 / wl ** 2) + 0.0j,        # silica-like film,          d =  85 nm
    ]).astype(jnp.complex64)
    thicknesses = (120.0, 85.0)

    out = tmm_forward(wavelengths, angles, layer_ns, thicknesses, n_env, n_subs)
    jax.block_until_ready(out)

    Ts_ref, Tp_ref = tmm_reference(wavelengths, angles, layer_ns, thicknesses,
                                   n_env, n_subs)
    np.testing.assert_allclose(np.asarray(out["Tm_s"]), np.asarray(Ts_ref),
                               rtol=2e-3, atol=2e-3)
    np.testing.assert_allclose(np.asarray(out["Tm_p"]), np.asarray(Tp_ref),
                               rtol=2e-3, atol=2e-3)
    print("KERNEL_OK")
</pallas_src>

<mosaic_0001>
module attributes {stable_mosaic.version = 11 : i64} {
  func.func @_tmm_kernel(%arg0: i32, %arg1: memref<2xf32, #tpu.memory_space<smem>>, %arg2: memref<8x1xf32, #tpu.memory_space<vmem>>, %arg3: memref<1x128xf32, #tpu.memory_space<vmem>>, %arg4: memref<1x128xf32, #tpu.memory_space<vmem>>, %arg5: memref<1x128xf32, #tpu.memory_space<vmem>>, %arg6: memref<1x128xf32, #tpu.memory_space<vmem>>, %arg7: memref<1x128xf32, #tpu.memory_space<vmem>>, %arg8: memref<2x1x128xf32, #tpu.memory_space<vmem>>, %arg9: memref<2x1x128xf32, #tpu.memory_space<vmem>>, %arg10: memref<16x8x128xf32, #tpu.memory_space<vmem>>) attributes {dimension_semantics = [#tpu.dimension_semantics<parallel>], iteration_bounds = array<i64: 2>, scalar_prefetch = 0 : i64, scratch_operands = 0 : i64, tpu.core_type = #tpu.core_type<tc>, window_params = [{transform_indices = @transform_0, window_bounds = array<i64: 2>}, {pipeline_mode = #tpu.pipeline_mode<synchronous>, transform_indices = @transform_1, window_bounds = array<i64: 8, 1>}, {transform_indices = @transform_2, window_bounds = array<i64: 1, 128>}, {transform_indices = @transform_3, window_bounds = array<i64: 1, 128>}, {transform_indices = @transform_4, window_bounds = array<i64: 1, 128>}, {transform_indices = @transform_5, window_bounds = array<i64: 1, 128>}, {transform_indices = @transform_6, window_bounds = array<i64: 1, 128>}, {transform_indices = @transform_7, window_bounds = array<i64: 2, 1, 128>}, {transform_indices = @transform_8, window_bounds = array<i64: 2, 1, 128>}, {transform_indices = @transform_9, window_bounds = array<i64: 16, 8, 128>}]} {
    %c0 = arith.constant 0 : index
    %c0_0 = arith.constant 0 : index
    %0 = vector.load %arg2[%c0, %c0_0] : memref<8x1xf32, #tpu.memory_space<vmem>>, vector<8x1xf32>
    %c0_1 = arith.constant 0 : index
    %c0_2 = arith.constant 0 : index
    %1 = vector.load %arg3[%c0_1, %c0_2] : memref<1x128xf32, #tpu.memory_space<vmem>>, vector<1x128xf32>
    %2 = tpu.reciprocal %1 {approx = true} : vector<1x128xf32> -> vector<1x128xf32>
    %3 = arith.mulf %1, %2 : vector<1x128xf32>
    %cst = arith.constant 2.000000e+00 : f32
    %4 = vector.broadcast %cst : f32 to vector<1x128xf32>
    %5 = arith.subf %4, %3 : vector<1x128xf32>
    %6 = arith.mulf %2, %5 : vector<1x128xf32>
    %c0_3 = arith.constant 0 : index
    %c0_4 = arith.constant 0 : index
    %7 = vector.load %arg4[%c0_3, %c0_4] : memref<1x128xf32, #tpu.memory_space<vmem>>, vector<1x128xf32>
    %c0_5 = arith.constant 0 : index
    %c0_6 = arith.constant 0 : index
    %8 = vector.load %arg5[%c0_5, %c0_6] : memref<1x128xf32, #tpu.memory_space<vmem>>, vector<1x128xf32>
    %c0_7 = arith.constant 0 : index
    %c0_8 = arith.constant 0 : index
    %9 = vector.load %arg6[%c0_7, %c0_8] : memref<1x128xf32, #tpu.memory_space<vmem>>, vector<1x128xf32>
    %c0_9 = arith.constant 0 : index
    %c0_10 = arith.constant 0 : index
    %10 = vector.load %arg7[%c0_9, %c0_10] : memref<1x128xf32, #tpu.memory_space<vmem>>, vector<1x128xf32>
    %11 = vector.broadcast %7 : vector<1x128xf32> to vector<8x128xf32>
    %12 = vector.broadcast %0 : vector<8x1xf32> to vector<8x128xf32>
    %13 = arith.mulf %11, %12 : vector<8x128xf32>
    %14 = vector.broadcast %8 : vector<1x128xf32> to vector<8x128xf32>
    %15 = vector.broadcast %0 : vector<8x1xf32> to vector<8x128xf32>
    %16 = arith.mulf %14, %15 : vector<8x128xf32>
    %17 = arith.mulf %13, %13 : vector<8x128xf32>
    %18 = arith.mulf %16, %16 : vector<8x128xf32>
    %19 = arith.subf %17, %18 : vector<8x128xf32>
    %20 = arith.mulf %13, %16 : vector<8x128xf32>
    %21 = arith.mulf %16, %13 : vector<8x128xf32>
    %22 = arith.addf %20, %21 : vector<8x128xf32>
    %cst_11 = arith.constant 1.000000e+00 : f32
    %23 = vector.broadcast %cst_11 : f32 to vector<8x128xf32>
    %24 = arith.subf %23, %19 : vector<8x128xf32>
    %cst_12 = arith.constant 0.000000e+00 : f32
    %25 = vector.broadcast %cst_12 : f32 to vector<8x128xf32>
    %26 = arith.subf %25, %22 : vector<8x128xf32>
    %27 = arith.mulf %24, %24 : vector<8x128xf32>
    %28 = arith.mulf %26, %26 : vector<8x128xf32>
    %29 = arith.addf %27, %28 : vector<8x128xf32>
    %30 = math.sqrt %29 : vector<8x128xf32>
    %31 = arith.addf %30, %24 : vector<8x128xf32>
    %cst_13 = arith.constant 5.000000e-01 : f32
    %32 = vector.broadcast %cst_13 : f32 to vector<8x128xf32>
    %33 = arith.mulf %32, %31 : vector<8x128xf32>
    %cst_14 = arith.constant 0.000000e+00 : f32
    %34 = vector.broadcast %cst_14 : f32 to vector<8x128xf32>
    %35 = arith.maximumf %33, %34 : vector<8x128xf32>
    %36 = math.sqrt %35 : vector<8x128xf32>
    %37 = arith.subf %30, %24 : vector<8x128xf32>
    %cst_15 = arith.constant 5.000000e-01 : f32
    %38 = vector.broadcast %cst_15 : f32 to vector<8x128xf32>
    %39 = arith.mulf %38, %37 : vector<8x128xf32>
    %cst_16 = arith.constant 0.000000e+00 : f32
    %40 = vector.broadcast %cst_16 : f32 to vector<8x128xf32>
    %41 = arith.maximumf %39, %40 : vector<8x128xf32>
    %42 = math.sqrt %41 : vector<8x128xf32>
    %cst_17 = arith.constant 0.000000e+00 : f32
    %43 = vector.broadcast %cst_17 : f32 to vector<8x128xf32>
    %44 = arith.cmpf olt, %26, %43 : vector<8x128xf32>
    %cst_18 = arith.constant 0.000000e+00 : f32
    %45 = vector.broadcast %cst_18 : f32 to vector<8x128xf32>
    %46 = arith.subf %45, %42 : vector<8x128xf32>
    %47 = arith.select %44, %46, %42 : vector<8x128xi1>, vector<8x128xf32>
    %48 = arith.mulf %7, %7 : vector<1x128xf32>
    %49 = arith.mulf %8, %8 : vector<1x128xf32>
    %50 = arith.subf %48, %49 : vector<1x128xf32>
    %51 = arith.mulf %7, %8 : vector<1x128xf32>
    %52 = arith.mulf %8, %7 : vector<1x128xf32>
    %53 = arith.addf %51, %52 : vector<1x128xf32>
    %54 = arith.mulf %9, %9 : vector<1x128xf32>
    %55 = arith.mulf %10, %10 : vector<1x128xf32>
    %56 = arith.subf %54, %55 : vector<1x128xf32>
    %57 = arith.mulf %9, %10 : vector<1x128xf32>
    %58 = arith.mulf %10, %9 : vector<1x128xf32>
    %59 = arith.addf %57, %58 : vector<1x128xf32>
    %60 = vector.broadcast %50 : vector<1x128xf32> to vector<8x128xf32>
    %61 = arith.subf %60, %19 : vector<8x128xf32>
    %62 = vector.broadcast %53 : vector<1x128xf32> to vector<8x128xf32>
    %63 = arith.subf %62, %22 : vector<8x128xf32>
    %64 = arith.mulf %61, %61 : vector<8x128xf32>
    %65 = arith.mulf %63, %63 : vector<8x128xf32>
    %66 = arith.addf %64, %65 : vector<8x128xf32>
    %67 = math.sqrt %66 : vector<8x128xf32>
    %68 = arith.addf %67, %61 : vector<8x128xf32>
    %cst_19 = arith.constant 5.000000e-01 : f32
    %69 = vector.broadcast %cst_19 : f32 to vector<8x128xf32>
    %70 = arith.mulf %69, %68 : vector<8x128xf32>
    %cst_20 = arith.constant 0.000000e+00 : f32
    %71 = vector.broadcast %cst_20 : f32 to vector<8x128xf32>
    %72 = arith.maximumf %70, %71 : vector<8x128xf32>
    %73 = math.sqrt %72 : vector<8x128xf32>
    %74 = arith.subf %67, %61 : vector<8x128xf32>
    %cst_21 = arith.constant 5.000000e-01 : f32
    %75 = vector.broadcast %cst_21 : f32 to vector<8x128xf32>
    %76 = arith.mulf %75, %74 : vector<8x128xf32>
    %cst_22 = arith.constant 0.000000e+00 : f32
    %77 = vector.broadcast %cst_22 : f32 to vector<8x128xf32>
    %78 = arith.maximumf %76, %77 : vector<8x128xf32>
    %79 = math.sqrt %78 : vector<8x128xf32>
    %cst_23 = arith.constant 0.000000e+00 : f32
    %80 = vector.broadcast %cst_23 : f32 to vector<8x128xf32>
    %81 = arith.cmpf olt, %63, %80 : vector<8x128xf32>
    %cst_24 = arith.constant 0.000000e+00 : f32
    %82 = vector.broadcast %cst_24 : f32 to vector<8x128xf32>
    %83 = arith.subf %82, %79 : vector<8x128xf32>
    %84 = arith.select %81, %83, %79 : vector<8x128xi1>, vector<8x128xf32>
    %85 = vector.broadcast %56 : vector<1x128xf32> to vector<8x128xf32>
    %86 = arith.subf %85, %19 : vector<8x128xf32>
    %87 = vector.broadcast %59 : vector<1x128xf32> to vector<8x128xf32>
    %88 = arith.subf %87, %22 : vector<8x128xf32>
    %89 = arith.mulf %86, %86 : vector<8x128xf32>
    %90 = arith.mulf %88, %88 : vector<8x128xf32>
    %91 = arith.addf %89, %90 : vector<8x128xf32>
    %92 = math.sqrt %91 : vector<8x128xf32>
    %93 = arith.addf %92, %86 : vector<8x128xf32>
    %cst_25 = arith.constant 5.000000e-01 : f32
    %94 = vector.broadcast %cst_25 : f32 to vector<8x128xf32>
    %95 = arith.mulf %94, %93 : vector<8x128xf32>
    %cst_26 = arith.constant 0.000000e+00 : f32
    %96 = vector.broadcast %cst_26 : f32 to vector<8x128xf32>
    %97 = arith.maximumf %95, %96 : vector<8x128xf32>
    %98 = math.sqrt %97 : vector<8x128xf32>
    %99 = arith.subf %92, %86 : vector<8x128xf32>
    %cst_27 = arith.constant 5.000000e-01 : f32
    %100 = vector.broadcast %cst_27 : f32 to vector<8x128xf32>
    %101 = arith.mulf %100, %99 : vector<8x128xf32>
    %cst_28 = arith.constant 0.000000e+00 : f32
    %102 = vector.broadcast %cst_28 : f32 to vector<8x128xf32>
    %103 = arith.maximumf %101, %102 : vector<8x128xf32>
    %104 = math.sqrt %103 : vector<8x128xf32>
    %cst_29 = arith.constant 0.000000e+00 : f32
    %105 = vector.broadcast %cst_29 : f32 to vector<8x128xf32>
    %106 = arith.cmpf olt, %88, %105 : vector<8x128xf32>
    %cst_30 = arith.constant 0.000000e+00 : f32
    %107 = vector.broadcast %cst_30 : f32 to vector<8x128xf32>
    %108 = arith.subf %107, %104 : vector<8x128xf32>
    %109 = arith.select %106, %108, %104 : vector<8x128xi1>, vector<8x128xf32>
    %cst_31 = arith.constant 2.000000e+00 : f32
    %110 = vector.broadcast %cst_31 : f32 to vector<8x128xf32>
    %111 = arith.mulf %110, %36 : vector<8x128xf32>
    %cst_32 = arith.constant 2.000000e+00 : f32
    %112 = vector.broadcast %cst_32 : f32 to vector<8x128xf32>
    %113 = arith.mulf %112, %47 : vector<8x128xf32>
    %114 = arith.mulf %111, %111 : vector<8x128xf32>
    %115 = arith.mulf %113, %113 : vector<8x128xf32>
    %116 = arith.addf %114, %115 : vector<8x128xf32>
    %117 = tpu.reciprocal %116 {approx = true} : vector<8x128xf32> -> vector<8x128xf32>
    %118 = arith.mulf %116, %117 : vector<8x128xf32>
    %cst_33 = arith.constant 2.000000e+00 : f32
    %119 = vector.broadcast %cst_33 : f32 to vector<8x128xf32>
    %120 = arith.subf %119, %118 : vector<8x128xf32>
    %121 = arith.mulf %117, %120 : vector<8x128xf32>
    %122 = arith.mulf %111, %121 : vector<8x128xf32>
    %cst_34 = arith.constant 0.000000e+00 : f32
    %123 = vector.broadcast %cst_34 : f32 to vector<8x128xf32>
    %124 = arith.subf %123, %113 : vector<8x128xf32>
    %125 = arith.mulf %124, %121 : vector<8x128xf32>
    %cst_35 = arith.constant 2.000000e+00 : f32
    %126 = vector.broadcast %cst_35 : f32 to vector<8x128xf32>
    %127 = arith.mulf %126, %73 : vector<8x128xf32>
    %cst_36 = arith.constant 2.000000e+00 : f32
    %128 = vector.broadcast %cst_36 : f32 to vector<8x128xf32>
    %129 = arith.mulf %128, %84 : vector<8x128xf32>
    %130 = arith.mulf %127, %127 : vector<8x128xf32>
    %131 = arith.mulf %129, %129 : vector<8x128xf32>
    %132 = arith.addf %130, %131 : vector<8x128xf32>
    %133 = tpu.reciprocal %132 {approx = true} : vector<8x128xf32> -> vector<8x128xf32>
    %134 = arith.mulf %132, %133 : vector<8x128xf32>
    %cst_37 = arith.constant 2.000000e+00 : f32
    %135 = vector.broadcast %cst_37 : f32 to vector<8x128xf32>
    %136 = arith.subf %135, %134 : vector<8x128xf32>
    %137 = arith.mulf %133, %136 : vector<8x128xf32>
    %138 = arith.mulf %127, %137 : vector<8x128xf32>
    %cst_38 = arith.constant 0.000000e+00 : f32
    %139 = vector.broadcast %cst_38 : f32 to vector<8x128xf32>
    %140 = arith.subf %139, %129 : vector<8x128xf32>
    %141 = arith.mulf %140, %137 : vector<8x128xf32>
    %142 = arith.mulf %7, %7 : vector<1x128xf32>
    %143 = arith.mulf %8, %8 : vector<1x128xf32>
    %144 = arith.addf %142, %143 : vector<1x128xf32>
    %145 = tpu.reciprocal %144 {approx = true} : vector<1x128xf32> -> vector<1x128xf32>
    %146 = arith.mulf %144, %145 : vector<1x128xf32>
    %cst_39 = arith.constant 2.000000e+00 : f32
    %147 = vector.broadcast %cst_39 : f32 to vector<1x128xf32>
    %148 = arith.subf %147, %146 : vector<1x128xf32>
    %149 = arith.mulf %145, %148 : vector<1x128xf32>
    %150 = arith.mulf %7, %149 : vector<1x128xf32>
    %cst_40 = arith.constant 0.000000e+00 : f32
    %151 = vector.broadcast %cst_40 : f32 to vector<1x128xf32>
    %152 = arith.subf %151, %8 : vector<1x128xf32>
    %153 = arith.mulf %152, %149 : vector<1x128xf32>
    %154 = arith.mulf %9, %9 : vector<1x128xf32>
    %155 = arith.mulf %10, %10 : vector<1x128xf32>
    %156 = arith.addf %154, %155 : vector<1x128xf32>
    %157 = tpu.reciprocal %156 {approx = true} : vector<1x128xf32> -> vector<1x128xf32>
    %158 = arith.mulf %156, %157 : vector<1x128xf32>
    %cst_41 = arith.constant 2.000000e+00 : f32
    %159 = vector.broadcast %cst_41 : f32 to vector<1x128xf32>
    %160 = arith.subf %159, %158 : vector<1x128xf32>
    %161 = arith.mulf %157, %160 : vector<1x128xf32>
    %162 = arith.mulf %9, %161 : vector<1x128xf32>
    %cst_42 = arith.constant 0.000000e+00 : f32
    %163 = vector.broadcast %cst_42 : f32 to vector<1x128xf32>
    %164 = arith.subf %163, %10 : vector<1x128xf32>
    %165 = arith.mulf %164, %161 : vector<1x128xf32>
    %166 = arith.addf %73, %36 : vector<8x128xf32>
    %167 = arith.addf %84, %47 : vector<8x128xf32>
    %168 = arith.mulf %166, %138 : vector<8x128xf32>
    %169 = arith.mulf %167, %141 : vector<8x128xf32>
    %170 = arith.subf %168, %169 : vector<8x128xf32>
    %171 = arith.mulf %166, %141 : vector<8x128xf32>
    %172 = arith.mulf %167, %138 : vector<8x128xf32>
    %173 = arith.addf %171, %172 : vector<8x128xf32>
    %174 = arith.subf %73, %36 : vector<8x128xf32>
    %175 = arith.subf %84, %47 : vector<8x128xf32>
    %176 = arith.mulf %174, %138 : vector<8x128xf32>
    %177 = arith.mulf %175, %141 : vector<8x128xf32>
    %178 = arith.subf %176, %177 : vector<8x128xf32>
    %179 = arith.mulf %174, %141 : vector<8x128xf32>
    %180 = arith.mulf %175, %138 : vector<8x128xf32>
    %181 = arith.addf %179, %180 : vector<8x128xf32>
    %182 = vector.broadcast %50 : vector<1x128xf32> to vector<8x128xf32>
    %183 = arith.mulf %182, %36 : vector<8x128xf32>
    %184 = vector.broadcast %53 : vector<1x128xf32> to vector<8x128xf32>
    %185 = arith.mulf %184, %47 : vector<8x128xf32>
    %186 = arith.subf %183, %185 : vector<8x128xf32>
    %187 = vector.broadcast %50 : vector<1x128xf32> to vector<8x128xf32>
    %188 = arith.mulf %187, %47 : vector<8x128xf32>
    %189 = vector.broadcast %53 : vector<1x128xf32> to vector<8x128xf32>
    %190 = arith.mulf %189, %36 : vector<8x128xf32>
    %191 = arith.addf %188, %190 : vector<8x128xf32>
    %192 = vector.broadcast %150 : vector<1x128xf32> to vector<8x128xf32>
    %193 = arith.mulf %192, %138 : vector<8x128xf32>
    %194 = vector.broadcast %153 : vector<1x128xf32> to vector<8x128xf32>
    %195 = arith.mulf %194, %141 : vector<8x128xf32>
    %196 = arith.subf %193, %195 : vector<8x128xf32>
    %197 = vector.broadcast %150 : vector<1x128xf32> to vector<8x128xf32>
    %198 = arith.mulf %197, %141 : vector<8x128xf32>
    %199 = vector.broadcast %153 : vector<1x128xf32> to vector<8x128xf32>
    %200 = arith.mulf %199, %138 : vector<8x128xf32>
    %201 = arith.addf %198, %200 : vector<8x128xf32>
    %202 = arith.addf %73, %186 : vector<8x128xf32>
    %203 = arith.addf %84, %191 : vector<8x128xf32>
    %204 = arith.mulf %202, %196 : vector<8x128xf32>
    %205 = arith.mulf %203, %201 : vector<8x128xf32>
    %206 = arith.subf %204, %205 : vector<8x128xf32>
    %207 = arith.mulf %202, %201 : vector<8x128xf32>
    %208 = arith.mulf %203, %196 : vector<8x128xf32>
    %209 = arith.addf %207, %208 : vector<8x128xf32>
    %210 = arith.subf %73, %186 : vector<8x128xf32>
    %211 = arith.subf %84, %191 : vector<8x128xf32>
    %212 = arith.mulf %210, %196 : vector<8x128xf32>
    %213 = arith.mulf %211, %201 : vector<8x128xf32>
    %214 = arith.subf %212, %213 : vector<8x128xf32>
    %215 = arith.mulf %210, %201 : vector<8x128xf32>
    %216 = arith.mulf %211, %196 : vector<8x128xf32>
    %217 = arith.addf %215, %216 : vector<8x128xf32>
    %c0_43 = arith.constant 0 : index
    %c0_44 = arith.constant 0 : index
    %c0_45 = arith.constant 0 : index
    %218 = vector.load %arg8[%c0_43, %c0_44, %c0_45] : memref<2x1x128xf32, #tpu.memory_space<vmem>>, vector<1x1x128xf32>
    %219 = vector.shape_cast %218 : vector<1x1x128xf32> to vector<1x128xf32>
    %c0_46 = arith.constant 0 : index
    %c0_47 = arith.constant 0 : index
    %c0_48 = arith.constant 0 : index
    %220 = vector.load %arg9[%c0_46, %c0_47, %c0_48] : memref<2x1x128xf32, #tpu.memory_space<vmem>>, vector<1x1x128xf32>
    %221 = vector.shape_cast %220 : vector<1x1x128xf32> to vector<1x128xf32>
    %c0_49 = arith.constant 0 : index
    %222 = memref.load %arg1[%c0_49] : memref<2xf32, #tpu.memory_space<smem>>
    %223 = arith.mulf %219, %219 : vector<1x128xf32>
    %224 = arith.mulf %221, %221 : vector<1x128xf32>
    %225 = arith.subf %223, %224 : vector<1x128xf32>
    %226 = arith.mulf %219, %221 : vector<1x128xf32>
    %227 = arith.mulf %221, %219 : vector<1x128xf32>
    %228 = arith.addf %226, %227 : vector<1x128xf32>
    %229 = vector.broadcast %225 : vector<1x128xf32> to vector<8x128xf32>
    %230 = arith.subf %229, %19 : vector<8x128xf32>
    %231 = vector.broadcast %228 : vector<1x128xf32> to vector<8x128xf32>
    %232 = arith.subf %231, %22 : vector<8x128xf32>
    %233 = arith.mulf %230, %230 : vector<8x128xf32>
    %234 = arith.mulf %232, %232 : vector<8x128xf32>
    %235 = arith.addf %233, %234 : vector<8x128xf32>
    %236 = math.sqrt %235 : vector<8x128xf32>
    %237 = arith.addf %236, %230 : vector<8x128xf32>
    %cst_50 = arith.constant 5.000000e-01 : f32
    %238 = vector.broadcast %cst_50 : f32 to vector<8x128xf32>
    %239 = arith.mulf %238, %237 : vector<8x128xf32>
    %cst_51 = arith.constant 0.000000e+00 : f32
    %240 = vector.broadcast %cst_51 : f32 to vector<8x128xf32>
    %241 = arith.maximumf %239, %240 : vector<8x128xf32>
    %242 = math.sqrt %241 : vector<8x128xf32>
    %243 = arith.subf %236, %230 : vector<8x128xf32>
    %cst_52 = arith.constant 5.000000e-01 : f32
    %244 = vector.broadcast %cst_52 : f32 to vector<8x128xf32>
    %245 = arith.mulf %244, %243 : vector<8x128xf32>
    %cst_53 = arith.constant 0.000000e+00 : f32
    %246 = vector.broadcast %cst_53 : f32 to vector<8x128xf32>
    %247 = arith.maximumf %245, %246 : vector<8x128xf32>
    %248 = math.sqrt %247 : vector<8x128xf32>
    %cst_54 = arith.constant 0.000000e+00 : f32
    %249 = vector.broadcast %cst_54 : f32 to vector<8x128xf32>
    %250 = arith.cmpf olt, %232, %249 : vector<8x128xf32>
    %cst_55 = arith.constant 0.000000e+00 : f32
    %251 = vector.broadcast %cst_55 : f32 to vector<8x128xf32>
    %252 = arith.subf %251, %248 : vector<8x128xf32>
    %253 = arith.select %250, %252, %248 : vector<8x128xi1>, vector<8x128xf32>
    %254 = arith.mulf %219, %219 : vector<1x128xf32>
    %255 = arith.mulf %221, %221 : vector<1x128xf32>
    %256 = arith.addf %254, %255 : vector<1x128xf32>
    %257 = tpu.reciprocal %256 {approx = true} : vector<1x128xf32> -> vector<1x128xf32>
    %258 = arith.mulf %256, %257 : vector<1x128xf32>
    %cst_56 = arith.constant 2.000000e+00 : f32
    %259 = vector.broadcast %cst_56 : f32 to vector<1x128xf32>
    %260 = arith.subf %259, %258 : vector<1x128xf32>
    %261 = arith.mulf %257, %260 : vector<1x128xf32>
    %262 = arith.mulf %219, %261 : vector<1x128xf32>
    %cst_57 = arith.constant 0.000000e+00 : f32
    %263 = vector.broadcast %cst_57 : f32 to vector<1x128xf32>
    %264 = arith.subf %263, %221 : vector<1x128xf32>
    %265 = arith.mulf %264, %261 : vector<1x128xf32>
    %cst_58 = arith.constant 2.000000e+00 : f32
    %266 = vector.broadcast %cst_58 : f32 to vector<8x128xf32>
    %267 = arith.mulf %266, %242 : vector<8x128xf32>
    %cst_59 = arith.constant 2.000000e+00 : f32
    %268 = vector.broadcast %cst_59 : f32 to vector<8x128xf32>
    %269 = arith.mulf %268, %253 : vector<8x128xf32>
    %270 = arith.mulf %267, %267 : vector<8x128xf32>
    %271 = arith.mulf %269, %269 : vector<8x128xf32>
    %272 = arith.addf %270, %271 : vector<8x128xf32>
    %273 = tpu.reciprocal %272 {approx = true} : vector<8x128xf32> -> vector<8x128xf32>
    %274 = arith.mulf %272, %273 : vector<8x128xf32>
    %cst_60 = arith.constant 2.000000e+00 : f32
    %275 = vector.broadcast %cst_60 : f32 to vector<8x128xf32>
    %276 = arith.subf %275, %274 : vector<8x128xf32>
    %277 = arith.mulf %273, %276 : vector<8x128xf32>
    %278 = arith.mulf %267, %277 : vector<8x128xf32>
    %cst_61 = arith.constant 0.000000e+00 : f32
    %279 = vector.broadcast %cst_61 : f32 to vector<8x128xf32>
    %280 = arith.subf %279, %269 : vector<8x128xf32>
    %281 = arith.mulf %280, %277 : vector<8x128xf32>
    %cst_62 = arith.constant 6.28318548 : f32
    %282 = arith.mulf %cst_62, %222 : f32
    %283 = vector.broadcast %282 : f32 to vector<1x128xf32>
    %284 = arith.mulf %283, %6 : vector<1x128xf32>
    %285 = vector.broadcast %284 : vector<1x128xf32> to vector<8x128xf32>
    %286 = arith.mulf %285, %242 : vector<8x128xf32>
    %287 = vector.broadcast %284 : vector<1x128xf32> to vector<8x128xf32>
    %288 = arith.mulf %287, %253 : vector<8x128xf32>
    %289 = math.exp %288 : vector<8x128xf32>
    %290 = tpu.reciprocal %289 {approx = true} : vector<8x128xf32> -> vector<8x128xf32>
    %291 = arith.mulf %289, %290 : vector<8x128xf32>
    %cst_63 = arith.constant 2.000000e+00 : f32
    %292 = vector.broadcast %cst_63 : f32 to vector<8x128xf32>
    %293 = arith.subf %292, %291 : vector<8x128xf32>
    %294 = arith.mulf %290, %293 : vector<8x128xf32>
    %295 = math.cos %286 : vector<8x128xf32>
    %296 = math.sin %286 : vector<8x128xf32>
    %297 = arith.mulf %289, %295 : vector<8x128xf32>
    %cst_64 = arith.constant 0.000000e+00 : f32
    %298 = vector.broadcast %cst_64 : f32 to vector<8x128xf32>
    %299 = arith.subf %298, %289 : vector<8x128xf32>
    %300 = arith.mulf %299, %296 : vector<8x128xf32>
    %301 = arith.mulf %294, %295 : vector<8x128xf32>
    %302 = arith.mulf %294, %296 : vector<8x128xf32>
    %303 = arith.addf %36, %242 : vector<8x128xf32>
    %304 = arith.addf %47, %253 : vector<8x128xf32>
    %305 = arith.subf %36, %242 : vector<8x128xf32>
    %306 = arith.subf %47, %253 : vector<8x128xf32>
    %307 = arith.mulf %303, %122 : vector<8x128xf32>
    %308 = arith.mulf %304, %125 : vector<8x128xf32>
    %309 = arith.subf %307, %308 : vector<8x128xf32>
    %310 = arith.mulf %303, %125 : vector<8x128xf32>
    %311 = arith.mulf %304, %122 : vector<8x128xf32>
    %312 = arith.addf %310, %311 : vector<8x128xf32>
    %313 = arith.mulf %305, %122 : vector<8x128xf32>
    %314 = arith.mulf %306, %125 : vector<8x128xf32>
    %315 = arith.subf %313, %314 : vector<8x128xf32>
    %316 = arith.mulf %305, %125 : vector<8x128xf32>
    %317 = arith.mulf %306, %122 : vector<8x128xf32>
    %318 = arith.addf %316, %317 : vector<8x128xf32>
    %319 = arith.mulf %303, %278 : vector<8x128xf32>
    %320 = arith.mulf %304, %281 : vector<8x128xf32>
    %321 = arith.subf %319, %320 : vector<8x128xf32>
    %322 = arith.mulf %303, %281 : vector<8x128xf32>
    %323 = arith.mulf %304, %278 : vector<8x128xf32>
    %324 = arith.addf %322, %323 : vector<8x128xf32>
    %325 = arith.mulf %305, %278 : vector<8x128xf32>
    %326 = arith.mulf %306, %281 : vector<8x128xf32>
    %327 = arith.subf %325, %326 : vector<8x128xf32>
    %328 = arith.mulf %305, %281 : vector<8x128xf32>
    %329 = arith.mulf %306, %278 : vector<8x128xf32>
    %330 = arith.addf %328, %329 : vector<8x128xf32>
    %cst_65 = arith.constant 0.000000e+00 : f32
    %331 = vector.broadcast %cst_65 : f32 to vector<8x128xf32>
    %332 = arith.subf %331, %327 : vector<8x128xf32>
    %cst_66 = arith.constant 0.000000e+00 : f32
    %333 = vector.broadcast %cst_66 : f32 to vector<8x128xf32>
    %334 = arith.subf %333, %330 : vector<8x128xf32>
    %335 = arith.mulf %309, %297 : vector<8x128xf32>
    %336 = arith.mulf %312, %300 : vector<8x128xf32>
    %337 = arith.subf %335, %336 : vector<8x128xf32>
    %338 = arith.mulf %309, %300 : vector<8x128xf32>
    %339 = arith.mulf %312, %297 : vector<8x128xf32>
    %340 = arith.addf %338, %339 : vector<8x128xf32>
    %341 = arith.mulf %315, %301 : vector<8x128xf32>
    %342 = arith.mulf %318, %302 : vector<8x128xf32>
    %343 = arith.subf %341, %342 : vector<8x128xf32>
    %344 = arith.mulf %315, %302 : vector<8x128xf32>
    %345 = arith.mulf %318, %301 : vector<8x128xf32>
    %346 = arith.addf %344, %345 : vector<8x128xf32>
    %347 = arith.mulf %315, %297 : vector<8x128xf32>
    %348 = arith.mulf %318, %300 : vector<8x128xf32>
    %349 = arith.subf %347, %348 : vector<8x128xf32>
    %350 = arith.mulf %315, %300 : vector<8x128xf32>
    %351 = arith.mulf %318, %297 : vector<8x128xf32>
    %352 = arith.addf %350, %351 : vector<8x128xf32>
    %353 = arith.mulf %309, %301 : vector<8x128xf32>
    %354 = arith.mulf %312, %302 : vector<8x128xf32>
    %355 = arith.subf %353, %354 : vector<8x128xf32>
    %356 = arith.mulf %309, %302 : vector<8x128xf32>
    %357 = arith.mulf %312, %301 : vector<8x128xf32>
    %358 = arith.addf %356, %357 : vector<8x128xf32>
    %359 = arith.mulf %337, %321 : vector<8x128xf32>
    %360 = arith.mulf %340, %324 : vector<8x128xf32>
    %361 = arith.subf %359, %360 : vector<8x128xf32>
    %362 = arith.mulf %337, %324 : vector<8x128xf32>
    %363 = arith.mulf %340, %321 : vector<8x128xf32>
    %364 = arith.addf %362, %363 : vector<8x128xf32>
    %365 = arith.mulf %343, %332 : vector<8x128xf32>
    %366 = arith.mulf %346, %334 : vector<8x128xf32>
    %367 = arith.subf %365, %366 : vector<8x128xf32>
    %368 = arith.mulf %343, %334 : vector<8x128xf32>
    %369 = arith.mulf %346, %332 : vector<8x128xf32>
    %370 = arith.addf %368, %369 : vector<8x128xf32>
    %371 = arith.addf %361, %367 : vector<8x128xf32>
    %372 = arith.addf %364, %370 : vector<8x128xf32>
    %373 = arith.mulf %337, %332 : vector<8x128xf32>
    %374 = arith.mulf %340, %334 : vector<8x128xf32>
    %375 = arith.subf %373, %374 : vector<8x128xf32>
    %376 = arith.mulf %337, %334 : vector<8x128xf32>
    %377 = arith.mulf %340, %332 : vector<8x128xf32>
    %378 = arith.addf %376, %377 : vector<8x128xf32>
    %379 = arith.mulf %343, %321 : vector<8x128xf32>
    %380 = arith.mulf %346, %324 : vector<8x128xf32>
    %381 = arith.subf %379, %380 : vector<8x128xf32>
    %382 = arith.mulf %343, %324 : vector<8x128xf32>
    %383 = arith.mulf %346, %321 : vector<8x128xf32>
    %384 = arith.addf %382, %383 : vector<8x128xf32>
    %385 = arith.addf %375, %381 : vector<8x128xf32>
    %386 = arith.addf %378, %384 : vector<8x128xf32>
    %387 = arith.mulf %349, %321 : vector<8x128xf32>
    %388 = arith.mulf %352, %324 : vector<8x128xf32>
    %389 = arith.subf %387, %388 : vector<8x128xf32>
    %390 = arith.mulf %349, %324 : vector<8x128xf32>
    %391 = arith.mulf %352, %321 : vector<8x128xf32>
    %392 = arith.addf %390, %391 : vector<8x128xf32>
    %393 = arith.mulf %355, %332 : vector<8x128xf32>
    %394 = arith.mulf %358, %334 : vector<8x128xf32>
    %395 = arith.subf %393, %394 : vector<8x128xf32>
    %396 = arith.mulf %355, %334 : vector<8x128xf32>
    %397 = arith.mulf %358, %332 : vector<8x128xf32>
    %398 = arith.addf %396, %397 : vector<8x128xf32>
    %399 = arith.addf %389, %395 : vector<8x128xf32>
    %400 = arith.addf %392, %398 : vector<8x128xf32>
    %401 = arith.mulf %349, %332 : vector<8x128xf32>
    %402 = arith.mulf %352, %334 : vector<8x128xf32>
    %403 = arith.subf %401, %402 : vector<8x128xf32>
    %404 = arith.mulf %349, %334 : vector<8x128xf32>
    %405 = arith.mulf %352, %332 : vector<8x128xf32>
    %406 = arith.addf %404, %405 : vector<8x128xf32>
    %407 = arith.mulf %355, %321 : vector<8x128xf32>
    %408 = arith.mulf %358, %324 : vector<8x128xf32>
    %409 = arith.subf %407, %408 : vector<8x128xf32>
    %410 = arith.mulf %355, %324 : vector<8x128xf32>
    %411 = arith.mulf %358, %321 : vector<8x128xf32>
    %412 = arith.addf %410, %411 : vector<8x128xf32>
    %413 = arith.addf %403, %409 : vector<8x128xf32>
    %414 = arith.addf %406, %412 : vector<8x128xf32>
    %415 = arith.mulf %170, %371 : vector<8x128xf32>
    %416 = arith.mulf %173, %372 : vector<8x128xf32>
    %417 = arith.subf %415, %416 : vector<8x128xf32>
    %418 = arith.mulf %170, %372 : vector<8x128xf32>
    %419 = arith.mulf %173, %371 : vector<8x128xf32>
    %420 = arith.addf %418, %419 : vector<8x128xf32>
    %421 = arith.mulf %178, %399 : vector<8x128xf32>
    %422 = arith.mulf %181, %400 : vector<8x128xf32>
    %423 = arith.subf %421, %422 : vector<8x128xf32>
    %424 = arith.mulf %178, %400 : vector<8x128xf32>
    %425 = arith.mulf %181, %399 : vector<8x128xf32>
    %426 = arith.addf %424, %425 : vector<8x128xf32>
    %427 = arith.addf %417, %423 : vector<8x128xf32>
    %428 = arith.addf %420, %426 : vector<8x128xf32>
    %429 = arith.mulf %170, %385 : vector<8x128xf32>
    %430 = arith.mulf %173, %386 : vector<8x128xf32>
    %431 = arith.subf %429, %430 : vector<8x128xf32>
    %432 = arith.mulf %170, %386 : vector<8x128xf32>
    %433 = arith.mulf %173, %385 : vector<8x128xf32>
    %434 = arith.addf %432, %433 : vector<8x128xf32>
    %435 = arith.mulf %178, %413 : vector<8x128xf32>
    %436 = arith.mulf %181, %414 : vector<8x128xf32>
    %437 = arith.subf %435, %436 : vector<8x128xf32>
    %438 = arith.mulf %178, %414 : vector<8x128xf32>
    %439 = arith.mulf %181, %413 : vector<8x128xf32>
    %440 = arith.addf %438, %439 : vector<8x128xf32>
    %441 = arith.addf %431, %437 : vector<8x128xf32>
    %442 = arith.addf %434, %440 : vector<8x128xf32>
    %443 = arith.mulf %178, %371 : vector<8x128xf32>
    %444 = arith.mulf %181, %372 : vector<8x128xf32>
    %445 = arith.subf %443, %444 : vector<8x128xf32>
    %446 = arith.mulf %178, %372 : vector<8x128xf32>
    %447 = arith.mulf %181, %371 : vector<8x128xf32>
    %448 = arith.addf %446, %447 : vector<8x128xf32>
    %449 = arith.mulf %170, %399 : vector<8x128xf32>
    %450 = arith.mulf %173, %400 : vector<8x128xf32>
    %451 = arith.subf %449, %450 : vector<8x128xf32>
    %452 = arith.mulf %170, %400 : vector<8x128xf32>
    %453 = arith.mulf %173, %399 : vector<8x128xf32>
    %454 = arith.addf %452, %453 : vector<8x128xf32>
    %455 = arith.addf %445, %451 : vector<8x128xf32>
    %456 = arith.addf %448, %454 : vector<8x128xf32>
    %457 = arith.mulf %178, %385 : vector<8x128xf32>
    %458 = arith.mulf %181, %386 : vector<8x128xf32>
    %459 = arith.subf %457, %458 : vector<8x128xf32>
    %460 = arith.mulf %178, %386 : vector<8x128xf32>
    %461 = arith.mulf %181, %385 : vector<8x128xf32>
    %462 = arith.addf %460, %461 : vector<8x128xf32>
    %463 = arith.mulf %170, %413 : vector<8x128xf32>
    %464 = arith.mulf %173, %414 : vector<8x128xf32>
    %465 = arith.subf %463, %464 : vector<8x128xf32>
    %466 = arith.mulf %170, %414 : vector<8x128xf32>
    %467 = arith.mulf %173, %413 : vector<8x128xf32>
    %468 = arith.addf %466, %467 : vector<8x128xf32>
    %469 = arith.addf %459, %465 : vector<8x128xf32>
    %470 = arith.addf %462, %468 : vector<8x128xf32>
    %471 = vector.broadcast %225 : vector<1x128xf32> to vector<8x128xf32>
    %472 = arith.mulf %471, %36 : vector<8x128xf32>
    %473 = vector.broadcast %228 : vector<1x128xf32> to vector<8x128xf32>
    %474 = arith.mulf %473, %47 : vector<8x128xf32>
    %475 = arith.subf %472, %474 : vector<8x128xf32>
    %476 = vector.broadcast %225 : vector<1x128xf32> to vector<8x128xf32>
    %477 = arith.mulf %476, %47 : vector<8x128xf32>
    %478 = vector.broadcast %228 : vector<1x128xf32> to vector<8x128xf32>
    %479 = arith.mulf %478, %36 : vector<8x128xf32>
    %480 = arith.addf %477, %479 : vector<8x128xf32>
    %481 = arith.addf %475, %242 : vector<8x128xf32>
    %482 = arith.addf %480, %253 : vector<8x128xf32>
    %483 = arith.subf %475, %242 : vector<8x128xf32>
    %484 = arith.subf %480, %253 : vector<8x128xf32>
    %485 = vector.broadcast %262 : vector<1x128xf32> to vector<8x128xf32>
    %486 = arith.mulf %485, %122 : vector<8x128xf32>
    %487 = vector.broadcast %265 : vector<1x128xf32> to vector<8x128xf32>
    %488 = arith.mulf %487, %125 : vector<8x128xf32>
    %489 = arith.subf %486, %488 : vector<8x128xf32>
    %490 = vector.broadcast %262 : vector<1x128xf32> to vector<8x128xf32>
    %491 = arith.mulf %490, %125 : vector<8x128xf32>
    %492 = vector.broadcast %265 : vector<1x128xf32> to vector<8x128xf32>
    %493 = arith.mulf %492, %122 : vector<8x128xf32>
    %494 = arith.addf %491, %493 : vector<8x128xf32>
    %495 = vector.broadcast %262 : vector<1x128xf32> to vector<8x128xf32>
    %496 = arith.mulf %495, %278 : vector<8x128xf32>
    %497 = vector.broadcast %265 : vector<1x128xf32> to vector<8x128xf32>
    %498 = arith.mulf %497, %281 : vector<8x128xf32>
    %499 = arith.subf %496, %498 : vector<8x128xf32>
    %500 = vector.broadcast %262 : vector<1x128xf32> to vector<8x128xf32>
    %501 = arith.mulf %500, %281 : vector<8x128xf32>
    %502 = vector.broadcast %265 : vector<1x128xf32> to vector<8x128xf32>
    %503 = arith.mulf %502, %278 : vector<8x128xf32>
    %504 = arith.addf %501, %503 : vector<8x128xf32>
    %505 = arith.mulf %481, %489 : vector<8x128xf32>
    %506 = arith.mulf %482, %494 : vector<8x128xf32>
    %507 = arith.subf %505, %506 : vector<8x128xf32>
    %508 = arith.mulf %481, %494 : vector<8x128xf32>
    %509 = arith.mulf %482, %489 : vector<8x128xf32>
    %510 = arith.addf %508, %509 : vector<8x128xf32>
    %511 = arith.mulf %483, %489 : vector<8x128xf32>
    %512 = arith.mulf %484, %494 : vector<8x128xf32>
    %513 = arith.subf %511, %512 : vector<8x128xf32>
    %514 = arith.mulf %483, %494 : vector<8x128xf32>
    %515 = arith.mulf %484, %489 : vector<8x128xf32>
    %516 = arith.addf %514, %515 : vector<8x128xf32>
    %517 = arith.mulf %481, %499 : vector<8x128xf32>
    %518 = arith.mulf %482, %504 : vector<8x128xf32>
    %519 = arith.subf %517, %518 : vector<8x128xf32>
    %520 = arith.mulf %481, %504 : vector<8x128xf32>
    %521 = arith.mulf %482, %499 : vector<8x128xf32>
    %522 = arith.addf %520, %521 : vector<8x128xf32>
    %523 = arith.mulf %483, %499 : vector<8x128xf32>
    %524 = arith.mulf %484, %504 : vector<8x128xf32>
    %525 = arith.subf %523, %524 : vector<8x128xf32>
    %526 = arith.mulf %483, %504 : vector<8x128xf32>
    %527 = arith.mulf %484, %499 : vector<8x128xf32>
    %528 = arith.addf %526, %527 : vector<8x128xf32>
    %cst_67 = arith.constant 0.000000e+00 : f32
    %529 = vector.broadcast %cst_67 : f32 to vector<8x128xf32>
    %530 = arith.subf %529, %525 : vector<8x128xf32>
    %cst_68 = arith.constant 0.000000e+00 : f32
    %531 = vector.broadcast %cst_68 : f32 to vector<8x128xf32>
    %532 = arith.subf %531, %528 : vector<8x128xf32>
    %533 = arith.mulf %507, %297 : vector<8x128xf32>
    %534 = arith.mulf %510, %300 : vector<8x128xf32>
    %535 = arith.subf %533, %534 : vector<8x128xf32>
    %536 = arith.mulf %507, %300 : vector<8x128xf32>
    %537 = arith.mulf %510, %297 : vector<8x128xf32>
    %538 = arith.addf %536, %537 : vector<8x128xf32>
    %539 = arith.mulf %513, %301 : vector<8x128xf32>
    %540 = arith.mulf %516, %302 : vector<8x128xf32>
    %541 = arith.subf %539, %540 : vector<8x128xf32>
    %542 = arith.mulf %513, %302 : vector<8x128xf32>
    %543 = arith.mulf %516, %301 : vector<8x128xf32>
    %544 = arith.addf %542, %543 : vector<8x128xf32>
    %545 = arith.mulf %513, %297 : vector<8x128xf32>
    %546 = arith.mulf %516, %300 : vector<8x128xf32>
    %547 = arith.subf %545, %546 : vector<8x128xf32>
    %548 = arith.mulf %513, %300 : vector<8x128xf32>
    %549 = arith.mulf %516, %297 : vector<8x128xf32>
    %550 = arith.addf %548, %549 : vector<8x128xf32>
    %551 = arith.mulf %507, %301 : vector<8x128xf32>
    %552 = arith.mulf %510, %302 : vector<8x128xf32>
    %553 = arith.subf %551, %552 : vector<8x128xf32>
    %554 = arith.mulf %507, %302 : vector<8x128xf32>
    %555 = arith.mulf %510, %301 : vector<8x128xf32>
    %556 = arith.addf %554, %555 : vector<8x128xf32>
    %557 = arith.mulf %535, %519 : vector<8x128xf32>
    %558 = arith.mulf %538, %522 : vector<8x128xf32>
    %559 = arith.subf %557, %558 : vector<8x128xf32>
    %560 = arith.mulf %535, %522 : vector<8x128xf32>
    %561 = arith.mulf %538, %519 : vector<8x128xf32>
    %562 = arith.addf %560, %561 : vector<8x128xf32>
    %563 = arith.mulf %541, %530 : vector<8x128xf32>
    %564 = arith.mulf %544, %532 : vector<8x128xf32>
    %565 = arith.subf %563, %564 : vector<8x128xf32>
    %566 = arith.mulf %541, %532 : vector<8x128xf32>
    %567 = arith.mulf %544, %530 : vector<8x128xf32>
    %568 = arith.addf %566, %567 : vector<8x128xf32>
    %569 = arith.addf %559, %565 : vector<8x128xf32>
    %570 = arith.addf %562, %568 : vector<8x128xf32>
    %571 = arith.mulf %535, %530 : vector<8x128xf32>
    %572 = arith.mulf %538, %532 : vector<8x128xf32>
    %573 = arith.subf %571, %572 : vector<8x128xf32>
    %574 = arith.mulf %535, %532 : vector<8x128xf32>
    %575 = arith.mulf %538, %530 : vector<8x128xf32>
    %576 = arith.addf %574, %575 : vector<8x128xf32>
    %577 = arith.mulf %541, %519 : vector<8x128xf32>
    %578 = arith.mulf %544, %522 : vector<8x128xf32>
    %579 = arith.subf %577, %578 : vector<8x128xf32>
    %580 = arith.mulf %541, %522 : vector<8x128xf32>
    %581 = arith.mulf %544, %519 : vector<8x128xf32>
    %582 = arith.addf %580, %581 : vector<8x128xf32>
    %583 = arith.addf %573, %579 : vector<8x128xf32>
    %584 = arith.addf %576, %582 : vector<8x128xf32>
    %585 = arith.mulf %547, %519 : vector<8x128xf32>
    %586 = arith.mulf %550, %522 : vector<8x128xf32>
    %587 = arith.subf %585, %586 : vector<8x128xf32>
    %588 = arith.mulf %547, %522 : vector<8x128xf32>
    %589 = arith.mulf %550, %519 : vector<8x128xf32>
    %590 = arith.addf %588, %589 : vector<8x128xf32>
    %591 = arith.mulf %553, %530 : vector<8x128xf32>
    %592 = arith.mulf %556, %532 : vector<8x128xf32>
    %593 = arith.subf %591, %592 : vector<8x128xf32>
    %594 = arith.mulf %553, %532 : vector<8x128xf32>
    %595 = arith.mulf %556, %530 : vector<8x128xf32>
    %596 = arith.addf %594, %595 : vector<8x128xf32>
    %597 = arith.addf %587, %593 : vector<8x128xf32>
    %598 = arith.addf %590, %596 : vector<8x128xf32>
    %599 = arith.mulf %547, %530 : vector<8x128xf32>
    %600 = arith.mulf %550, %532 : vector<8x128xf32>
    %601 = arith.subf %599, %600 : vector<8x128xf32>
    %602 = arith.mulf %547, %532 : vector<8x128xf32>
    %603 = arith.mulf %550, %530 : vector<8x128xf32>
    %604 = arith.addf %602, %603 : vector<8x128xf32>
    %605 = arith.mulf %553, %519 : vector<8x128xf32>
    %606 = arith.mulf %556, %522 : vector<8x128xf32>
    %607 = arith.subf %605, %606 : vector<8x128xf32>
    %608 = arith.mulf %553, %522 : vector<8x128xf32>
    %609 = arith.mulf %556, %519 : vector<8x128xf32>
    %610 = arith.addf %608, %609 : vector<8x128xf32>
    %611 = arith.addf %601, %607 : vector<8x128xf32>
    %612 = arith.addf %604, %610 : vector<8x128xf32>
    %613 = arith.mulf %206, %569 : vector<8x128xf32>
    %614 = arith.mulf %209, %570 : vector<8x128xf32>
    %615 = arith.subf %613, %614 : vector<8x128xf32>
    %616 = arith.mulf %206, %570 : vector<8x128xf32>
    %617 = arith.mulf %209, %569 : vector<8x128xf32>
    %618 = arith.addf %616, %617 : vector<8x128xf32>
    %619 = arith.mulf %214, %597 : vector<8x128xf32>
    %620 = arith.mulf %217, %598 : vector<8x128xf32>
    %621 = arith.subf %619, %620 : vector<8x128xf32>
    %622 = arith.mulf %214, %598 : vector<8x128xf32>
    %623 = arith.mulf %217, %597 : vector<8x128xf32>
    %624 = arith.addf %622, %623 : vector<8x128xf32>
    %625 = arith.addf %615, %621 : vector<8x128xf32>
    %626 = arith.addf %618, %624 : vector<8x128xf32>
    %627 = arith.mulf %206, %583 : vector<8x128xf32>
    %628 = arith.mulf %209, %584 : vector<8x128xf32>
    %629 = arith.subf %627, %628 : vector<8x128xf32>
    %630 = arith.mulf %206, %584 : vector<8x128xf32>
    %631 = arith.mulf %209, %583 : vector<8x128xf32>
    %632 = arith.addf %630, %631 : vector<8x128xf32>
    %633 = arith.mulf %214, %611 : vector<8x128xf32>
    %634 = arith.mulf %217, %612 : vector<8x128xf32>
    %635 = arith.subf %633, %634 : vector<8x128xf32>
    %636 = arith.mulf %214, %612 : vector<8x128xf32>
    %637 = arith.mulf %217, %611 : vector<8x128xf32>
    %638 = arith.addf %636, %637 : vector<8x128xf32>
    %639 = arith.addf %629, %635 : vector<8x128xf32>
    %640 = arith.addf %632, %638 : vector<8x128xf32>
    %641 = arith.mulf %214, %569 : vector<8x128xf32>
    %642 = arith.mulf %217, %570 : vector<8x128xf32>
    %643 = arith.subf %641, %642 : vector<8x128xf32>
    %644 = arith.mulf %214, %570 : vector<8x128xf32>
    %645 = arith.mulf %217, %569 : vector<8x128xf32>
    %646 = arith.addf %644, %645 : vector<8x128xf32>
    %647 = arith.mulf %206, %597 : vector<8x128xf32>
    %648 = arith.mulf %209, %598 : vector<8x128xf32>
    %649 = arith.subf %647, %648 : vector<8x128xf32>
    %650 = arith.mulf %206, %598 : vector<8x128xf32>
    %651 = arith.mulf %209, %597 : vector<8x128xf32>
    %652 = arith.addf %650, %651 : vector<8x128xf32>
    %653 = arith.addf %643, %649 : vector<8x128xf32>
    %654 = arith.addf %646, %652 : vector<8x128xf32>
    %655 = arith.mulf %214, %583 : vector<8x128xf32>
    %656 = arith.mulf %217, %584 : vector<8x128xf32>
    %657 = arith.subf %655, %656 : vector<8x128xf32>
    %658 = arith.mulf %214, %584 : vector<8x128xf32>
    %659 = arith.mulf %217, %583 : vector<8x128xf32>
    %660 = arith.addf %658, %659 : vector<8x128xf32>
    %661 = arith.mulf %206, %611 : vector<8x128xf32>
    %662 = arith.mulf %209, %612 : vector<8x128xf32>
    %663 = arith.subf %661, %662 : vector<8x128xf32>
    %664 = arith.mulf %206, %612 : vector<8x128xf32>
    %665 = arith.mulf %209, %611 : vector<8x128xf32>
    %666 = arith.addf %664, %665 : vector<8x128xf32>
    %667 = arith.addf %657, %663 : vector<8x128xf32>
    %668 = arith.addf %660, %666 : vector<8x128xf32>
    %c1 = arith.constant 1 : index
    %c0_69 = arith.constant 0 : index
    %c0_70 = arith.constant 0 : index
    %669 = vector.load %arg8[%c1, %c0_69, %c0_70] : memref<2x1x128xf32, #tpu.memory_space<vmem>>, vector<1x1x128xf32>
    %670 = vector.shape_cast %669 : vector<1x1x128xf32> to vector<1x128xf32>
    %c1_71 = arith.constant 1 : index
    %c0_72 = arith.constant 0 : index
    %c0_73 = arith.constant 0 : index
    %671 = vector.load %arg9[%c1_71, %c0_72, %c0_73] : memref<2x1x128xf32, #tpu.memory_space<vmem>>, vector<1x1x128xf32>
    %672 = vector.shape_cast %671 : vector<1x1x128xf32> to vector<1x128xf32>
    %c1_74 = arith.constant 1 : index
    %673 = memref.load %arg1[%c1_74] : memref<2xf32, #tpu.memory_space<smem>>
    %674 = arith.mulf %670, %670 : vector<1x128xf32>
    %675 = arith.mulf %672, %672 : vector<1x128xf32>
    %676 = arith.subf %674, %675 : vector<1x128xf32>
    %677 = arith.mulf %670, %672 : vector<1x128xf32>
    %678 = arith.mulf %672, %670 : vector<1x128xf32>
    %679 = arith.addf %677, %678 : vector<1x128xf32>
    %680 = vector.broadcast %676 : vector<1x128xf32> to vector<8x128xf32>
    %681 = arith.subf %680, %19 : vector<8x128xf32>
    %682 = vector.broadcast %679 : vector<1x128xf32> to vector<8x128xf32>
    %683 = arith.subf %682, %22 : vector<8x128xf32>
    %684 = arith.mulf %681, %681 : vector<8x128xf32>
    %685 = arith.mulf %683, %683 : vector<8x128xf32>
    %686 = arith.addf %684, %685 : vector<8x128xf32>
    %687 = math.sqrt %686 : vector<8x128xf32>
    %688 = arith.addf %687, %681 : vector<8x128xf32>
    %cst_75 = arith.constant 5.000000e-01 : f32
    %689 = vector.broadcast %cst_75 : f32 to vector<8x128xf32>
    %690 = arith.mulf %689, %688 : vector<8x128xf32>
    %cst_76 = arith.constant 0.000000e+00 : f32
    %691 = vector.broadcast %cst_76 : f32 to vector<8x128xf32>
    %692 = arith.maximumf %690, %691 : vector<8x128xf32>
    %693 = math.sqrt %692 : vector<8x128xf32>
    %694 = arith.subf %687, %681 : vector<8x128xf32>
    %cst_77 = arith.constant 5.000000e-01 : f32
    %695 = vector.broadcast %cst_77 : f32 to vector<8x128xf32>
    %696 = arith.mulf %695, %694 : vector<8x128xf32>
    %cst_78 = arith.constant 0.000000e+00 : f32
    %697 = vector.broadcast %cst_78 : f32 to vector<8x128xf32>
    %698 = arith.maximumf %696, %697 : vector<8x128xf32>
    %699 = math.sqrt %698 : vector<8x128xf32>
    %cst_79 = arith.constant 0.000000e+00 : f32
    %700 = vector.broadcast %cst_79 : f32 to vector<8x128xf32>
    %701 = arith.cmpf olt, %683, %700 : vector<8x128xf32>
    %cst_80 = arith.constant 0.000000e+00 : f32
    %702 = vector.broadcast %cst_80 : f32 to vector<8x128xf32>
    %703 = arith.subf %702, %699 : vector<8x128xf32>
    %704 = arith.select %701, %703, %699 : vector<8x128xi1>, vector<8x128xf32>
    %705 = arith.mulf %670, %670 : vector<1x128xf32>
    %706 = arith.mulf %672, %672 : vector<1x128xf32>
    %707 = arith.addf %705, %706 : vector<1x128xf32>
    %708 = tpu.reciprocal %707 {approx = true} : vector<1x128xf32> -> vector<1x128xf32>
    %709 = arith.mulf %707, %708 : vector<1x128xf32>
    %cst_81 = arith.constant 2.000000e+00 : f32
    %710 = vector.broadcast %cst_81 : f32 to vector<1x128xf32>
    %711 = arith.subf %710, %709 : vector<1x128xf32>
    %712 = arith.mulf %708, %711 : vector<1x128xf32>
    %713 = arith.mulf %670, %712 : vector<1x128xf32>
    %cst_82 = arith.constant 0.000000e+00 : f32
    %714 = vector.broadcast %cst_82 : f32 to vector<1x128xf32>
    %715 = arith.subf %714, %672 : vector<1x128xf32>
    %716 = arith.mulf %715, %712 : vector<1x128xf32>
    %cst_83 = arith.constant 2.000000e+00 : f32
    %717 = vector.broadcast %cst_83 : f32 to vector<8x128xf32>
    %718 = arith.mulf %717, %693 : vector<8x128xf32>
    %cst_84 = arith.constant 2.000000e+00 : f32
    %719 = vector.broadcast %cst_84 : f32 to vector<8x128xf32>
    %720 = arith.mulf %719, %704 : vector<8x128xf32>
    %721 = arith.mulf %718, %718 : vector<8x128xf32>
    %722 = arith.mulf %720, %720 : vector<8x128xf32>
    %723 = arith.addf %721, %722 : vector<8x128xf32>
    %724 = tpu.reciprocal %723 {approx = true} : vector<8x128xf32> -> vector<8x128xf32>
    %725 = arith.mulf %723, %724 : vector<8x128xf32>
    %cst_85 = arith.constant 2.000000e+00 : f32
    %726 = vector.broadcast %cst_85 : f32 to vector<8x128xf32>
    %727 = arith.subf %726, %725 : vector<8x128xf32>
    %728 = arith.mulf %724, %727 : vector<8x128xf32>
    %729 = arith.mulf %718, %728 : vector<8x128xf32>
    %cst_86 = arith.constant 0.000000e+00 : f32
    %730 = vector.broadcast %cst_86 : f32 to vector<8x128xf32>
    %731 = arith.subf %730, %720 : vector<8x128xf32>
    %732 = arith.mulf %731, %728 : vector<8x128xf32>
    %cst_87 = arith.constant 6.28318548 : f32
    %733 = arith.mulf %cst_87, %673 : f32
    %734 = vector.broadcast %733 : f32 to vector<1x128xf32>
    %735 = arith.mulf %734, %6 : vector<1x128xf32>
    %736 = vector.broadcast %735 : vector<1x128xf32> to vector<8x128xf32>
    %737 = arith.mulf %736, %693 : vector<8x128xf32>
    %738 = vector.broadcast %735 : vector<1x128xf32> to vector<8x128xf32>
    %739 = arith.mulf %738, %704 : vector<8x128xf32>
    %740 = math.exp %739 : vector<8x128xf32>
    %741 = tpu.reciprocal %740 {approx = true} : vector<8x128xf32> -> vector<8x128xf32>
    %742 = arith.mulf %740, %741 : vector<8x128xf32>
    %cst_88 = arith.constant 2.000000e+00 : f32
    %743 = vector.broadcast %cst_88 : f32 to vector<8x128xf32>
    %744 = arith.subf %743, %742 : vector<8x128xf32>
    %745 = arith.mulf %741, %744 : vector<8x128xf32>
    %746 = math.cos %737 : vector<8x128xf32>
    %747 = math.sin %737 : vector<8x128xf32>
    %748 = arith.mulf %740, %746 : vector<8x128xf32>
    %cst_89 = arith.constant 0.000000e+00 : f32
    %749 = vector.broadcast %cst_89 : f32 to vector<8x128xf32>
    %750 = arith.subf %749, %740 : vector<8x128xf32>
    %751 = arith.mulf %750, %747 : vector<8x128xf32>
    %752 = arith.mulf %745, %746 : vector<8x128xf32>
    %753 = arith.mulf %745, %747 : vector<8x128xf32>
    %754 = arith.addf %36, %693 : vector<8x128xf32>
    %755 = arith.addf %47, %704 : vector<8x128xf32>
    %756 = arith.subf %36, %693 : vector<8x128xf32>
    %757 = arith.subf %47, %704 : vector<8x128xf32>
    %758 = arith.mulf %754, %122 : vector<8x128xf32>
    %759 = arith.mulf %755, %125 : vector<8x128xf32>
    %760 = arith.subf %758, %759 : vector<8x128xf32>
    %761 = arith.mulf %754, %125 : vector<8x128xf32>
    %762 = arith.mulf %755, %122 : vector<8x128xf32>
    %763 = arith.addf %761, %762 : vector<8x128xf32>
    %764 = arith.mulf %756, %122 : vector<8x128xf32>
    %765 = arith.mulf %757, %125 : vector<8x128xf32>
    %766 = arith.subf %764, %765 : vector<8x128xf32>
    %767 = arith.mulf %756, %125 : vector<8x128xf32>
    %768 = arith.mulf %757, %122 : vector<8x128xf32>
    %769 = arith.addf %767, %768 : vector<8x128xf32>
    %770 = arith.mulf %754, %729 : vector<8x128xf32>
    %771 = arith.mulf %755, %732 : vector<8x128xf32>
    %772 = arith.subf %770, %771 : vector<8x128xf32>
    %773 = arith.mulf %754, %732 : vector<8x128xf32>
    %774 = arith.mulf %755, %729 : vector<8x128xf32>
    %775 = arith.addf %773, %774 : vector<8x128xf32>
    %776 = arith.mulf %756, %729 : vector<8x128xf32>
    %777 = arith.mulf %757, %732 : vector<8x128xf32>
    %778 = arith.subf %776, %777 : vector<8x128xf32>
    %779 = arith.mulf %756, %732 : vector<8x128xf32>
    %780 = arith.mulf %757, %729 : vector<8x128xf32>
    %781 = arith.addf %779, %780 : vector<8x128xf32>
    %cst_90 = arith.constant 0.000000e+00 : f32
    %782 = vector.broadcast %cst_90 : f32 to vector<8x128xf32>
    %783 = arith.subf %782, %778 : vector<8x128xf32>
    %cst_91 = arith.constant 0.000000e+00 : f32
    %784 = vector.broadcast %cst_91 : f32 to vector<8x128xf32>
    %785 = arith.subf %784, %781 : vector<8x128xf32>
    %786 = arith.mulf %760, %748 : vector<8x128xf32>
    %787 = arith.mulf %763, %751 : vector<8x128xf32>
    %788 = arith.subf %786, %787 : vector<8x128xf32>
    %789 = arith.mulf %760, %751 : vector<8x128xf32>
    %790 = arith.mulf %763, %748 : vector<8x128xf32>
    %791 = arith.addf %789, %790 : vector<8x128xf32>
    %792 = arith.mulf %766, %752 : vector<8x128xf32>
    %793 = arith.mulf %769, %753 : vector<8x128xf32>
    %794 = arith.subf %792, %793 : vector<8x128xf32>
    %795 = arith.mulf %766, %753 : vector<8x128xf32>
    %796 = arith.mulf %769, %752 : vector<8x128xf32>
    %797 = arith.addf %795, %796 : vector<8x128xf32>
    %798 = arith.mulf %766, %748 : vector<8x128xf32>
    %799 = arith.mulf %769, %751 : vector<8x128xf32>
    %800 = arith.subf %798, %799 : vector<8x128xf32>
    %801 = arith.mulf %766, %751 : vector<8x128xf32>
    %802 = arith.mulf %769, %748 : vector<8x128xf32>
    %803 = arith.addf %801, %802 : vector<8x128xf32>
    %804 = arith.mulf %760, %752 : vector<8x128xf32>
    %805 = arith.mulf %763, %753 : vector<8x128xf32>
    %806 = arith.subf %804, %805 : vector<8x128xf32>
    %807 = arith.mulf %760, %753 : vector<8x128xf32>
    %808 = arith.mulf %763, %752 : vector<8x128xf32>
    %809 = arith.addf %807, %808 : vector<8x128xf32>
    %810 = arith.mulf %788, %772 : vector<8x128xf32>
    %811 = arith.mulf %791, %775 : vector<8x128xf32>
    %812 = arith.subf %810, %811 : vector<8x128xf32>
    %813 = arith.mulf %788, %775 : vector<8x128xf32>
    %814 = arith.mulf %791, %772 : vector<8x128xf32>
    %815 = arith.addf %813, %814 : vector<8x128xf32>
    %816 = arith.mulf %794, %783 : vector<8x128xf32>
    %817 = arith.mulf %797, %785 : vector<8x128xf32>
    %818 = arith.subf %816, %817 : vector<8x128xf32>
    %819 = arith.mulf %794, %785 : vector<8x128xf32>
    %820 = arith.mulf %797, %783 : vector<8x128xf32>
    %821 = arith.addf %819, %820 : vector<8x128xf32>
    %822 = arith.addf %812, %818 : vector<8x128xf32>
    %823 = arith.addf %815, %821 : vector<8x128xf32>
    %824 = arith.mulf %788, %783 : vector<8x128xf32>
    %825 = arith.mulf %791, %785 : vector<8x128xf32>
    %826 = arith.subf %824, %825 : vector<8x128xf32>
    %827 = arith.mulf %788, %785 : vector<8x128xf32>
    %828 = arith.mulf %791, %783 : vector<8x128xf32>
    %829 = arith.addf %827, %828 : vector<8x128xf32>
    %830 = arith.mulf %794, %772 : vector<8x128xf32>
    %831 = arith.mulf %797, %775 : vector<8x128xf32>
    %832 = arith.subf %830, %831 : vector<8x128xf32>
    %833 = arith.mulf %794, %775 : vector<8x128xf32>
    %834 = arith.mulf %797, %772 : vector<8x128xf32>
    %835 = arith.addf %833, %834 : vector<8x128xf32>
    %836 = arith.addf %826, %832 : vector<8x128xf32>
    %837 = arith.addf %829, %835 : vector<8x128xf32>
    %838 = arith.mulf %800, %772 : vector<8x128xf32>
    %839 = arith.mulf %803, %775 : vector<8x128xf32>
    %840 = arith.subf %838, %839 : vector<8x128xf32>
    %841 = arith.mulf %800, %775 : vector<8x128xf32>
    %842 = arith.mulf %803, %772 : vector<8x128xf32>
    %843 = arith.addf %841, %842 : vector<8x128xf32>
    %844 = arith.mulf %806, %783 : vector<8x128xf32>
    %845 = arith.mulf %809, %785 : vector<8x128xf32>
    %846 = arith.subf %844, %845 : vector<8x128xf32>
    %847 = arith.mulf %806, %785 : vector<8x128xf32>
    %848 = arith.mulf %809, %783 : vector<8x128xf32>
    %849 = arith.addf %847, %848 : vector<8x128xf32>
    %850 = arith.addf %840, %846 : vector<8x128xf32>
    %851 = arith.addf %843, %849 : vector<8x128xf32>
    %852 = arith.mulf %800, %783 : vector<8x128xf32>
    %853 = arith.mulf %803, %785 : vector<8x128xf32>
    %854 = arith.subf %852, %853 : vector<8x128xf32>
    %855 = arith.mulf %800, %785 : vector<8x128xf32>
    %856 = arith.mulf %803, %783 : vector<8x128xf32>
    %857 = arith.addf %855, %856 : vector<8x128xf32>
    %858 = arith.mulf %806, %772 : vector<8x128xf32>
    %859 = arith.mulf %809, %775 : vector<8x128xf32>
    %860 = arith.subf %858, %859 : vector<8x128xf32>
    %861 = arith.mulf %806, %775 : vector<8x128xf32>
    %862 = arith.mulf %809, %772 : vector<8x128xf32>
    %863 = arith.addf %861, %862 : vector<8x128xf32>
    %864 = arith.addf %854, %860 : vector<8x128xf32>
    %865 = arith.addf %857, %863 : vector<8x128xf32>
    %866 = arith.mulf %427, %822 : vector<8x128xf32>
    %867 = arith.mulf %428, %823 : vector<8x128xf32>
    %868 = arith.subf %866, %867 : vector<8x128xf32>
    %869 = arith.mulf %427, %823 : vector<8x128xf32>
    %870 = arith.mulf %428, %822 : vector<8x128xf32>
    %871 = arith.addf %869, %870 : vector<8x128xf32>
    %872 = arith.mulf %441, %850 : vector<8x128xf32>
    %873 = arith.mulf %442, %851 : vector<8x128xf32>
    %874 = arith.subf %872, %873 : vector<8x128xf32>
    %875 = arith.mulf %441, %851 : vector<8x128xf32>
    %876 = arith.mulf %442, %850 : vector<8x128xf32>
    %877 = arith.addf %875, %876 : vector<8x128xf32>
    %878 = arith.addf %868, %874 : vector<8x128xf32>
    %879 = arith.addf %871, %877 : vector<8x128xf32>
    %880 = arith.mulf %427, %836 : vector<8x128xf32>
    %881 = arith.mulf %428, %837 : vector<8x128xf32>
    %882 = arith.subf %880, %881 : vector<8x128xf32>
    %883 = arith.mulf %427, %837 : vector<8x128xf32>
    %884 = arith.mulf %428, %836 : vector<8x128xf32>
    %885 = arith.addf %883, %884 : vector<8x128xf32>
    %886 = arith.mulf %441, %864 : vector<8x128xf32>
    %887 = arith.mulf %442, %865 : vector<8x128xf32>
    %888 = arith.subf %886, %887 : vector<8x128xf32>
    %889 = arith.mulf %441, %865 : vector<8x128xf32>
    %890 = arith.mulf %442, %864 : vector<8x128xf32>
    %891 = arith.addf %889, %890 : vector<8x128xf32>
    %892 = arith.addf %882, %888 : vector<8x128xf32>
    %893 = arith.addf %885, %891 : vector<8x128xf32>
    %894 = arith.mulf %455, %822 : vector<8x128xf32>
    %895 = arith.mulf %456, %823 : vector<8x128xf32>
    %896 = arith.subf %894, %895 : vector<8x128xf32>
    %897 = arith.mulf %455, %823 : vector<8x128xf32>
    %898 = arith.mulf %456, %822 : vector<8x128xf32>
    %899 = arith.addf %897, %898 : vector<8x128xf32>
    %900 = arith.mulf %469, %850 : vector<8x128xf32>
    %901 = arith.mulf %470, %851 : vector<8x128xf32>
    %902 = arith.subf %900, %901 : vector<8x128xf32>
    %903 = arith.mulf %469, %851 : vector<8x128xf32>
    %904 = arith.mulf %470, %850 : vector<8x128xf32>
    %905 = arith.addf %903, %904 : vector<8x128xf32>
    %906 = arith.addf %896, %902 : vector<8x128xf32>
    %907 = arith.addf %899, %905 : vector<8x128xf32>
    %908 = arith.mulf %455, %836 : vector<8x128xf32>
    %909 = arith.mulf %456, %837 : vector<8x128xf32>
    %910 = arith.subf %908, %909 : vector<8x128xf32>
    %911 = arith.mulf %455, %837 : vector<8x128xf32>
    %912 = arith.mulf %456, %836 : vector<8x128xf32>
    %913 = arith.addf %911, %912 : vector<8x128xf32>
    %914 = arith.mulf %469, %864 : vector<8x128xf32>
    %915 = arith.mulf %470, %865 : vector<8x128xf32>
    %916 = arith.subf %914, %915 : vector<8x128xf32>
    %917 = arith.mulf %469, %865 : vector<8x128xf32>
    %918 = arith.mulf %470, %864 : vector<8x128xf32>
    %919 = arith.addf %917, %918 : vector<8x128xf32>
    %920 = arith.addf %910, %916 : vector<8x128xf32>
    %921 = arith.addf %913, %919 : vector<8x128xf32>
    %922 = vector.broadcast %676 : vector<1x128xf32> to vector<8x128xf32>
    %923 = arith.mulf %922, %36 : vector<8x128xf32>
    %924 = vector.broadcast %679 : vector<1x128xf32> to vector<8x128xf32>
    %925 = arith.mulf %924, %47 : vector<8x128xf32>
    %926 = arith.subf %923, %925 : vector<8x128xf32>
    %927 = vector.broadcast %676 : vector<1x128xf32> to vector<8x128xf32>
    %928 = arith.mulf %927, %47 : vector<8x128xf32>
    %929 = vector.broadcast %679 : vector<1x128xf32> to vector<8x128xf32>
    %930 = arith.mulf %929, %36 : vector<8x128xf32>
    %931 = arith.addf %928, %930 : vector<8x128xf32>
    %932 = arith.addf %926, %693 : vector<8x128xf32>
    %933 = arith.addf %931, %704 : vector<8x128xf32>
    %934 = arith.subf %926, %693 : vector<8x128xf32>
    %935 = arith.subf %931, %704 : vector<8x128xf32>
    %936 = vector.broadcast %713 : vector<1x128xf32> to vector<8x128xf32>
    %937 = arith.mulf %936, %122 : vector<8x128xf32>
    %938 = vector.broadcast %716 : vector<1x128xf32> to vector<8x128xf32>
    %939 = arith.mulf %938, %125 : vector<8x128xf32>
    %940 = arith.subf %937, %939 : vector<8x128xf32>
    %941 = vector.broadcast %713 : vector<1x128xf32> to vector<8x128xf32>
    %942 = arith.mulf %941, %125 : vector<8x128xf32>
    %943 = vector.broadcast %716 : vector<1x128xf32> to vector<8x128xf32>
    %944 = arith.mulf %943, %122 : vector<8x128xf32>
    %945 = arith.addf %942, %944 : vector<8x128xf32>
    %946 = vector.broadcast %713 : vector<1x128xf32> to vector<8x128xf32>
    %947 = arith.mulf %946, %729 : vector<8x128xf32>
    %948 = vector.broadcast %716 : vector<1x128xf32> to vector<8x128xf32>
    %949 = arith.mulf %948, %732 : vector<8x128xf32>
    %950 = arith.subf %947, %949 : vector<8x128xf32>
    %951 = vector.broadcast %713 : vector<1x128xf32> to vector<8x128xf32>
    %952 = arith.mulf %951, %732 : vector<8x128xf32>
    %953 = vector.broadcast %716 : vector<1x128xf32> to vector<8x128xf32>
    %954 = arith.mulf %953, %729 : vector<8x128xf32>
    %955 = arith.addf %952, %954 : vector<8x128xf32>
    %956 = arith.mulf %932, %940 : vector<8x128xf32>
    %957 = arith.mulf %933, %945 : vector<8x128xf32>
    %958 = arith.subf %956, %957 : vector<8x128xf32>
    %959 = arith.mulf %932, %945 : vector<8x128xf32>
    %960 = arith.mulf %933, %940 : vector<8x128xf32>
    %961 = arith.addf %959, %960 : vector<8x128xf32>
    %962 = arith.mulf %934, %940 : vector<8x128xf32>
    %963 = arith.mulf %935, %945 : vector<8x128xf32>
    %964 = arith.subf %962, %963 : vector<8x128xf32>
    %965 = arith.mulf %934, %945 : vector<8x128xf32>
    %966 = arith.mulf %935, %940 : vector<8x128xf32>
    %967 = arith.addf %965, %966 : vector<8x128xf32>
    %968 = arith.mulf %932, %950 : vector<8x128xf32>
    %969 = arith.mulf %933, %955 : vector<8x128xf32>
    %970 = arith.subf %968, %969 : vector<8x128xf32>
    %971 = arith.mulf %932, %955 : vector<8x128xf32>
    %972 = arith.mulf %933, %950 : vector<8x128xf32>
    %973 = arith.addf %971, %972 : vector<8x128xf32>
    %974 = arith.mulf %934, %950 : vector<8x128xf32>
    %975 = arith.mulf %935, %955 : vector<8x128xf32>
    %976 = arith.subf %974, %975 : vector<8x128xf32>
    %977 = arith.mulf %934, %955 : vector<8x128xf32>
    %978 = arith.mulf %935, %950 : vector<8x128xf32>
    %979 = arith.addf %977, %978 : vector<8x128xf32>
    %cst_92 = arith.constant 0.000000e+00 : f32
    %980 = vector.broadcast %cst_92 : f32 to vector<8x128xf32>
    %981 = arith.subf %980, %976 : vector<8x128xf32>
    %cst_93 = arith.constant 0.000000e+00 : f32
    %982 = vector.broadcast %cst_93 : f32 to vector<8x128xf32>
    %983 = arith.subf %982, %979 : vector<8x128xf32>
    %984 = arith.mulf %958, %748 : vector<8x128xf32>
    %985 = arith.mulf %961, %751 : vector<8x128xf32>
    %986 = arith.subf %984, %985 : vector<8x128xf32>
    %987 = arith.mulf %958, %751 : vector<8x128xf32>
    %988 = arith.mulf %961, %748 : vector<8x128xf32>
    %989 = arith.addf %987, %988 : vector<8x128xf32>
    %990 = arith.mulf %964, %752 : vector<8x128xf32>
    %991 = arith.mulf %967, %753 : vector<8x128xf32>
    %992 = arith.subf %990, %991 : vector<8x128xf32>
    %993 = arith.mulf %964, %753 : vector<8x128xf32>
    %994 = arith.mulf %967, %752 : vector<8x128xf32>
    %995 = arith.addf %993, %994 : vector<8x128xf32>
    %996 = arith.mulf %964, %748 : vector<8x128xf32>
    %997 = arith.mulf %967, %751 : vector<8x128xf32>
    %998 = arith.subf %996, %997 : vector<8x128xf32>
    %999 = arith.mulf %964, %751 : vector<8x128xf32>
    %1000 = arith.mulf %967, %748 : vector<8x128xf32>
    %1001 = arith.addf %999, %1000 : vector<8x128xf32>
    %1002 = arith.mulf %958, %752 : vector<8x128xf32>
    %1003 = arith.mulf %961, %753 : vector<8x128xf32>
    %1004 = arith.subf %1002, %1003 : vector<8x128xf32>
    %1005 = arith.mulf %958, %753 : vector<8x128xf32>
    %1006 = arith.mulf %961, %752 : vector<8x128xf32>
    %1007 = arith.addf %1005, %1006 : vector<8x128xf32>
    %1008 = arith.mulf %986, %970 : vector<8x128xf32>
    %1009 = arith.mulf %989, %973 : vector<8x128xf32>
    %1010 = arith.subf %1008, %1009 : vector<8x128xf32>
    %1011 = arith.mulf %986, %973 : vector<8x128xf32>
    %1012 = arith.mulf %989, %970 : vector<8x128xf32>
    %1013 = arith.addf %1011, %1012 : vector<8x128xf32>
    %1014 = arith.mulf %992, %981 : vector<8x128xf32>
    %1015 = arith.mulf %995, %983 : vector<8x128xf32>
    %1016 = arith.subf %1014, %1015 : vector<8x128xf32>
    %1017 = arith.mulf %992, %983 : vector<8x128xf32>
    %1018 = arith.mulf %995, %981 : vector<8x128xf32>
    %1019 = arith.addf %1017, %1018 : vector<8x128xf32>
    %1020 = arith.addf %1010, %1016 : vector<8x128xf32>
    %1021 = arith.addf %1013, %1019 : vector<8x128xf32>
    %1022 = arith.mulf %986, %981 : vector<8x128xf32>
    %1023 = arith.mulf %989, %983 : vector<8x128xf32>
    %1024 = arith.subf %1022, %1023 : vector<8x128xf32>
    %1025 = arith.mulf %986, %983 : vector<8x128xf32>
    %1026 = arith.mulf %989, %981 : vector<8x128xf32>
    %1027 = arith.addf %1025, %1026 : vector<8x128xf32>
    %1028 = arith.mulf %992, %970 : vector<8x128xf32>
    %1029 = arith.mulf %995, %973 : vector<8x128xf32>
    %1030 = arith.subf %1028, %1029 : vector<8x128xf32>
    %1031 = arith.mulf %992, %973 : vector<8x128xf32>
    %1032 = arith.mulf %995, %970 : vector<8x128xf32>
    %1033 = arith.addf %1031, %1032 : vector<8x128xf32>
    %1034 = arith.addf %1024, %1030 : vector<8x128xf32>
    %1035 = arith.addf %1027, %1033 : vector<8x128xf32>
    %1036 = arith.mulf %998, %970 : vector<8x128xf32>
    %1037 = arith.mulf %1001, %973 : vector<8x128xf32>
    %1038 = arith.subf %1036, %1037 : vector<8x128xf32>
    %1039 = arith.mulf %998, %973 : vector<8x128xf32>
    %1040 = arith.mulf %1001, %970 : vector<8x128xf32>
    %1041 = arith.addf %1039, %1040 : vector<8x128xf32>
    %1042 = arith.mulf %1004, %981 : vector<8x128xf32>
    %1043 = arith.mulf %1007, %983 : vector<8x128xf32>
    %1044 = arith.subf %1042, %1043 : vector<8x128xf32>
    %1045 = arith.mulf %1004, %983 : vector<8x128xf32>
    %1046 = arith.mulf %1007, %981 : vector<8x128xf32>
    %1047 = arith.addf %1045, %1046 : vector<8x128xf32>
    %1048 = arith.addf %1038, %1044 : vector<8x128xf32>
    %1049 = arith.addf %1041, %1047 : vector<8x128xf32>
    %1050 = arith.mulf %998, %981 : vector<8x128xf32>
    %1051 = arith.mulf %1001, %983 : vector<8x128xf32>
    %1052 = arith.subf %1050, %1051 : vector<8x128xf32>
    %1053 = arith.mulf %998, %983 : vector<8x128xf32>
    %1054 = arith.mulf %1001, %981 : vector<8x128xf32>
    %1055 = arith.addf %1053, %1054 : vector<8x128xf32>
    %1056 = arith.mulf %1004, %970 : vector<8x128xf32>
    %1057 = arith.mulf %1007, %973 : vector<8x128xf32>
    %1058 = arith.subf %1056, %1057 : vector<8x128xf32>
    %1059 = arith.mulf %1004, %973 : vector<8x128xf32>
    %1060 = arith.mulf %1007, %970 : vector<8x128xf32>
    %1061 = arith.addf %1059, %1060 : vector<8x128xf32>
    %1062 = arith.addf %1052, %1058 : vector<8x128xf32>
    %1063 = arith.addf %1055, %1061 : vector<8x128xf32>
    %1064 = arith.mulf %625, %1020 : vector<8x128xf32>
    %1065 = arith.mulf %626, %1021 : vector<8x128xf32>
    %1066 = arith.subf %1064, %1065 : vector<8x128xf32>
    %1067 = arith.mulf %625, %1021 : vector<8x128xf32>
    %1068 = arith.mulf %626, %1020 : vector<8x128xf32>
    %1069 = arith.addf %1067, %1068 : vector<8x128xf32>
    %1070 = arith.mulf %639, %1048 : vector<8x128xf32>
    %1071 = arith.mulf %640, %1049 : vector<8x128xf32>
    %1072 = arith.subf %1070, %1071 : vector<8x128xf32>
    %1073 = arith.mulf %639, %1049 : vector<8x128xf32>
    %1074 = arith.mulf %640, %1048 : vector<8x128xf32>
    %1075 = arith.addf %1073, %1074 : vector<8x128xf32>
    %1076 = arith.addf %1066, %1072 : vector<8x128xf32>
    %1077 = arith.addf %1069, %1075 : vector<8x128xf32>
    %1078 = arith.mulf %625, %1034 : vector<8x128xf32>
    %1079 = arith.mulf %626, %1035 : vector<8x128xf32>
    %1080 = arith.subf %1078, %1079 : vector<8x128xf32>
    %1081 = arith.mulf %625, %1035 : vector<8x128xf32>
    %1082 = arith.mulf %626, %1034 : vector<8x128xf32>
    %1083 = arith.addf %1081, %1082 : vector<8x128xf32>
    %1084 = arith.mulf %639, %1062 : vector<8x128xf32>
    %1085 = arith.mulf %640, %1063 : vector<8x128xf32>
    %1086 = arith.subf %1084, %1085 : vector<8x128xf32>
    %1087 = arith.mulf %639, %1063 : vector<8x128xf32>
    %1088 = arith.mulf %640, %1062 : vector<8x128xf32>
    %1089 = arith.addf %1087, %1088 : vector<8x128xf32>
    %1090 = arith.addf %1080, %1086 : vector<8x128xf32>
    %1091 = arith.addf %1083, %1089 : vector<8x128xf32>
    %1092 = arith.mulf %653, %1020 : vector<8x128xf32>
    %1093 = arith.mulf %654, %1021 : vector<8x128xf32>
    %1094 = arith.subf %1092, %1093 : vector<8x128xf32>
    %1095 = arith.mulf %653, %1021 : vector<8x128xf32>
    %1096 = arith.mulf %654, %1020 : vector<8x128xf32>
    %1097 = arith.addf %1095, %1096 : vector<8x128xf32>
    %1098 = arith.mulf %667, %1048 : vector<8x128xf32>
    %1099 = arith.mulf %668, %1049 : vector<8x128xf32>
    %1100 = arith.subf %1098, %1099 : vector<8x128xf32>
    %1101 = arith.mulf %667, %1049 : vector<8x128xf32>
    %1102 = arith.mulf %668, %1048 : vector<8x128xf32>
    %1103 = arith.addf %1101, %1102 : vector<8x128xf32>
    %1104 = arith.addf %1094, %1100 : vector<8x128xf32>
    %1105 = arith.addf %1097, %1103 : vector<8x128xf32>
    %1106 = arith.mulf %653, %1034 : vector<8x128xf32>
    %1107 = arith.mulf %654, %1035 : vector<8x128xf32>
    %1108 = arith.subf %1106, %1107 : vector<8x128xf32>
    %1109 = arith.mulf %653, %1035 : vector<8x128xf32>
    %1110 = arith.mulf %654, %1034 : vector<8x128xf32>
    %1111 = arith.addf %1109, %1110 : vector<8x128xf32>
    %1112 = arith.mulf %667, %1062 : vector<8x128xf32>
    %1113 = arith.mulf %668, %1063 : vector<8x128xf32>
    %1114 = arith.subf %1112, %1113 : vector<8x128xf32>
    %1115 = arith.mulf %667, %1063 : vector<8x128xf32>
    %1116 = arith.mulf %668, %1062 : vector<8x128xf32>
    %1117 = arith.addf %1115, %1116 : vector<8x128xf32>
    %1118 = arith.addf %1108, %1114 : vector<8x128xf32>
    %1119 = arith.addf %1111, %1117 : vector<8x128xf32>
    %1120 = arith.addf %36, %98 : vector<8x128xf32>
    %1121 = arith.addf %47, %109 : vector<8x128xf32>
    %1122 = arith.mulf %1120, %122 : vector<8x128xf32>
    %1123 = arith.mulf %1121, %125 : vector<8x128xf32>
    %1124 = arith.subf %1122, %1123 : vector<8x128xf32>
    %1125 = arith.mulf %1120, %125 : vector<8x128xf32>
    %1126 = arith.mulf %1121, %122 : vector<8x128xf32>
    %1127 = arith.addf %1125, %1126 : vector<8x128xf32>
    %1128 = arith.subf %36, %98 : vector<8x128xf32>
    %1129 = arith.subf %47, %109 : vector<8x128xf32>
    %1130 = arith.mulf %1128, %122 : vector<8x128xf32>
    %1131 = arith.mulf %1129, %125 : vector<8x128xf32>
    %1132 = arith.subf %1130, %1131 : vector<8x128xf32>
    %1133 = arith.mulf %1128, %125 : vector<8x128xf32>
    %1134 = arith.mulf %1129, %122 : vector<8x128xf32>
    %1135 = arith.addf %1133, %1134 : vector<8x128xf32>
    %1136 = arith.mulf %878, %1124 : vector<8x128xf32>
    %1137 = arith.mulf %879, %1127 : vector<8x128xf32>
    %1138 = arith.subf %1136, %1137 : vector<8x128xf32>
    %1139 = arith.mulf %878, %1127 : vector<8x128xf32>
    %1140 = arith.mulf %879, %1124 : vector<8x128xf32>
    %1141 = arith.addf %1139, %1140 : vector<8x128xf32>
    %1142 = arith.mulf %892, %1132 : vector<8x128xf32>
    %1143 = arith.mulf %893, %1135 : vector<8x128xf32>
    %1144 = arith.subf %1142, %1143 : vector<8x128xf32>
    %1145 = arith.mulf %892, %1135 : vector<8x128xf32>
    %1146 = arith.mulf %893, %1132 : vector<8x128xf32>
    %1147 = arith.addf %1145, %1146 : vector<8x128xf32>
    %1148 = arith.addf %1138, %1144 : vector<8x128xf32>
    %1149 = arith.addf %1141, %1147 : vector<8x128xf32>
    %1150 = arith.mulf %878, %1132 : vector<8x128xf32>
    %1151 = arith.mulf %879, %1135 : vector<8x128xf32>
    %1152 = arith.subf %1150, %1151 : vector<8x128xf32>
    %1153 = arith.mulf %878, %1135 : vector<8x128xf32>
    %1154 = arith.mulf %879, %1132 : vector<8x128xf32>
    %1155 = arith.addf %1153, %1154 : vector<8x128xf32>
    %1156 = arith.mulf %892, %1124 : vector<8x128xf32>
    %1157 = arith.mulf %893, %1127 : vector<8x128xf32>
    %1158 = arith.subf %1156, %1157 : vector<8x128xf32>
    %1159 = arith.mulf %892, %1127 : vector<8x128xf32>
    %1160 = arith.mulf %893, %1124 : vector<8x128xf32>
    %1161 = arith.addf %1159, %1160 : vector<8x128xf32>
    %1162 = arith.addf %1152, %1158 : vector<8x128xf32>
    %1163 = arith.addf %1155, %1161 : vector<8x128xf32>
    %1164 = arith.mulf %906, %1124 : vector<8x128xf32>
    %1165 = arith.mulf %907, %1127 : vector<8x128xf32>
    %1166 = arith.subf %1164, %1165 : vector<8x128xf32>
    %1167 = arith.mulf %906, %1127 : vector<8x128xf32>
    %1168 = arith.mulf %907, %1124 : vector<8x128xf32>
    %1169 = arith.addf %1167, %1168 : vector<8x128xf32>
    %1170 = arith.mulf %920, %1132 : vector<8x128xf32>
    %1171 = arith.mulf %921, %1135 : vector<8x128xf32>
    %1172 = arith.subf %1170, %1171 : vector<8x128xf32>
    %1173 = arith.mulf %920, %1135 : vector<8x128xf32>
    %1174 = arith.mulf %921, %1132 : vector<8x128xf32>
    %1175 = arith.addf %1173, %1174 : vector<8x128xf32>
    %1176 = arith.addf %1166, %1172 : vector<8x128xf32>
    %1177 = arith.addf %1169, %1175 : vector<8x128xf32>
    %1178 = arith.mulf %906, %1132 : vector<8x128xf32>
    %1179 = arith.mulf %907, %1135 : vector<8x128xf32>
    %1180 = arith.subf %1178, %1179 : vector<8x128xf32>
    %1181 = arith.mulf %906, %1135 : vector<8x128xf32>
    %1182 = arith.mulf %907, %1132 : vector<8x128xf32>
    %1183 = arith.addf %1181, %1182 : vector<8x128xf32>
    %1184 = arith.mulf %920, %1124 : vector<8x128xf32>
    %1185 = arith.mulf %921, %1127 : vector<8x128xf32>
    %1186 = arith.subf %1184, %1185 : vector<8x128xf32>
    %1187 = arith.mulf %920, %1127 : vector<8x128xf32>
    %1188 = arith.mulf %921, %1124 : vector<8x128xf32>
    %1189 = arith.addf %1187, %1188 : vector<8x128xf32>
    %1190 = arith.addf %1180, %1186 : vector<8x128xf32>
    %1191 = arith.addf %1183, %1189 : vector<8x128xf32>
    %1192 = vector.broadcast %56 : vector<1x128xf32> to vector<8x128xf32>
    %1193 = arith.mulf %1192, %36 : vector<8x128xf32>
    %1194 = vector.broadcast %59 : vector<1x128xf32> to vector<8x128xf32>
    %1195 = arith.mulf %1194, %47 : vector<8x128xf32>
    %1196 = arith.subf %1193, %1195 : vector<8x128xf32>
    %1197 = vector.broadcast %56 : vector<1x128xf32> to vector<8x128xf32>
    %1198 = arith.mulf %1197, %47 : vector<8x128xf32>
    %1199 = vector.broadcast %59 : vector<1x128xf32> to vector<8x128xf32>
    %1200 = arith.mulf %1199, %36 : vector<8x128xf32>
    %1201 = arith.addf %1198, %1200 : vector<8x128xf32>
    %1202 = vector.broadcast %162 : vector<1x128xf32> to vector<8x128xf32>
    %1203 = arith.mulf %1202, %122 : vector<8x128xf32>
    %1204 = vector.broadcast %165 : vector<1x128xf32> to vector<8x128xf32>
    %1205 = arith.mulf %1204, %125 : vector<8x128xf32>
    %1206 = arith.subf %1203, %1205 : vector<8x128xf32>
    %1207 = vector.broadcast %162 : vector<1x128xf32> to vector<8x128xf32>
    %1208 = arith.mulf %1207, %125 : vector<8x128xf32>
    %1209 = vector.broadcast %165 : vector<1x128xf32> to vector<8x128xf32>
    %1210 = arith.mulf %1209, %122 : vector<8x128xf32>
    %1211 = arith.addf %1208, %1210 : vector<8x128xf32>
    %1212 = arith.addf %1196, %98 : vector<8x128xf32>
    %1213 = arith.addf %1201, %109 : vector<8x128xf32>
    %1214 = arith.mulf %1212, %1206 : vector<8x128xf32>
    %1215 = arith.mulf %1213, %1211 : vector<8x128xf32>
    %1216 = arith.subf %1214, %1215 : vector<8x128xf32>
    %1217 = arith.mulf %1212, %1211 : vector<8x128xf32>
    %1218 = arith.mulf %1213, %1206 : vector<8x128xf32>
    %1219 = arith.addf %1217, %1218 : vector<8x128xf32>
    %1220 = arith.subf %1196, %98 : vector<8x128xf32>
    %1221 = arith.subf %1201, %109 : vector<8x128xf32>
    %1222 = arith.mulf %1220, %1206 : vector<8x128xf32>
    %1223 = arith.mulf %1221, %1211 : vector<8x128xf32>
    %1224 = arith.subf %1222, %1223 : vector<8x128xf32>
    %1225 = arith.mulf %1220, %1211 : vector<8x128xf32>
    %1226 = arith.mulf %1221, %1206 : vector<8x128xf32>
    %1227 = arith.addf %1225, %1226 : vector<8x128xf32>
    %1228 = arith.mulf %1076, %1216 : vector<8x128xf32>
    %1229 = arith.mulf %1077, %1219 : vector<8x128xf32>
    %1230 = arith.subf %1228, %1229 : vector<8x128xf32>
    %1231 = arith.mulf %1076, %1219 : vector<8x128xf32>
    %1232 = arith.mulf %1077, %1216 : vector<8x128xf32>
    %1233 = arith.addf %1231, %1232 : vector<8x128xf32>
    %1234 = arith.mulf %1090, %1224 : vector<8x128xf32>
    %1235 = arith.mulf %1091, %1227 : vector<8x128xf32>
    %1236 = arith.subf %1234, %1235 : vector<8x128xf32>
    %1237 = arith.mulf %1090, %1227 : vector<8x128xf32>
    %1238 = arith.mulf %1091, %1224 : vector<8x128xf32>
    %1239 = arith.addf %1237, %1238 : vector<8x128xf32>
    %1240 = arith.addf %1230, %1236 : vector<8x128xf32>
    %1241 = arith.addf %1233, %1239 : vector<8x128xf32>
    %1242 = arith.mulf %1076, %1224 : vector<8x128xf32>
    %1243 = arith.mulf %1077, %1227 : vector<8x128xf32>
    %1244 = arith.subf %1242, %1243 : vector<8x128xf32>
    %1245 = arith.mulf %1076, %1227 : vector<8x128xf32>
    %1246 = arith.mulf %1077, %1224 : vector<8x128xf32>
    %1247 = arith.addf %1245, %1246 : vector<8x128xf32>
    %1248 = arith.mulf %1090, %1216 : vector<8x128xf32>
    %1249 = arith.mulf %1091, %1219 : vector<8x128xf32>
    %1250 = arith.subf %1248, %1249 : vector<8x128xf32>
    %1251 = arith.mulf %1090, %1219 : vector<8x128xf32>
    %1252 = arith.mulf %1091, %1216 : vector<8x128xf32>
    %1253 = arith.addf %1251, %1252 : vector<8x128xf32>
    %1254 = arith.addf %1244, %1250 : vector<8x128xf32>
    %1255 = arith.addf %1247, %1253 : vector<8x128xf32>
    %1256 = arith.mulf %1104, %1216 : vector<8x128xf32>
    %1257 = arith.mulf %1105, %1219 : vector<8x128xf32>
    %1258 = arith.subf %1256, %1257 : vector<8x128xf32>
    %1259 = arith.mulf %1104, %1219 : vector<8x128xf32>
    %1260 = arith.mulf %1105, %1216 : vector<8x128xf32>
    %1261 = arith.addf %1259, %1260 : vector<8x128xf32>
    %1262 = arith.mulf %1118, %1224 : vector<8x128xf32>
    %1263 = arith.mulf %1119, %1227 : vector<8x128xf32>
    %1264 = arith.subf %1262, %1263 : vector<8x128xf32>
    %1265 = arith.mulf %1118, %1227 : vector<8x128xf32>
    %1266 = arith.mulf %1119, %1224 : vector<8x128xf32>
    %1267 = arith.addf %1265, %1266 : vector<8x128xf32>
    %1268 = arith.addf %1258, %1264 : vector<8x128xf32>
    %1269 = arith.addf %1261, %1267 : vector<8x128xf32>
    %1270 = arith.mulf %1104, %1224 : vector<8x128xf32>
    %1271 = arith.mulf %1105, %1227 : vector<8x128xf32>
    %1272 = arith.subf %1270, %1271 : vector<8x128xf32>
    %1273 = arith.mulf %1104, %1227 : vector<8x128xf32>
    %1274 = arith.mulf %1105, %1224 : vector<8x128xf32>
    %1275 = arith.addf %1273, %1274 : vector<8x128xf32>
    %1276 = arith.mulf %1118, %1216 : vector<8x128xf32>
    %1277 = arith.mulf %1119, %1219 : vector<8x128xf32>
    %1278 = arith.subf %1276, %1277 : vector<8x128xf32>
    %1279 = arith.mulf %1118, %1219 : vector<8x128xf32>
    %1280 = arith.mulf %1119, %1216 : vector<8x128xf32>
    %1281 = arith.addf %1279, %1280 : vector<8x128xf32>
    %1282 = arith.addf %1272, %1278 : vector<8x128xf32>
    %1283 = arith.addf %1275, %1281 : vector<8x128xf32>
    %c0_94 = arith.constant 0 : index
    %c0_95 = arith.constant 0 : index
    %c0_96 = arith.constant 0 : index
    %1284 = vector.load %arg10[%c0_94, %c0_95, %c0_96] : memref<16x8x128xf32, #tpu.memory_space<vmem>>, vector<1x8x128xf32>
    %1285 = vector.shape_cast %1284 : vector<1x8x128xf32> to vector<8x128xf32>
    %1286 = vector.shape_cast %1148 : vector<8x128xf32> to vector<1x8x128xf32>
    tpu.vector_store %arg10[%c0_94, %c0_95, %c0_96], %1286 {strides = array<i32>} : memref<16x8x128xf32, #tpu.memory_space<vmem>>, vector<1x8x128xf32>,
    %c1_97 = arith.constant 1 : index
    %c0_98 = arith.constant 0 : index
    %c0_99 = arith.constant 0 : index
    %1287 = vector.load %arg10[%c1_97, %c0_98, %c0_99] : memref<16x8x128xf32, #tpu.memory_space<vmem>>, vector<1x8x128xf32>
    %1288 = vector.shape_cast %1287 : vector<1x8x128xf32> to vector<8x128xf32>
    %1289 = vector.shape_cast %1149 : vector<8x128xf32> to vector<1x8x128xf32>
    tpu.vector_store %arg10[%c1_97, %c0_98, %c0_99], %1289 {strides = array<i32>} : memref<16x8x128xf32, #tpu.memory_space<vmem>>, vector<1x8x128xf32>,
    %c8 = arith.constant 8 : index
    %c0_100 = arith.constant 0 : index
    %c0_101 = arith.constant 0 : index
    %1290 = vector.load %arg10[%c8, %c0_100, %c0_101] : memref<16x8x128xf32, #tpu.memory_space<vmem>>, vector<1x8x128xf32>
    %1291 = vector.shape_cast %1290 : vector<1x8x128xf32> to vector<8x128xf32>
    %1292 = vector.shape_cast %1240 : vector<8x128xf32> to vector<1x8x128xf32>
    tpu.vector_store %arg10[%c8, %c0_100, %c0_101], %1292 {strides = array<i32>} : memref<16x8x128xf32, #tpu.memory_space<vmem>>, vector<1x8x128xf32>,
    %c9 = arith.constant 9 : index
    %c0_102 = arith.constant 0 : index
    %c0_103 = arith.constant 0 : index
    %1293 = vector.load %arg10[%c9, %c0_102, %c0_103] : memref<16x8x128xf32, #tpu.memory_space<vmem>>, vector<1x8x128xf32>
    %1294 = vector.shape_cast %1293 : vector<1x8x128xf32> to vector<8x128xf32>
    %1295 = vector.shape_cast %1241 : vector<8x128xf32> to vector<1x8x128xf32>
    tpu.vector_store %arg10[%c9, %c0_102, %c0_103], %1295 {strides = array<i32>} : memref<16x8x128xf32, #tpu.memory_space<vmem>>, vector<1x8x128xf32>,
    %c2 = arith.constant 2 : index
    %c0_104 = arith.constant 0 : index
    %c0_105 = arith.constant 0 : index
    %1296 = vector.load %arg10[%c2, %c0_104, %c0_105] : memref<16x8x128xf32, #tpu.memory_space<vmem>>, vector<1x8x128xf32>
    %1297 = vector.shape_cast %1296 : vector<1x8x128xf32> to vector<8x128xf32>
    %1298 = vector.shape_cast %1162 : vector<8x128xf32> to vector<1x8x128xf32>
    tpu.vector_store %arg10[%c2, %c0_104, %c0_105], %1298 {strides = array<i32>} : memref<16x8x128xf32, #tpu.memory_space<vmem>>, vector<1x8x128xf32>,
    %c3 = arith.constant 3 : index
    %c0_106 = arith.constant 0 : index
    %c0_107 = arith.constant 0 : index
    %1299 = vector.load %arg10[%c3, %c0_106, %c0_107] : memref<16x8x128xf32, #tpu.memory_space<vmem>>, vector<1x8x128xf32>
    %1300 = vector.shape_cast %1299 : vector<1x8x128xf32> to vector<8x128xf32>
    %1301 = vector.shape_cast %1163 : vector<8x128xf32> to vector<1x8x128xf32>
    tpu.vector_store %arg10[%c3, %c0_106, %c0_107], %1301 {strides = array<i32>} : memref<16x8x128xf32, #tpu.memory_space<vmem>>, vector<1x8x128xf32>,
    %c10 = arith.constant 10 : index
    %c0_108 = arith.constant 0 : index
    %c0_109 = arith.constant 0 : index
    %1302 = vector.load %arg10[%c10, %c0_108, %c0_109] : memref<16x8x128xf32, #tpu.memory_space<vmem>>, vector<1x8x128xf32>
    %1303 = vector.shape_cast %1302 : vector<1x8x128xf32> to vector<8x128xf32>
    %1304 = vector.shape_cast %1254 : vector<8x128xf32> to vector<1x8x128xf32>
    tpu.vector_store %arg10[%c10, %c0_108, %c0_109], %1304 {strides = array<i32>} : memref<16x8x128xf32, #tpu.memory_space<vmem>>, vector<1x8x128xf32>,
    %c11 = arith.constant 11 : index
    %c0_110 = arith.constant 0 : index
    %c0_111 = arith.constant 0 : index
    %1305 = vector.load %arg10[%c11, %c0_110, %c0_111] : memref<16x8x128xf32, #tpu.memory_space<vmem>>, vector<1x8x128xf32>
    %1306 = vector.shape_cast %1305 : vector<1x8x128xf32> to vector<8x128xf32>
    %1307 = vector.shape_cast %1255 : vector<8x128xf32> to vector<1x8x128xf32>
    tpu.vector_store %arg10[%c11, %c0_110, %c0_111], %1307 {strides = array<i32>} : memref<16x8x128xf32, #tpu.memory_space<vmem>>, vector<1x8x128xf32>,
    %c4 = arith.constant 4 : index
    %c0_112 = arith.constant 0 : index
    %c0_113 = arith.constant 0 : index
    %1308 = vector.load %arg10[%c4, %c0_112, %c0_113] : memref<16x8x128xf32, #tpu.memory_space<vmem>>, vector<1x8x128xf32>
    %1309 = vector.shape_cast %1308 : vector<1x8x128xf32> to vector<8x128xf32>
    %1310 = vector.shape_cast %1176 : vector<8x128xf32> to vector<1x8x128xf32>
    tpu.vector_store %arg10[%c4, %c0_112, %c0_113], %1310 {strides = array<i32>} : memref<16x8x128xf32, #tpu.memory_space<vmem>>, vector<1x8x128xf32>,
    %c5 = arith.constant 5 : index
    %c0_114 = arith.constant 0 : index
    %c0_115 = arith.constant 0 : index
    %1311 = vector.load %arg10[%c5, %c0_114, %c0_115] : memref<16x8x128xf32, #tpu.memory_space<vmem>>, vector<1x8x128xf32>
    %1312 = vector.shape_cast %1311 : vector<1x8x128xf32> to vector<8x128xf32>
    %1313 = vector.shape_cast %1177 : vector<8x128xf32> to vector<1x8x128xf32>
    tpu.vector_store %arg10[%c5, %c0_114, %c0_115], %1313 {strides = array<i32>} : memref<16x8x128xf32, #tpu.memory_space<vmem>>, vector<1x8x128xf32>,
    %c12 = arith.constant 12 : index
    %c0_116 = arith.constant 0 : index
    %c0_117 = arith.constant 0 : index
    %1314 = vector.load %arg10[%c12, %c0_116, %c0_117] : memref<16x8x128xf32, #tpu.memory_space<vmem>>, vector<1x8x128xf32>
    %1315 = vector.shape_cast %1314 : vector<1x8x128xf32> to vector<8x128xf32>
    %1316 = vector.shape_cast %1268 : vector<8x128xf32> to vector<1x8x128xf32>
    tpu.vector_store %arg10[%c12, %c0_116, %c0_117], %1316 {strides = array<i32>} : memref<16x8x128xf32, #tpu.memory_space<vmem>>, vector<1x8x128xf32>,
    %c13 = arith.constant 13 : index
    %c0_118 = arith.constant 0 : index
    %c0_119 = arith.constant 0 : index
    %1317 = vector.load %arg10[%c13, %c0_118, %c0_119] : memref<16x8x128xf32, #tpu.memory_space<vmem>>, vector<1x8x128xf32>
    %1318 = vector.shape_cast %1317 : vector<1x8x128xf32> to vector<8x128xf32>
    %1319 = vector.shape_cast %1269 : vector<8x128xf32> to vector<1x8x128xf32>
    tpu.vector_store %arg10[%c13, %c0_118, %c0_119], %1319 {strides = array<i32>} : memref<16x8x128xf32, #tpu.memory_space<vmem>>, vector<1x8x128xf32>,
    %c6 = arith.constant 6 : index
    %c0_120 = arith.constant 0 : index
    %c0_121 = arith.constant 0 : index
    %1320 = vector.load %arg10[%c6, %c0_120, %c0_121] : memref<16x8x128xf32, #tpu.memory_space<vmem>>, vector<1x8x128xf32>
    %1321 = vector.shape_cast %1320 : vector<1x8x128xf32> to vector<8x128xf32>
    %1322 = vector.shape_cast %1190 : vector<8x128xf32> to vector<1x8x128xf32>
    tpu.vector_store %arg10[%c6, %c0_120, %c0_121], %1322 {strides = array<i32>} : memref<16x8x128xf32, #tpu.memory_space<vmem>>, vector<1x8x128xf32>,
    %c7 = arith.constant 7 : index
    %c0_122 = arith.constant 0 : index
    %c0_123 = arith.constant 0 : index
    %1323 = vector.load %arg10[%c7, %c0_122, %c0_123] : memref<16x8x128xf32, #tpu.memory_space<vmem>>, vector<1x8x128xf32>
    %1324 = vector.shape_cast %1323 : vector<1x8x128xf32> to vector<8x128xf32>
    %1325 = vector.shape_cast %1191 : vector<8x128xf32> to vector<1x8x128xf32>
    tpu.vector_store %arg10[%c7, %c0_122, %c0_123], %1325 {strides = array<i32>} : memref<16x8x128xf32, #tpu.memory_space<vmem>>, vector<1x8x128xf32>,
    %c14 = arith.constant 14 : index
    %c0_124 = arith.constant 0 : index
    %c0_125 = arith.constant 0 : index
    %1326 = vector.load %arg10[%c14, %c0_124, %c0_125] : memref<16x8x128xf32, #tpu.memory_space<vmem>>, vector<1x8x128xf32>
    %1327 = vector.shape_cast %1326 : vector<1x8x128xf32> to vector<8x128xf32>
    %1328 = vector.shape_cast %1282 : vector<8x128xf32> to vector<1x8x128xf32>
    tpu.vector_store %arg10[%c14, %c0_124, %c0_125], %1328 {strides = array<i32>} : memref<16x8x128xf32, #tpu.memory_space<vmem>>, vector<1x8x128xf32>,
    %c15 = arith.constant 15 : index
    %c0_126 = arith.constant 0 : index
    %c0_127 = arith.constant 0 : index
    %1329 = vector.load %arg10[%c15, %c0_126, %c0_127] : memref<16x8x128xf32, #tpu.memory_space<vmem>>, vector<1x8x128xf32>
    %1330 = vector.shape_cast %1329 : vector<1x8x128xf32> to vector<8x128xf32>
    %1331 = vector.shape_cast %1283 : vector<8x128xf32> to vector<1x8x128xf32>
    tpu.vector_store %arg10[%c15, %c0_126, %c0_127], %1331 {strides = array<i32>} : memref<16x8x128xf32, #tpu.memory_space<vmem>>, vector<1x8x128xf32>,
    return
  }
  func.func @transform_0(%arg0: i32) -> i32 {
    %c0_i32 = arith.constant 0 : i32
    %c0_i32_0 = arith.constant 0 : i32
    return %c0_i32 : i32
  }
  func.func @transform_1(%arg0: i32) -> (i32, i32) {
    %c0_i32 = arith.constant 0 : i32
    %c0_i32_0 = arith.constant 0 : i32
    %c0_i32_1 = arith.constant 0 : i32
    return %c0_i32, %c0_i32_0 : i32, i32
  }
  func.func @transform_2(%arg0: i32) -> (i32, i32) {
    %c0_i32 = arith.constant 0 : i32
    %c0_i32_0 = arith.constant 0 : i32
    return %c0_i32, %arg0 : i32, i32
  }
  func.func @transform_3(%arg0: i32) -> (i32, i32) {
    %c0_i32 = arith.constant 0 : i32
    %c0_i32_0 = arith.constant 0 : i32
    return %c0_i32, %arg0 : i32, i32
  }
  func.func @transform_4(%arg0: i32) -> (i32, i32) {
    %c0_i32 = arith.constant 0 : i32
    %c0_i32_0 = arith.constant 0 : i32
    return %c0_i32, %arg0 : i32, i32
  }
  func.func @transform_5(%arg0: i32) -> (i32, i32) {
    %c0_i32 = arith.constant 0 : i32
    %c0_i32_0 = arith.constant 0 : i32
    return %c0_i32, %arg0 : i32, i32
  }
  func.func @transform_6(%arg0: i32) -> (i32, i32) {
    %c0_i32 = arith.constant 0 : i32
    %c0_i32_0 = arith.constant 0 : i32
    return %c0_i32, %arg0 : i32, i32
  }
  func.func @transform_7(%arg0: i32) -> (i32, i32, i32) {
    %c0_i32 = arith.constant 0 : i32
    %c0_i32_0 = arith.constant 0 : i32
    %c0_i32_1 = arith.constant 0 : i32
    return %c0_i32, %c0_i32_0, %arg0 : i32, i32, i32
  }
  func.func @transform_8(%arg0: i32) -> (i32, i32, i32) {
    %c0_i32 = arith.constant 0 : i32
    %c0_i32_0 = arith.constant 0 : i32
    %c0_i32_1 = arith.constant 0 : i32
    return %c0_i32, %c0_i32_0, %arg0 : i32, i32, i32
  }
  func.func @transform_9(%arg0: i32) -> (i32, i32, i32) {
    %c0_i32 = arith.constant 0 : i32
    %c0_i32_0 = arith.constant 0 : i32
    %c0_i32_1 = arith.constant 0 : i32
    return %c0_i32, %c0_i32_0, %arg0 : i32, i32, i32
  }
}

</mosaic_0001>

<llo_original>
// kernel: tpu_custom_call.1
$region0: #{tpu_custom_call.1}
  #allocation0 [shape = 'u32[]', space=smem, size = 0x4, offset = 0x4, fixed_abs, tag = 'smem constant byte address 0x4 - core index']
  #allocation1 [shape = 'u32[144,128]{1,0:T(1,128)}', space=vmem, size = 0x12000, scoped, tag = 'internal scratch']
  %s0 = inlined_call_operand.hbm [shape: f32[2], index: 0, kind: input, shape index: {}]
  %s1 = inlined_call_operand.vmem [shape: f32[8,1], index: 1, kind: input, shape index: {}]
  %s2 = inlined_call_operand.vmem [shape: f32[1,256], index: 2, kind: input, shape index: {}]
  %s3 = inlined_call_operand.vmem [shape: f32[1,256], index: 3, kind: input, shape index: {}]
  %s4 = inlined_call_operand.vmem [shape: f32[1,256], index: 4, kind: input, shape index: {}]
  %s5 = inlined_call_operand.vmem [shape: f32[1,256], index: 5, kind: input, shape index: {}]
  %s6 = inlined_call_operand.vmem [shape: f32[1,256], index: 6, kind: input, shape index: {}]
  %s7 = inlined_call_operand.vmem [shape: f32[2,1,256], index: 7, kind: input, shape index: {}]
  %s8 = inlined_call_operand.vmem [shape: f32[2,1,256], index: 8, kind: input, shape index: {}]
  %s9 = inlined_call_operand.hbm [shape: f32[16,8,256], index: 9, kind: output, shape index: {}]
  %s10 = sld [smem:[#allocation0]]
  $region141: #{tpu_custom_call.1} parent=0
    _
  %s12 = ssub.s32 1, %s10
  %s13 = scalar_select 0, %s12, %s10
  $region1: #{tpu_custom_call.1} parent=0
    #allocation2 [shape = 'u8[512]{0}', space=smem, size = 0x200, scoped, tag = 'input window, operand 0, single buffered']
    #allocation3 [shape = 's32[2]{0}', space=sflag, size = 0x8, scoped, tag = 'scoped memory for tpu_custom_call.1']
    #allocation4 [shape = 's32[2]{0}', space=sflag, size = 0x8, scoped, tag = 'scoped memory for tpu_custom_call.1']
    #allocation5 [shape = 'u8[2048]{0}', space=vmem, size = 0x800, scoped, tag = 'input window, operand 7']
    #allocation6 [shape = 'u8[2048]{0}', space=vmem, size = 0x800, scoped, tag = 'input window, operand 8']
    #allocation7 [shape = 'u8[131072]{0}', space=vmem, size = 0x20000, scoped, tag = 'output window, operand 0']
    %14 = vsyncpa [#allocation4], 0
    %15 = vsyncpa [#allocation3], 0
    %s16 = scalar_lea.sflag [#allocation3], 1
    %17 = vsyncpa %s16, 0
    loop: start=0, step=1, limit=4
    $region2: #{tpu_custom_call.1} parent=1 // loop_pre_header
      _
    $region3: #{tpu_custom_call.1} parent=1 // loop_header
      %s19 = sphi 0, %s23
      %p20 = scmp.ge.s32.totalorder %s19, 4
      %s27 = sphi 0, %s27
      %s29 = sphi 0, %s27
      %s30 = sphi 0, %s29
      %s44 = sphi 0, %s30
      %s48 = sphi 0, %s48
      %s50 = sphi 0, %s48
      %s51 = sphi 0, %s50
      %s65 = sphi 0, %s51
      %s71 = sphi 0, %s73
      %s74 = sphi 0, %s71
      %s75 = sphi 0, %s74
      %s91 = sphi 0, %s75
      %s97 = sphi 0, %s99
      %s100 = sphi 0, %s97
      %s101 = sphi 0, %s100
      %s117 = sphi 0, %s101
      %s123 = sphi 0, %s125
      %s126 = sphi 0, %s123
      %s127 = sphi 0, %s126
      %s143 = sphi 0, %s127
      %s149 = sphi 0, %s151
      %s152 = sphi 0, %s149
      %s153 = sphi 0, %s152
      %s169 = sphi 0, %s153
      %s175 = sphi 0, %s177
      %s178 = sphi 0, %s175
      %s179 = sphi 0, %s178
      %s195 = sphi 0, %s179
      %s201 = sphi 0, %s203
      %s204 = sphi 0, %s201
      %s205 = sphi 0, %s204
      %s221 = sphi 0, %s205
      %s227 = sphi 0, %s229
      %s230 = sphi 0, %s227
      %s231 = sphi 0, %s230
      %s247 = sphi 0, %s231
      %s253 = sphi 0, %s255
      %s256 = sphi 0, %s253
      %s257 = sphi 0, %s256
      %s273 = sphi 0, %s257
    $region4: #{tpu_custom_call.1} parent=1 // loop_header_branch
      %22 = sbr.rel (%p20) target = $region8
    $region5: #{tpu_custom_call.1} parent=1 // loop_body
      %s24 = ssub.s32 %s19, 1
      %s25 = ssub.s32 %s19, 2
      %s26 = sadd.s32 %s19, 1
      %s28 = sadd.s32 %s27, 1
      %p31 = scmp.eq.s32.totalorder %s19, 1
      %p32 = scmp.ne.s32.totalorder %s27, %s29
      %p33 = scmp.eq.s32.totalorder %s19, 0
      %p34 = por %p32, %p33
      %p35 = scmp.ne.s32.totalorder %s27, %s29
      %p36 = scmp.eq.s32.totalorder %s24, 1
      %p37 = por %p35, %p36
      %p38 = scmp.ne.s32.totalorder %s29, %s30
      %p39 = scmp.eq.s32.totalorder %s24, 0
      %p40 = por %p38, %p39
      %p41 = scmp.ne.s32.totalorder %s29, %s30
      %p42 = scmp.eq.s32.totalorder %s25, 1
      %p43 = por %p41, %p42
      %p45 = scmp.ne.s32.totalorder %s30, %s44
      %p46 = scmp.eq.s32.totalorder %s25, 0
      %p47 = por %p45, %p46
      %s49 = sadd.s32 %s48, 1
      %p52 = scmp.eq.s32.totalorder %s19, 1
      %p53 = scmp.ne.s32.totalorder %s48, %s50
      %p54 = scmp.eq.s32.totalorder %s19, 0
      %p55 = por %p53, %p54
      %p56 = scmp.ne.s32.totalorder %s48, %s50
      %p57 = scmp.eq.s32.totalorder %s24, 1
      %p58 = por %p56, %p57
      %p59 = scmp.ne.s32.totalorder %s50, %s51
      %p60 = scmp.eq.s32.totalorder %s24, 0
      %p61 = por %p59, %p60
      %p62 = scmp.ne.s32.totalorder %s50, %s51
      %p63 = scmp.eq.s32.totalorder %s25, 1
      %p64 = por %p62, %p63
      %p66 = scmp.ne.s32.totalorder %s51, %s65
      %p67 = scmp.eq.s32.totalorder %s25, 0
      %p68 = por %p66, %p67
      %s69 = ssub.s32 %s19, %s26
      %p70 = scmp.eq.s32.totalorder %s69, 0
      %s72 = sadd.s32 %s71, 1
      %s73 = scalar_select %p70, %s71, %s72
      %p76 = pneg %p70
      %p77 = scmp.eq.s32.totalorder %s19, 1
      %p78 = por %p76, %p77
      %p79 = scmp.ne.s32.totalorder %s71, %s74
      %p80 = scmp.eq.s32.totalorder %s19, 0
      %p81 = por %p79, %p80
      %p82 = scmp.ne.s32.totalorder %s71, %s74
      %p83 = scmp.eq.s32.totalorder %s24, 1
      %p84 = por %p82, %p83
      %p85 = scmp.ne.s32.totalorder %s74, %s75
      %p86 = scmp.eq.s32.totalorder %s24, 0
      %p87 = por %p85, %p86
      %p88 = scmp.ne.s32.totalorder %s74, %s75
      %p89 = scmp.eq.s32.totalorder %s25, 1
      %p90 = por %p88, %p89
      %p92 = scmp.ne.s32.totalorder %s75, %s91
      %p93 = scmp.eq.s32.totalorder %s25, 0
      %p94 = por %p92, %p93
      %s95 = ssub.s32 %s19, %s26
      %p96 = scmp.eq.s32.totalorder %s95, 0
      %s98 = sadd.s32 %s97, 1
      %s99 = scalar_select %p96, %s97, %s98
      %p102 = pneg %p96
      %p103 = scmp.eq.s32.totalorder %s19, 1
      %p104 = por %p102, %p103
      %p105 = scmp.ne.s32.totalorder %s97, %s100
      %p106 = scmp.eq.s32.totalorder %s19, 0
      %p107 = por %p105, %p106
      %p108 = scmp.ne.s32.totalorder %s97, %s100
      %p109 = scmp.eq.s32.totalorder %s24, 1
      %p110 = por %p108, %p109
      %p111 = scmp.ne.s32.totalorder %s100, %s101
      %p112 = scmp.eq.s32.totalorder %s24, 0
      %p113 = por %p111, %p112
      %p114 = scmp.ne.s32.totalorder %s100, %s101
      %p115 = scmp.eq.s32.totalorder %s25, 1
      %p116 = por %p114, %p115
      %p118 = scmp.ne.s32.totalorder %s101, %s117
      %p119 = scmp.eq.s32.totalorder %s25, 0
      %p120 = por %p118, %p119
      %s121 = ssub.s32 %s19, %s26
      %p122 = scmp.eq.s32.totalorder %s121, 0
      %s124 = sadd.s32 %s123, 1
      %s125 = scalar_select %p122, %s123, %s124
      %p128 = pneg %p122
      %p129 = scmp.eq.s32.totalorder %s19, 1
      %p130 = por %p128, %p129
      %p131 = scmp.ne.s32.totalorder %s123, %s126
      %p132 = scmp.eq.s32.totalorder %s19, 0
      %p133 = por %p131, %p132
      %p134 = scmp.ne.s32.totalorder %s123, %s126
      %p135 = scmp.eq.s32.totalorder %s24, 1
      %p136 = por %p134, %p135
      %p137 = scmp.ne.s32.totalorder %s126, %s127
      %p138 = scmp.eq.s32.totalorder %s24, 0
      %p139 = por %p137, %p138
      %p140 = scmp.ne.s32.totalorder %s126, %s127
      %p141 = scmp.eq.s32.totalorder %s25, 1
      %p142 = por %p140, %p141
      %p144 = scmp.ne.s32.totalorder %s127, %s143
      %p145 = scmp.eq.s32.totalorder %s25, 0
      %p146 = por %p144, %p145
      %s147 = ssub.s32 %s19, %s26
      %p148 = scmp.eq.s32.totalorder %s147, 0
      %s150 = sadd.s32 %s149, 1
      %s151 = scalar_select %p148, %s149, %s150
      %p154 = pneg %p148
      %p155 = scmp.eq.s32.totalorder %s19, 1
      %p156 = por %p154, %p155
      %p157 = scmp.ne.s32.totalorder %s149, %s152
      %p158 = scmp.eq.s32.totalorder %s19, 0
      %p159 = por %p157, %p158
      %p160 = scmp.ne.s32.totalorder %s149, %s152
      %p161 = scmp.eq.s32.totalorder %s24, 1
      %p162 = por %p160, %p161
      %p163 = scmp.ne.s32.totalorder %s152, %s153
      %p164 = scmp.eq.s32.totalorder %s24, 0
      %p165 = por %p163, %p164
      %p166 = scmp.ne.s32.totalorder %s152, %s153
      %p167 = scmp.eq.s32.totalorder %s25, 1
      %p168 = por %p166, %p167
      %p170 = scmp.ne.s32.totalorder %s153, %s169
      %p171 = scmp.eq.s32.totalorder %s25, 0
      %p172 = por %p170, %p171
      %s173 = ssub.s32 %s19, %s26
      %p174 = scmp.eq.s32.totalorder %s173, 0
      %s176 = sadd.s32 %s175, 1
      %s177 = scalar_select %p174, %s175, %s176
      %p180 = pneg %p174
      %p181 = scmp.eq.s32.totalorder %s19, 1
      %p182 = por %p180, %p181
      %p183 = scmp.ne.s32.totalorder %s175, %s178
      %p184 = scmp.eq.s32.totalorder %s19, 0
      %p185 = por %p183, %p184
      %p186 = scmp.ne.s32.totalorder %s175, %s178
      %p187 = scmp.eq.s32.totalorder %s24, 1
      %p188 = por %p186, %p187
      %p189 = scmp.ne.s32.totalorder %s178, %s179
      %p190 = scmp.eq.s32.totalorder %s24, 0
      %p191 = por %p189, %p190
      %p192 = scmp.ne.s32.totalorder %s178, %s179
      %p193 = scmp.eq.s32.totalorder %s25, 1
      %p194 = por %p192, %p193
      %p196 = scmp.ne.s32.totalorder %s179, %s195
      %p197 = scmp.eq.s32.totalorder %s25, 0
      %p198 = por %p196, %p197
      %s199 = ssub.s32 %s19, %s26
      %p200 = scmp.eq.s32.totalorder %s199, 0
      %s202 = sadd.s32 %s201, 1
      %s203 = scalar_select %p200, %s201, %s202
      %p206 = pneg %p200
      %p207 = scmp.eq.s32.totalorder %s19, 1
      %p208 = por %p206, %p207
      %p209 = scmp.ne.s32.totalorder %s201, %s204
      %p210 = scmp.eq.s32.totalorder %s19, 0
      %p211 = por %p209, %p210
      %p212 = scmp.ne.s32.totalorder %s201, %s204
      %p213 = scmp.eq.s32.totalorder %s24, 1
      %p214 = por %p212, %p213
      %p215 = scmp.ne.s32.totalorder %s204, %s205
      %p216 = scmp.eq.s32.totalorder %s24, 0
      %p217 = por %p215, %p216
      %p218 = scmp.ne.s32.totalorder %s204, %s205
      %p219 = scmp.eq.s32.totalorder %s25, 1
      %p220 = por %p218, %p219
      %p222 = scmp.ne.s32.totalorder %s205, %s221
      %p223 = scmp.eq.s32.totalorder %s25, 0
      %p224 = por %p222, %p223
      %s225 = ssub.s32 %s19, %s26
      %p226 = scmp.eq.s32.totalorder %s225, 0
      %s228 = sadd.s32 %s227, 1
      %s229 = scalar_select %p226, %s227, %s228
      %p232 = pneg %p226
      %p233 = scmp.eq.s32.totalorder %s19, 1
      %p234 = por %p232, %p233
      %p235 = scmp.ne.s32.totalorder %s227, %s230
      %p236 = scmp.eq.s32.totalorder %s19, 0
      %p237 = por %p235, %p236
      %p238 = scmp.ne.s32.totalorder %s227, %s230
      %p239 = scmp.eq.s32.totalorder %s24, 1
      %p240 = por %p238, %p239
      %p241 = scmp.ne.s32.totalorder %s230, %s231
      %p242 = scmp.eq.s32.totalorder %s24, 0
      %p243 = por %p241, %p242
      %p244 = scmp.ne.s32.totalorder %s230, %s231
      %p245 = scmp.eq.s32.totalorder %s25, 1
      %p246 = por %p244, %p245
      %p248 = scmp.ne.s32.totalorder %s231, %s247
      %p249 = scmp.eq.s32.totalorder %s25, 0
      %p250 = por %p248, %p249
      %s251 = ssub.s32 %s19, %s26
      %p252 = scmp.eq.s32.totalorder %s251, 0
      %s254 = sadd.s32 %s253, 1
      %s255 = scalar_select %p252, %s253, %s254
      %p258 = pneg %p252
      %p259 = scmp.eq.s32.totalorder %s19, 1
      %p260 = por %p258, %p259
      %p261 = scmp.ne.s32.totalorder %s253, %s256
      %p262 = scmp.eq.s32.totalorder %s19, 0
      %p263 = por %p261, %p262
      %p264 = scmp.ne.s32.totalorder %s253, %s256
      %p265 = scmp.eq.s32.totalorder %s24, 1
      %p266 = por %p264, %p265
      %p267 = scmp.ne.s32.totalorder %s256, %s257
      %p268 = scmp.eq.s32.totalorder %s24, 0
      %p269 = por %p267, %p268
      %p270 = scmp.ne.s32.totalorder %s256, %s257
      %p271 = scmp.eq.s32.totalorder %s25, 1
      %p272 = por %p270, %p271
      %p274 = scmp.ne.s32.totalorder %s257, %s273
      %p275 = scmp.eq.s32.totalorder %s25, 0
      %p276 = por %p274, %p275
      %p277 = scmp.le.s32.totalorder 1, %s19
      %p278 = scmp.lt.s32.totalorder %s19, 3
      %p279 = pnand %p277, %p278
      %p280 = pneg %p279
      // Predicated region
      $region9: #{tpu_custom_call.1} parent=5 // pred_check
        _
      $region10: #{tpu_custom_call.1} parent=5 // pred_check_branch
        %282 = sbr.rel (%p279) target = $region12
      $region11: #{tpu_custom_call.1} parent=5 // pred_region
        %s283 = ssub.s32 %s19, 1
        // Predicated region
        $region13: #{tpu_custom_call.1} parent=11 // pred_check
          %p284 = pneg %p40
        $region14: #{tpu_custom_call.1} parent=11 // pred_check_branch
          %286 = sbr.rel (%p284) target = $region16
        $region15: #{tpu_custom_call.1} parent=11 // pred_region
          %s288 = ssub.s32 16, 16
          %289 = vsyncadd [#allocation4], %s288
          %292 = dma.hbm_to_smem %s0, 16, [#allocation2], [#allocation4]
        $region16: #{tpu_custom_call.1} parent=11 // pred_fallthru
          _
        // Predicated region
        $region17: #{tpu_custom_call.1} parent=11 // pred_check
          %p293 = pneg %p61
        $region18: #{tpu_custom_call.1} parent=11 // pred_check_branch
          %295 = sbr.rel (%p293) target = $region20
        $region19: #{tpu_custom_call.1} parent=11 // pred_region
          _
        $region20: #{tpu_custom_call.1} parent=11 // pred_fallthru
          _
      $region12: #{tpu_custom_call.1} parent=5 // pred_fallthru
        _
      %p296 = scmp.lt.s32.totalorder %s19, 2
      // Predicated region
      $region21: #{tpu_custom_call.1} parent=5 // pred_check
        %p297 = pneg %p296
      $region22: #{tpu_custom_call.1} parent=5 // pred_check_branch
        %299 = sbr.rel (%p297) target = $region24
      $region23: #{tpu_custom_call.1} parent=5 // pred_region
        // Predicated region
        $region25: #{tpu_custom_call.1} parent=23 // pred_check
          %p300 = pneg %p81
        $region26: #{tpu_custom_call.1} parent=23 // pred_check_branch
          %302 = sbr.rel (%p300) target = $region28
        $region27: #{tpu_custom_call.1} parent=23 // pred_region
          %p303 = scmp.lt.s32.totalorder %s19, 1
          %s304 = scalar_select %p303, %s19, 1
          %s305 = scalar_lea.vmem %s2, %s304
        $region28: #{tpu_custom_call.1} parent=23 // pred_fallthru
          _
        // Predicated region
        $region29: #{tpu_custom_call.1} parent=23 // pred_check
          %p306 = pneg %p107
        $region30: #{tpu_custom_call.1} parent=23 // pred_check_branch
          %308 = sbr.rel (%p306) target = $region32
        $region31: #{tpu_custom_call.1} parent=23 // pred_region
          %p309 = scmp.lt.s32.totalorder %s19, 1
          %s310 = scalar_select %p309, %s19, 1
          %s311 = scalar_lea.vmem %s3, %s310
        $region32: #{tpu_custom_call.1} parent=23 // pred_fallthru
          _
        // Predicated region
        $region33: #{tpu_custom_call.1} parent=23 // pred_check
          %p312 = pneg %p133
        $region34: #{tpu_custom_call.1} parent=23 // pred_check_branch
          %314 = sbr.rel (%p312) target = $region36
        $region35: #{tpu_custom_call.1} parent=23 // pred_region
          %p315 = scmp.lt.s32.totalorder %s19, 1
          %s316 = scalar_select %p315, %s19, 1
          %s317 = scalar_lea.vmem %s4, %s316
        $region36: #{tpu_custom_call.1} parent=23 // pred_fallthru
          _
        // Predicated region
        $region37: #{tpu_custom_call.1} parent=23 // pred_check
          %p318 = pneg %p159
        $region38: #{tpu_custom_call.1} parent=23 // pred_check_branch
          %320 = sbr.rel (%p318) target = $region40
        $region39: #{tpu_custom_call.1} parent=23 // pred_region
          %p321 = scmp.lt.s32.totalorder %s19, 1
          %s322 = scalar_select %p321, %s19, 1
          %s323 = scalar_lea.vmem %s5, %s322
        $region40: #{tpu_custom_call.1} parent=23 // pred_fallthru
          _
        // Predicated region
        $region41: #{tpu_custom_call.1} parent=23 // pred_check
          %p324 = pneg %p185
        $region42: #{tpu_custom_call.1} parent=23 // pred_check_branch
          %326 = sbr.rel (%p324) target = $region44
        $region43: #{tpu_custom_call.1} parent=23 // pred_region
          %p327 = scmp.lt.s32.totalorder %s19, 1
          %s328 = scalar_select %p327, %s19, 1
          %s329 = scalar_lea.vmem %s6, %s328
        $region44: #{tpu_custom_call.1} parent=23 // pred_fallthru
          _
        // Predicated region
        $region45: #{tpu_custom_call.1} parent=23 // pred_check
          %p330 = pneg %p211
        $region46: #{tpu_custom_call.1} parent=23 // pred_check_branch
          %332 = sbr.rel (%p330) target = $region48
        $region47: #{tpu_custom_call.1} parent=23 // pred_region
          %s333 = sand.u32 %s201, 1
          %s334 = sand.u32 %s201, 1
          %s335 = smul.addr %s334, 2
          %s336 = scalar_lea.vmem [#allocation5], %s335
          %s337 = scalar_lea.vmem %s7, %s19
          // Predicated region
          $region49: #{tpu_custom_call.1} parent=47 // pred_check
            _
          $region50: #{tpu_custom_call.1} parent=47 // pred_check_branch
            %339 = sbr.rel (0) target = $region52
          $region51: #{tpu_custom_call.1} parent=47 // pred_region
            // Predicated region
            $region53: #{tpu_custom_call.1} parent=51 // pred_check
              _
            $region54: #{tpu_custom_call.1} parent=51 // pred_check_branch
              %341 = sbr.rel target = $region56
            $region55: #{tpu_custom_call.1} parent=51 // pred_region
              // Predicated region
              $region68: #{tpu_custom_call.1} parent=55 // pred_check
                _
              $region69: #{tpu_custom_call.1} parent=55 // pred_check_branch
                %358 = sbr.rel (0) target = $region71
              $region70: #{tpu_custom_call.1} parent=55 // pred_region
                loop: start=0, step=1, limit=1
                $region72: #{tpu_custom_call.1} parent=70 // loop_pre_header
                  _
                $region73: #{tpu_custom_call.1} parent=70 // loop_header
                  %s361 = sphi 0, %s365
                  %p362 = scmp.ge.s32.totalorder %s361, 1
                  %s366 = sphi %s337, %s337
                  %s367 = sphi %s336, %s336
                $region74: #{tpu_custom_call.1} parent=70 // loop_header_branch
                  %364 = sbr.rel (%p362) target = $region78
                $region75: #{tpu_custom_call.1} parent=70 // loop_body
                  %v368 = vld [vmem:[%s366] sm:$0x1]
                  %369 = vst [vmem:[%s367] sm:$0x1] %v368
                  %v370 = vld [vmem:[%s366 + $0x2] sm:$0x1]
                  %371 = vst [vmem:[%s367 + $0x1] sm:$0x1] %v370
                $region76: #{tpu_custom_call.1} parent=70 // loop_footer
                  %s365 = sadd.s32 1, %s361
                $region77: #{tpu_custom_call.1} parent=70 // loop_footer_branch
                  %360 = sbr.rel target = $region73
                $region78: #{tpu_custom_call.1} parent=70 // loop_exit
                  _
              $region71: #{tpu_custom_call.1} parent=55 // pred_fallthru
                _
            $region56: #{tpu_custom_call.1} parent=51 // pred_fallthru
              _
            // Predicated region
            $region57: #{tpu_custom_call.1} parent=51 // pred_check
              _
            $region58: #{tpu_custom_call.1} parent=51 // pred_check_branch
              %343 = sbr.rel (0) target = $region60
            $region59: #{tpu_custom_call.1} parent=51 // pred_region
              loop: start=0, step=1, limit=1
              $region61: #{tpu_custom_call.1} parent=59 // loop_pre_header
                _
              $region62: #{tpu_custom_call.1} parent=59 // loop_header
                %s346 = sphi 0, %s350
                %p347 = scmp.ge.s32.totalorder %s346, 1
                %s351 = sphi %s337, %s337
                %s352 = sphi %s336, %s336
              $region63: #{tpu_custom_call.1} parent=59 // loop_header_branch
                %349 = sbr.rel (%p347) target = $region67
              $region64: #{tpu_custom_call.1} parent=59 // loop_body
                %v353 = vld [vmem:[%s351] sm:$0x1]
                %354 = vst [vmem:[%s352] sm:$0x1] %v353
                %v355 = vld [vmem:[%s351 + $0x2] sm:$0x1]
                %356 = vst [vmem:[%s352 + $0x1] sm:$0x1] %v355
              $region65: #{tpu_custom_call.1} parent=59 // loop_footer
                %s350 = sadd.s32 1, %s346
              $region66: #{tpu_custom_call.1} parent=59 // loop_footer_branch
                %345 = sbr.rel target = $region62
              $region67: #{tpu_custom_call.1} parent=59 // loop_exit
                _
            $region60: #{tpu_custom_call.1} parent=51 // pred_fallthru
              _
          $region52: #{tpu_custom_call.1} parent=47 // pred_fallthru
            _
          %372 = vnop
        $region48: #{tpu_custom_call.1} parent=23 // pred_fallthru
          _
        // Predicated region
        $region79: #{tpu_custom_call.1} parent=23 // pred_check
          %p373 = pneg %p237
        $region80: #{tpu_custom_call.1} parent=23 // pred_check_branch
          %375 = sbr.rel (%p373) target = $region82
        $region81: #{tpu_custom_call.1} parent=23 // pred_region
          %s376 = sand.u32 %s227, 1
          %s377 = sand.u32 %s227, 1
          %s378 = smul.addr %s377, 2
          %s379 = scalar_lea.vmem [#allocation6], %s378
          %s380 = scalar_lea.vmem %s8, %s19
          // Predicated region
          $region83: #{tpu_custom_call.1} parent=81 // pred_check
            _
          $region84: #{tpu_custom_call.1} parent=81 // pred_check_branch
            %382 = sbr.rel (0) target = $region86
          $region85: #{tpu_custom_call.1} parent=81 // pred_region
            // Predicated region
            $region87: #{tpu_custom_call.1} parent=85 // pred_check
              _
            $region88: #{tpu_custom_call.1} parent=85 // pred_check_branch
              %384 = sbr.rel target = $region90
            $region89: #{tpu_custom_call.1} parent=85 // pred_region
              // Predicated region
              $region102: #{tpu_custom_call.1} parent=89 // pred_check
                _
              $region103: #{tpu_custom_call.1} parent=89 // pred_check_branch
                %401 = sbr.rel (0) target = $region105
              $region104: #{tpu_custom_call.1} parent=89 // pred_region
                loop: start=0, step=1, limit=1
                $region106: #{tpu_custom_call.1} parent=104 // loop_pre_header
                  _
                $region107: #{tpu_custom_call.1} parent=104 // loop_header
                  %s404 = sphi 0, %s408
                  %p405 = scmp.ge.s32.totalorder %s404, 1
                  %s409 = sphi %s380, %s380
                  %s410 = sphi %s379, %s379
                $region108: #{tpu_custom_call.1} parent=104 // loop_header_branch
                  %407 = sbr.rel (%p405) target = $region112
                $region109: #{tpu_custom_call.1} parent=104 // loop_body
                  %v411 = vld [vmem:[%s409] sm:$0x1]
                  %412 = vst [vmem:[%s410] sm:$0x1] %v411
                  %v413 = vld [vmem:[%s409 + $0x2] sm:$0x1]
                  %414 = vst [vmem:[%s410 + $0x1] sm:$0x1] %v413
                $region110: #{tpu_custom_call.1} parent=104 // loop_footer
                  %s408 = sadd.s32 1, %s404
                $region111: #{tpu_custom_call.1} parent=104 // loop_footer_branch
                  %403 = sbr.rel target = $region107
                $region112: #{tpu_custom_call.1} parent=104 // loop_exit
                  _
              $region105: #{tpu_custom_call.1} parent=89 // pred_fallthru
                _
            $region90: #{tpu_custom_call.1} parent=85 // pred_fallthru
              _
            // Predicated region
            $region91: #{tpu_custom_call.1} parent=85 // pred_check
              _
            $region92: #{tpu_custom_call.1} parent=85 // pred_check_branch
              %386 = sbr.rel (0) target = $region94
            $region93: #{tpu_custom_call.1} parent=85 // pred_region
              loop: start=0, step=1, limit=1
              $region95: #{tpu_custom_call.1} parent=93 // loop_pre_header
                _
              $region96: #{tpu_custom_call.1} parent=93 // loop_header
                %s389 = sphi 0, %s393
                %p390 = scmp.ge.s32.totalorder %s389, 1
                %s394 = sphi %s380, %s380
                %s395 = sphi %s379, %s379
              $region97: #{tpu_custom_call.1} parent=93 // loop_header_branch
                %392 = sbr.rel (%p390) target = $region101
              $region98: #{tpu_custom_call.1} parent=93 // loop_body
                %v396 = vld [vmem:[%s394] sm:$0x1]
                %397 = vst [vmem:[%s395] sm:$0x1] %v396
                %v398 = vld [vmem:[%s394 + $0x2] sm:$0x1]
                %399 = vst [vmem:[%s395 + $0x1] sm:$0x1] %v398
              $region99: #{tpu_custom_call.1} parent=93 // loop_footer
                %s393 = sadd.s32 1, %s389
              $region100: #{tpu_custom_call.1} parent=93 // loop_footer_branch
                %388 = sbr.rel target = $region96
              $region101: #{tpu_custom_call.1} parent=93 // loop_exit
                _
            $region94: #{tpu_custom_call.1} parent=85 // pred_fallthru
              _
          $region86: #{tpu_custom_call.1} parent=81 // pred_fallthru
            _
          %415 = vnop
        $region82: #{tpu_custom_call.1} parent=23 // pred_fallthru
          _
      $region24: #{tpu_custom_call.1} parent=5 // pred_fallthru
        _
      %p416 = scmp.le.s32.totalorder 1, %s19
      %p417 = scmp.lt.s32.totalorder %s19, 3
      %p418 = pnand %p416, %p417
      %p419 = pneg %p418
      // Predicated region
      $region113: #{tpu_custom_call.1} parent=5 // pred_check
        _
      $region114: #{tpu_custom_call.1} parent=5 // pred_check_branch
        %421 = sbr.rel (%p418) target = $region116
      $region115: #{tpu_custom_call.1} parent=5 // pred_region
        %s422 = ssub.s32 %s19, 1
        // Predicated region
        $region117: #{tpu_custom_call.1} parent=115 // pred_check
          %p423 = pneg %p40
        $region118: #{tpu_custom_call.1} parent=115 // pred_check_branch
          %425 = sbr.rel (%p423) target = $region120
        $region119: #{tpu_custom_call.1} parent=115 // pred_region
          %426 = dma.done [#allocation4], 16
        $region120: #{tpu_custom_call.1} parent=115 // pred_fallthru
          _
        %s427 = sand.u32 %s204, 1
        %s428 = sand.u32 %s204, 1
        %s429 = smul.addr %s428, 2
        %s430 = scalar_lea.vmem [#allocation5], %s429
        // Predicated region
        $region121: #{tpu_custom_call.1} parent=115 // pred_check
          %p431 = pneg %p217
        $region122: #{tpu_custom_call.1} parent=115 // pred_check_branch
          %433 = sbr.rel (%p431) target = $region124
        $region123: #{tpu_custom_call.1} parent=115 // pred_region
          _
        $region124: #{tpu_custom_call.1} parent=115 // pred_fallthru
          _
        %s434 = sand.u32 %s230, 1
        %s435 = sand.u32 %s230, 1
        %s436 = smul.addr %s435, 2
        %s437 = scalar_lea.vmem [#allocation6], %s436
        // Predicated region
        $region125: #{tpu_custom_call.1} parent=115 // pred_check
          %p438 = pneg %p243
        $region126: #{tpu_custom_call.1} parent=115 // pred_check_branch
          %440 = sbr.rel (%p438) target = $region128
        $region127: #{tpu_custom_call.1} parent=115 // pred_region
          _
        $region128: #{tpu_custom_call.1} parent=115 // pred_fallthru
          _
        %441 = sfence
        %p442 = pneg %p40
        %p443 = pneg %p37
        %p444 = pneg %p61
        %p445 = pneg %p58
        %p446 = scmp.lt.s32.totalorder %s24, 1
        %s447 = scalar_select %p446, %s24, 1
        %s448 = scalar_lea.vmem %s2, %s447
        %p449 = pneg %p87
        %p450 = pneg %p84
        %p451 = scmp.lt.s32.totalorder %s24, 1
        %s452 = scalar_select %p451, %s24, 1
        %s453 = scalar_lea.vmem %s3, %s452
        %p454 = pneg %p113
        %p455 = pneg %p110
        %p456 = scmp.lt.s32.totalorder %s24, 1
        %s457 = scalar_select %p456, %s24, 1
        %s458 = scalar_lea.vmem %s4, %s457
        %p459 = pneg %p139
        %p460 = pneg %p136
        %p461 = scmp.lt.s32.totalorder %s24, 1
        %s462 = scalar_select %p461, %s24, 1
        %s463 = scalar_lea.vmem %s5, %s462
        %p464 = pneg %p165
        %p465 = pneg %p162
        %p466 = scmp.lt.s32.totalorder %s24, 1
        %s467 = scalar_select %p466, %s24, 1
        %s468 = scalar_lea.vmem %s6, %s467
        %p469 = pneg %p191
        %p470 = pneg %p188
        %s471 = sand.u32 %s204, 1
        %s472 = sand.u32 %s204, 1
        %s473 = smul.addr %s472, 2
        %s474 = scalar_lea.vmem [#allocation5], %s473
        %p475 = pneg %p217
        %p476 = pneg %p214
        %s477 = sand.u32 %s230, 1
        %s478 = sand.u32 %s230, 1
        %s479 = smul.addr %s478, 2
        %s480 = scalar_lea.vmem [#allocation6], %s479
        %p481 = pneg %p243
        %p482 = pneg %p240
        %p483 = pneg %p269
        %p484 = pneg %p266
        %s485 = sand.u32 %s256, 1
        %s486 = scalar_lea.sflag [#allocation3], %s485
        %s487 = sand.u32 %s256, 1
        %s488 = smul.addr %s487, 128
        %s489 = scalar_lea.vmem [#allocation7], %s488
        %p490 = scmp.lt.s32.totalorder %s24, 1
        %s491 = scalar_select %p490, %s24, 1
        %s492 = scalar_lea.vmem %s2, %s491
        %p493 = scmp.lt.s32.totalorder %s24, 1
        %s494 = scalar_select %p493, %s24, 1
        %s495 = scalar_lea.vmem %s3, %s494
        %p496 = scmp.lt.s32.totalorder %s24, 1
        %s497 = scalar_select %p496, %s24, 1
        %s498 = scalar_lea.vmem %s4, %s497
        %p499 = scmp.lt.s32.totalorder %s24, 1
        %s500 = scalar_select %p499, %s24, 1
        %s501 = scalar_lea.vmem %s5, %s500
        %p502 = scmp.lt.s32.totalorder %s24, 1
        %s503 = scalar_select %p502, %s24, 1
        %s504 = scalar_lea.vmem %s6, %s503
        %v505 = vld [vmem:[%s1] sm:$0xff]
        %v506 = vld [vmem:[%s492] sm:$0x1]
        %v507 = vrcp.pop %v506
        %v508 = vmul.f32 %v506, %v507
        %v509 = vsub.f32 2.0, %v508
        %v510 = vmul.f32 %v507, %v509
        %v511 = vld [vmem:[%s495] sm:$0x1]
        %v512 = vld [vmem:[%s498] sm:$0x1]
        %v513 = vld [vmem:[%s501] sm:$0x1]
        %v514 = vld [vmem:[%s504] sm:$0x1]
        %v516 = vlaneseq
        %v517 = vshrl.u32 %v516, 7
        %v518 = vsub.s32 0, %v517
        %v519 = vrot.slane %v511, %v518
        %522 = vset.pattern.permute.xlu0 0
        %523 = vperm.xlu0 %522, %v505
        %v524 = vpop.permute.xlu0 %523
        %v526 = vmul.f32 %v519, %v524
        %v528 = vlaneseq
        %v529 = vshrl.u32 %v528, 7
        %v530 = vsub.s32 0, %v529
        %v531 = vrot.slane %v512, %v530
        %v533 = vmul.f32 %v531, %v524
        %v534 = vmul.f32 %v526, %v526
        %v535 = vmul.f32 %v533, %v533
        %v536 = vsub.f32 %v534, %v535
        %v537 = vmul.f32 %v526, %v533
        %v538 = vadd.f32 %v537, %v537
        %v539 = vsub.f32 1.0, %v536
        %v540 = vsub.f32 0.0, %v538
        %v541 = vmul.f32 %v539, %v539
        %v542 = vmul.f32 %v540, %v540
        %v543 = vadd.f32 %v541, %v542
        %v544 = vrsqrt.pop %v543
        %v545 = vmul.f32 %v543, %v544
        %vm546 = vcmp.eq.f32.partialorder %v543, inf
        %v547 = vsel %vm546, %v543, %v545
        %vm548 = vcmp.eq.f32.partialorder %v543, 0.0
        %v549 = vand.u32 %v543, 2147483648
        %v550 = vsel %vm548, %v549, %v547
        %v551 = vadd.f32 %v550, %v539
        %v552 = vmul.f32 %v551, 0.5
        %v553 = vmax.f32 %v552, 0.0
        %v554 = vrsqrt.pop %v553
        %v555 = vmul.f32 %v553, %v554
        %vm556 = vcmp.eq.f32.partialorder %v553, inf
        %v557 = vsel %vm556, %v553, %v555
        %vm558 = vcmp.eq.f32.partialorder %v553, 0.0
        %v559 = vand.u32 %v553, 2147483648
        %v560 = vsel %vm558, %v559, %v557
        %v561 = vsub.f32 %v550, %v539
        %v562 = vmul.f32 %v561, 0.5
        %v563 = vmax.f32 %v562, 0.0
        %v564 = vrsqrt.pop %v563
        %v565 = vmul.f32 %v563, %v564
        %vm566 = vcmp.eq.f32.partialorder %v563, inf
        %v567 = vsel %vm566, %v563, %v565
        %vm568 = vcmp.eq.f32.partialorder %v563, 0.0
        %v569 = vand.u32 %v563, 2147483648
        %v570 = vsel %vm568, %v569, %v567
        %vm571 = vcmp.lt.f32.partialorder %v540, 0.0
        %v572 = vsub.f32 0.0, %v570
        %v573 = vsel %vm571, %v572, %v570
        %v574 = vmul.f32 %v511, %v511
        %v575 = vmul.f32 %v512, %v512
        %v576 = vsub.f32 %v574, %v575
        %v577 = vmul.f32 %v511, %v512
        %v578 = vadd.f32 %v577, %v577
        %v579 = vmul.f32 %v513, %v513
        %v580 = vmul.f32 %v514, %v514
        %v581 = vsub.f32 %v579, %v580
        %v582 = vmul.f32 %v513, %v514
        %v583 = vadd.f32 %v582, %v582
        %v585 = vlaneseq
        %v586 = vshrl.u32 %v585, 7
        %v587 = vsub.s32 0, %v586
        %v588 = vrot.slane %v576, %v587
        %v590 = vsub.f32 %v588, %v536
        %v592 = vlaneseq
        %v593 = vshrl.u32 %v592, 7
        %v594 = vsub.s32 0, %v593
        %v595 = vrot.slane %v578, %v594
        %v597 = vsub.f32 %v595, %v538
        %v598 = vmul.f32 %v590, %v590
        %v599 = vmul.f32 %v597, %v597
        %v600 = vadd.f32 %v598, %v599
        %v601 = vrsqrt.pop %v600
        %v602 = vmul.f32 %v600, %v601
        %vm603 = vcmp.eq.f32.partialorder %v600, inf
        %v604 = vsel %vm603, %v600, %v602
        %vm605 = vcmp.eq.f32.partialorder %v600, 0.0
        %v606 = vand.u32 %v600, 2147483648
        %v607 = vsel %vm605, %v606, %v604
        %v608 = vadd.f32 %v607, %v590
        %v609 = vmul.f32 %v608, 0.5
        %v610 = vmax.f32 %v609, 0.0
        %v611 = vrsqrt.pop %v610
        %v612 = vmul.f32 %v610, %v611
        %vm613 = vcmp.eq.f32.partialorder %v610, inf
        %v614 = vsel %vm613, %v610, %v612
        %vm615 = vcmp.eq.f32.partialorder %v610, 0.0
        %v616 = vand.u32 %v610, 2147483648
        %v617 = vsel %vm615, %v616, %v614
        %v618 = vsub.f32 %v607, %v590
        %v619 = vmul.f32 %v618, 0.5
        %v620 = vmax.f32 %v619, 0.0
        %v621 = vrsqrt.pop %v620
        %v622 = vmul.f32 %v620, %v621
        %vm623 = vcmp.eq.f32.partialorder %v620, inf
        %v624 = vsel %vm623, %v620, %v622
        %vm625 = vcmp.eq.f32.partialorder %v620, 0.0
        %v626 = vand.u32 %v620, 2147483648
        %v627 = vsel %vm625, %v626, %v624
        %vm628 = vcmp.lt.f32.partialorder %v597, 0.0
        %v629 = vsub.f32 0.0, %v627
        %v630 = vsel %vm628, %v629, %v627
        %v632 = vlaneseq
        %v633 = vshrl.u32 %v632, 7
        %v634 = vsub.s32 0, %v633
        %v635 = vrot.slane %v581, %v634
        %v637 = vsub.f32 %v635, %v536
        %v639 = vlaneseq
        %v640 = vshrl.u32 %v639, 7
        %v641 = vsub.s32 0, %v640
        %v642 = vrot.slane %v583, %v641
        %v644 = vsub.f32 %v642, %v538
        %v645 = vmul.f32 %v637, %v637
        %v646 = vmul.f32 %v644, %v644
        %v647 = vadd.f32 %v645, %v646
        %v648 = vrsqrt.pop %v647
        %v649 = vmul.f32 %v647, %v648
        %vm650 = vcmp.eq.f32.partialorder %v647, inf
        %v651 = vsel %vm650, %v647, %v649
        %vm652 = vcmp.eq.f32.partialorder %v647, 0.0
        %v653 = vand.u32 %v647, 2147483648
        %v654 = vsel %vm652, %v653, %v651
        %v655 = vadd.f32 %v654, %v637
        %v656 = vmul.f32 %v655, 0.5
        %v657 = vmax.f32 %v656, 0.0
        %v658 = vrsqrt.pop %v657
        %v659 = vmul.f32 %v657, %v658
        %vm660 = vcmp.eq.f32.partialorder %v657, inf
        %v661 = vsel %vm660, %v657, %v659
        %vm662 = vcmp.eq.f32.partialorder %v657, 0.0
        %v663 = vand.u32 %v657, 2147483648
        %v664 = vsel %vm662, %v663, %v661
        %v665 = vsub.f32 %v654, %v637
        %v666 = vmul.f32 %v665, 0.5
        %v667 = vmax.f32 %v666, 0.0
        %v668 = vrsqrt.pop %v667
        %v669 = vmul.f32 %v667, %v668
        %vm670 = vcmp.eq.f32.partialorder %v667, inf
        %v671 = vsel %vm670, %v667, %v669
        %vm672 = vcmp.eq.f32.partialorder %v667, 0.0
        %v673 = vand.u32 %v667, 2147483648
        %v674 = vsel %vm672, %v673, %v671
        %vm675 = vcmp.lt.f32.partialorder %v644, 0.0
        %v676 = vsub.f32 0.0, %v674
        %v677 = vsel %vm675, %v676, %v674
        %v678 = vmul.f32 %v560, 2.0
        %v679 = vmul.f32 %v573, 2.0
        %v680 = vmul.f32 %v678, %v678
        %v681 = vmul.f32 %v679, %v679
        %v682 = vadd.f32 %v680, %v681
        %v683 = vrcp.pop %v682
        %v684 = vmul.f32 %v682, %v683
        %v685 = vsub.f32 2.0, %v684
        %v686 = vmul.f32 %v683, %v685
        %v687 = vmul.f32 %v678, %v686
        %v688 = vsub.f32 0.0, %v679
        %v689 = vmul.f32 %v688, %v686
        %v690 = vmul.f32 %v617, 2.0
        %v691 = vmul.f32 %v630, 2.0
        %v692 = vmul.f32 %v690, %v690
        %v693 = vmul.f32 %v691, %v691
        %v694 = vadd.f32 %v692, %v693
        %v695 = vrcp.pop %v694
        %v696 = vmul.f32 %v694, %v695
        %v697 = vsub.f32 2.0, %v696
        %v698 = vmul.f32 %v695, %v697
        %v699 = vmul.f32 %v690, %v698
        %v700 = vsub.f32 0.0, %v691
        %v701 = vmul.f32 %v700, %v698
        %v702 = vadd.f32 %v574, %v575
        %v703 = vrcp.pop %v702
        %v704 = vmul.f32 %v702, %v703
        %v705 = vsub.f32 2.0, %v704
        %v706 = vmul.f32 %v703, %v705
        %v707 = vmul.f32 %v511, %v706
        %v708 = vsub.f32 0.0, %v512
        %v709 = vmul.f32 %v708, %v706
        %v710 = vadd.f32 %v579, %v580
        %v711 = vrcp.pop %v710
        %v712 = vmul.f32 %v710, %v711
        %v713 = vsub.f32 2.0, %v712
        %v714 = vmul.f32 %v711, %v713
        %v715 = vmul.f32 %v513, %v714
        %v716 = vsub.f32 0.0, %v514
        %v717 = vmul.f32 %v716, %v714
        %v718 = vadd.f32 %v617, %v560
        %v719 = vadd.f32 %v630, %v573
        %v720 = vmul.f32 %v718, %v699
        %v721 = vmul.f32 %v719, %v701
        %v722 = vsub.f32 %v720, %v721
        %v723 = vmul.f32 %v718, %v701
        %v724 = vmul.f32 %v719, %v699
        %v725 = vadd.f32 %v723, %v724
        %v726 = vsub.f32 %v617, %v560
        %v727 = vsub.f32 %v630, %v573
        %v728 = vmul.f32 %v726, %v699
        %v729 = vmul.f32 %v727, %v701
        %v730 = vsub.f32 %v728, %v729
        %v731 = vmul.f32 %v726, %v701
        %v732 = vmul.f32 %v727, %v699
        %v733 = vadd.f32 %v731, %v732
        %v734 = vmul.f32 %v588, %v560
        %v735 = vmul.f32 %v595, %v573
        %v736 = vsub.f32 %v734, %v735
        %v737 = vmul.f32 %v588, %v573
        %v738 = vmul.f32 %v595, %v560
        %v739 = vadd.f32 %v737, %v738
        %v741 = vlaneseq
        %v742 = vshrl.u32 %v741, 7
        %v743 = vsub.s32 0, %v742
        %v744 = vrot.slane %v707, %v743
        %v746 = vmul.f32 %v744, %v699
        %v748 = vlaneseq
        %v749 = vshrl.u32 %v748, 7
        %v750 = vsub.s32 0, %v749
        %v751 = vrot.slane %v709, %v750
        %v753 = vmul.f32 %v751, %v701
        %v754 = vsub.f32 %v746, %v753
        %v755 = vmul.f32 %v744, %v701
        %v756 = vmul.f32 %v751, %v699
        %v757 = vadd.f32 %v755, %v756
        %v758 = vadd.f32 %v617, %v736
        %v759 = vadd.f32 %v630, %v739
        %v760 = vmul.f32 %v758, %v754
        %v761 = vmul.f32 %v759, %v757
        %v762 = vsub.f32 %v760, %v761
        %v763 = vmul.f32 %v758, %v757
        %v764 = vmul.f32 %v759, %v754
        %v765 = vadd.f32 %v763, %v764
        %v766 = vsub.f32 %v617, %v736
        %v767 = vsub.f32 %v630, %v739
        %v768 = vmul.f32 %v766, %v754
        %v769 = vmul.f32 %v767, %v757
        %v770 = vsub.f32 %v768, %v769
        %v771 = vmul.f32 %v766, %v757
        %v772 = vmul.f32 %v767, %v754
        %v773 = vadd.f32 %v771, %v772
        %v774 = vld [vmem:[%s430] sm:$0x1]
        %v775 = vld [vmem:[%s437] sm:$0x1]
        %s776 = sld [smem:[#allocation2]]
        %v777 = vmul.f32 %v774, %v774
        %v778 = vmul.f32 %v775, %v775
        %v779 = vsub.f32 %v777, %v778
        %v780 = vmul.f32 %v774, %v775
        %v781 = vadd.f32 %v780, %v780
        %v783 = vlaneseq
        %v784 = vshrl.u32 %v783, 7
        %v785 = vsub.s32 0, %v784
        %v786 = vrot.slane %v779, %v785
        %v788 = vsub.f32 %v786, %v536
        %v790 = vlaneseq
        %v791 = vshrl.u32 %v790, 7
        %v792 = vsub.s32 0, %v791
        %v793 = vrot.slane %v781, %v792
        %v795 = vsub.f32 %v793, %v538
        %v796 = vmul.f32 %v788, %v788
        %v797 = vmul.f32 %v795, %v795
        %v798 = vadd.f32 %v796, %v797
        %v799 = vrsqrt.pop %v798
        %v800 = vmul.f32 %v798, %v799
        %vm801 = vcmp.eq.f32.partialorder %v798, inf
        %v802 = vsel %vm801, %v798, %v800
        %vm803 = vcmp.eq.f32.partialorder %v798, 0.0
        %v804 = vand.u32 %v798, 2147483648
        %v805 = vsel %vm803, %v804, %v802
        %v806 = vadd.f32 %v805, %v788
        %v807 = vmul.f32 %v806, 0.5
        %v808 = vmax.f32 %v807, 0.0
        %v809 = vrsqrt.pop %v808
        %v810 = vmul.f32 %v808, %v809
        %vm811 = vcmp.eq.f32.partialorder %v808, inf
        %v812 = vsel %vm811, %v808, %v810
        %vm813 = vcmp.eq.f32.partialorder %v808, 0.0
        %v814 = vand.u32 %v808, 2147483648
        %v815 = vsel %vm813, %v814, %v812
        %v816 = vsub.f32 %v805, %v788
        %v817 = vmul.f32 %v816, 0.5
        %v818 = vmax.f32 %v817, 0.0
        %v819 = vrsqrt.pop %v818
        %v820 = vmul.f32 %v818, %v819
        %vm821 = vcmp.eq.f32.partialorder %v818, inf
        %v822 = vsel %vm821, %v818, %v820
        %vm823 = vcmp.eq.f32.partialorder %v818, 0.0
        %v824 = vand.u32 %v818, 2147483648
        %v825 = vsel %vm823, %v824, %v822
        %vm826 = vcmp.lt.f32.partialorder %v795, 0.0
        %v827 = vsub.f32 0.0, %v825
        %v828 = vsel %vm826, %v827, %v825
        %v829 = vadd.f32 %v777, %v778
        %v830 = vrcp.pop %v829
        %v831 = vmul.f32 %v829, %v830
        %v832 = vsub.f32 2.0, %v831
        %v833 = vmul.f32 %v830, %v832
        %v834 = vmul.f32 %v774, %v833
        %v835 = vsub.f32 0.0, %v775
        %v836 = vmul.f32 %v835, %v833
        %v837 = vmul.f32 %v815, 2.0
        %v838 = vmul.f32 %v828, 2.0
        %v839 = vmul.f32 %v837, %v837
        %v840 = vmul.f32 %v838, %v838
        %v841 = vadd.f32 %v839, %v840
        %v842 = vrcp.pop %v841
        %v843 = vmul.f32 %v841, %v842
        %v844 = vsub.f32 2.0, %v843
        %v845 = vmul.f32 %v842, %v844
        %v846 = vmul.f32 %v837, %v845
        %v847 = vsub.f32 0.0, %v838
        %v848 = vmul.f32 %v847, %v845
        %s849 = smul.f32 %s776, 6.2831855
        %v850 = vstv %s849
        %v851 = vmul.f32 %v850, %v510
        %v853 = vlaneseq
        %v854 = vshrl.u32 %v853, 7
        %v855 = vsub.s32 0, %v854
        %v856 = vrot.slane %v851, %v855
        %v858 = vmul.f32 %v856, %v815
        %v859 = vmul.f32 %v856, %v828
        %v860 = vmul.f32 %v859, 1.442695
        %v861 = vpow.pop %v860
        %v862 = vrcp.pop %v861
        %v863 = vmul.f32 %v861, %v862
        %v864 = vsub.f32 2.0, %v863
        %v865 = vmul.f32 %v862, %v864
        %v866 = vand.u32 2147483647, %v858
        %vm867 = vcmp.le.f32.partialorder %v866, 0.7853982
        %vm868 = vcmp.lt.s32.totalorder %v858, 0
        %v869 = vand.u32 %v858, 2139095040
        %v870 = vshrl.u32 %v869, 23
        %v871 = vsub.s32 %v870, 127
        %v872 = vand.u32 2147483647, %v858
        %v873 = vand.u32 %v872, 8388607
        %v874 = vor.u32 %v873, 8388608
        %v875 = vsub.s32 0, %v874
        %v876 = vadd.s32 %v871, 1
        %vm877 = vcmp.gt.s32.totalorder %v876, 0
        %v878 = vsel %vm877, %v876, 0
        %v879 = vshrl.u32 %v878, 5
        %v880 = vand.u32 %v878, 31
        %v881 = vsub.s32 32, %v880
        %v882 = vshrl.u32 683565275, %v881
        %v883 = vshll.u32 683565275, %v880
        %v884 = vshrl.u32 2475754826, %v881
        %v885 = vor.u32 %v883, %v884
        %v886 = vshll.u32 2475754826, %v880
        %v887 = vshrl.u32 2131351028, %v881
        %v888 = vor.u32 %v886, %v887
        %v889 = vshll.u32 2131351028, %v880
        %v890 = vshrl.u32 2102212464, %v881
        %v891 = vor.u32 %v889, %v890
        %v892 = vshll.u32 2102212464, %v880
        %v893 = vshrl.u32 920167782, %v881
        %v894 = vor.u32 %v892, %v893
        %v895 = vshll.u32 920167782, %v880
        %v896 = vshrl.u32 1326507024, %v881
        %v897 = vor.u32 %v895, %v896
        %vm898 = vcmp.lt.s32.totalorder %v879, 1
        %vm899 = vcmp.lt.s32.totalorder %v879, 2
        %vm900 = vcmp.lt.s32.totalorder %v879, 3
        %vm901 = vcmp.lt.s32.totalorder %v879, 4
        %v902 = vsel %vm898, %v882, %v885
        %v903 = vsel %vm901, %v891, 2102212464
        %v904 = vsel %vm900, %v888, %v903
        %v905 = vsel %vm899, %v902, %v904
        %v906 = vsel %vm898, %v885, %v888
        %v907 = vsel %vm901, %v894, 920167782
        %v908 = vsel %vm900, %v891, %v907
        %v909 = vsel %vm899, %v906, %v908
        %v910 = vsel %vm898, %v888, %v891
        %v911 = vsel %vm901, %v897, 1326507024
        %v912 = vsel %vm900, %v894, %v911
        %v913 = vsel %vm899, %v910, %v912
        %v914 = vshll.u32 %v874, 8
        %v915 = vmul.u32.u64.compose %v914, %v913
        %v916 = vextract.low.u32 %v915
        %v917 = vextract.high.u32 %v915
        %v918 = vmul.u32.u64.compose %v914, %v909
        %v919 = vextract.low.u32 %v918
        %v920 = vextract.high.u32 %v918
        %v921 = vmul.u32 %v914, %v905
        %v922 = vadd.s32 %v917, %v919
        %vm923 = vc.u32 %v917, %v919
        %v924 = vadd.s32 %v920, 1
        %v925 = vsel %vm923, %v924, %v920
        %v926 = vadd.s32 %v921, %v925
        %v927 = vadd.s32 %v926, 536870912
        %v928 = vshrl.u32 %v927, 30
        %v929 = vshll.u32 %v928, 30
        %v930 = vsub.s32 %v926, %v929
        %vm931 = vcmp.lt.s32.totalorder %v930, 0
        %v932 = vsub.s32 0, %v930
        %v933 = vsel %vm931, %v932, %v930
        %v934 = vclz %v933
        %v935 = vsub.s32 %v934, 2
        %vm936 = vcmp.gt.s32.totalorder 0, %v935
        %v937 = vsel %vm936, 0, %v935
        %v938 = vsub.s32 32, %v937
        %v939 = vshll.u32 %v930, %v937
        %v940 = vshrl.u32 %v922, %v938
        %v941 = vor.u32 %v939, %v940
        %v942 = vsub.s32 4294967266, %v937
        %v943 = vadd.s32 %v942, 127
        %v944 = vshll.u32 %v943, 23
        %v945 = vor.u32 4788187, %v944
        %v946 = vand.u32 2147483647, %v945
        %v948 = vcvt.s32.f32 %v941
        %v949 = vmul.f32 %v948, %v946
        %v950 = vxor.u32 %v949, 2147483648
        %v951 = vsel %vm868, %v950, %v949
        %v952 = vsub.s32 4, %v928
        %v953 = vsel %vm868, %v952, %v928
        %v954 = vsel %vm867, %v858, %v951
        %v955 = vsel %vm867, 0, %v953
        %v956 = vcosq.f32.pop %v954
        %v957 = vsinq.f32.pop %v954
        %vm958 = vweird.f32 %v858
        %v959 = vand.u32 %v955, 3
        %vm960 = vcmp.lt.s32.totalorder %v959, 2
        %vm961 = vcmp.eq.s32.totalorder %v959, 0
        %v962 = vxor.u32 %v957, 2147483648
        %v963 = vsel %vm961, %v956, %v962
        %vm964 = vcmp.eq.s32.totalorder %v959, 2
        %v965 = vxor.u32 %v956, 2147483648
        %v966 = vsel %vm964, %v965, %v957
        %v967 = vsel %vm960, %v963, %v966
        %v968 = vsel %vm958, nan, %v967
        %v969 = vand.u32 2147483647, %v858
        %vm970 = vcmp.le.f32.partialorder %v969, 0.7853982
        %vm971 = vcmp.lt.s32.totalorder %v858, 0
        %v972 = vand.u32 %v858, 2139095040
        %v973 = vshrl.u32 %v972, 23
        %v974 = vsub.s32 %v973, 127
        %v975 = vand.u32 2147483647, %v858
        %v976 = vand.u32 %v975, 8388607
        %v977 = vor.u32 %v976, 8388608
        %v978 = vsub.s32 0, %v977
        %v979 = vadd.s32 %v974, 1
        %vm980 = vcmp.gt.s32.totalorder %v979, 0
        %v981 = vsel %vm980, %v979, 0
        %v982 = vshrl.u32 %v981, 5
        %v983 = vand.u32 %v981, 31
        %v984 = vsub.s32 32, %v983
        %v985 = vshrl.u32 683565275, %v984
        %v986 = vshll.u32 683565275, %v983
        %v987 = vshrl.u32 2475754826, %v984
        %v988 = vor.u32 %v986, %v987
        %v989 = vshll.u32 2475754826, %v983
        %v990 = vshrl.u32 2131351028, %v984
        %v991 = vor.u32 %v989, %v990
        %v992 = vshll.u32 2131351028, %v983
        %v993 = vshrl.u32 2102212464, %v984
        %v994 = vor.u32 %v992, %v993
        %v995 = vshll.u32 2102212464, %v983
        %v996 = vshrl.u32 920167782, %v984
        %v997 = vor.u32 %v995, %v996
        %v998 = vshll.u32 920167782, %v983
        %v999 = vshrl.u32 1326507024, %v984
        %v1000 = vor.u32 %v998, %v999
        %vm1001 = vcmp.lt.s32.totalorder %v982, 1
        %vm1002 = vcmp.lt.s32.totalorder %v982, 2
        %vm1003 = vcmp.lt.s32.totalorder %v982, 3
        %vm1004 = vcmp.lt.s32.totalorder %v982, 4
        %v1005 = vsel %vm1001, %v985, %v988
        %v1006 = vsel %vm1004, %v994, 2102212464
        %v1007 = vsel %vm1003, %v991, %v1006
        %v1008 = vsel %vm1002, %v1005, %v1007
        %v1009 = vsel %vm1001, %v988, %v991
        %v1010 = vsel %vm1004, %v997, 920167782
        %v1011 = vsel %vm1003, %v994, %v1010
        %v1012 = vsel %vm1002, %v1009, %v1011
        %v1013 = vsel %vm1001, %v991, %v994
        %v1014 = vsel %vm1004, %v1000, 1326507024
        %v1015 = vsel %vm1003, %v997, %v1014
        %v1016 = vsel %vm1002, %v1013, %v1015
        %v1017 = vshll.u32 %v977, 8
        %v1018 = vmul.u32.u64.compose %v1017, %v1016
        %v1019 = vextract.low.u32 %v1018
        %v1020 = vextract.high.u32 %v1018
        %v1021 = vmul.u32.u64.compose %v1017, %v1012
        %v1022 = vextract.low.u32 %v1021
        %v1023 = vextract.high.u32 %v1021
        %v1024 = vmul.u32 %v1017, %v1008
        %v1025 = vadd.s32 %v1020, %v1022
        %vm1026 = vc.u32 %v1020, %v1022
        %v1027 = vadd.s32 %v1023, 1
        %v1028 = vsel %vm1026, %v1027, %v1023
        %v1029 = vadd.s32 %v1024, %v1028
        %v1030 = vadd.s32 %v1029, 536870912
        %v1031 = vshrl.u32 %v1030, 30
        %v1032 = vshll.u32 %v1031, 30
        %v1033 = vsub.s32 %v1029, %v1032
        %vm1034 = vcmp.lt.s32.totalorder %v1033, 0
        %v1035 = vsub.s32 0, %v1033
        %v1036 = vsel %vm1034, %v1035, %v1033
        %v1037 = vclz %v1036
        %v1038 = vsub.s32 %v1037, 2
        %vm1039 = vcmp.gt.s32.totalorder 0, %v1038
        %v1040 = vsel %vm1039, 0, %v1038
        %v1041 = vsub.s32 32, %v1040
        %v1042 = vshll.u32 %v1033, %v1040
        %v1043 = vshrl.u32 %v1025, %v1041
        %v1044 = vor.u32 %v1042, %v1043
        %v1045 = vsub.s32 4294967266, %v1040
        %v1046 = vadd.s32 %v1045, 127
        %v1047 = vshll.u32 %v1046, 23
        %v1048 = vor.u32 4788187, %v1047
        %v1049 = vand.u32 2147483647, %v1048
        %v1051 = vcvt.s32.f32 %v1044
        %v1052 = vmul.f32 %v1051, %v1049
        %v1053 = vxor.u32 %v1052, 2147483648
        %v1054 = vsel %vm971, %v1053, %v1052
        %v1055 = vsub.s32 4, %v1031
        %v1056 = vsel %vm971, %v1055, %v1031
        %v1057 = vsel %vm970, %v858, %v1054
        %v1058 = vsel %vm970, 0, %v1056
        %v1059 = vcosq.f32.pop %v1057
        %v1060 = vsinq.f32.pop %v1057
        %vm1061 = vweird.f32 %v858
        %v1062 = vadd.s32 %v1058, 3
        %v1063 = vand.u32 %v1062, 3
        %vm1064 = vcmp.lt.s32.totalorder %v1063, 2
        %vm1065 = vcmp.eq.s32.totalorder %v1063, 0
        %v1066 = vxor.u32 %v1060, 2147483648
        %v1067 = vsel %vm1065, %v1059, %v1066
        %vm1068 = vcmp.eq.s32.totalorder %v1063, 2
        %v1069 = vxor.u32 %v1059, 2147483648
        %v1070 = vsel %vm1068, %v1069, %v1060
        %v1071 = vsel %vm1064, %v1067, %v1070
        %v1072 = vsel %vm1061, nan, %v1071
        %v1073 = vmul.f32 %v861, %v968
        %v1074 = vsub.f32 0.0, %v861
        %v1075 = vmul.f32 %v1074, %v1072
        %v1076 = vmul.f32 %v865, %v968
        %v1077 = vmul.f32 %v865, %v1072
        %v1078 = vadd.f32 %v560, %v815
        %v1079 = vadd.f32 %v573, %v828
        %v1080 = vsub.f32 %v560, %v815
        %v1081 = vsub.f32 %v573, %v828
        %v1082 = vmul.f32 %v1078, %v687
        %v1083 = vmul.f32 %v1079, %v689
        %v1084 = vsub.f32 %v1082, %v1083
        %v1085 = vmul.f32 %v1078, %v689
        %v1086 = vmul.f32 %v1079, %v687
        %v1087 = vadd.f32 %v1085, %v1086
        %v1088 = vmul.f32 %v1080, %v687
        %v1089 = vmul.f32 %v1081, %v689
        %v1090 = vsub.f32 %v1088, %v1089
        %v1091 = vmul.f32 %v1080, %v689
        %v1092 = vmul.f32 %v1081, %v687
        %v1093 = vadd.f32 %v1091, %v1092
        %v1094 = vmul.f32 %v1078, %v846
        %v1095 = vmul.f32 %v1079, %v848
        %v1096 = vsub.f32 %v1094, %v1095
        %v1097 = vmul.f32 %v1078, %v848
        %v1098 = vmul.f32 %v1079, %v846
        %v1099 = vadd.f32 %v1097, %v1098
        %v1100 = vmul.f32 %v1080, %v846
        %v1101 = vmul.f32 %v1081, %v848
        %v1102 = vsub.f32 %v1100, %v1101
        %v1103 = vmul.f32 %v1080, %v848
        %v1104 = vmul.f32 %v1081, %v846
        %v1105 = vadd.f32 %v1103, %v1104
        %v1106 = vsub.f32 0.0, %v1102
        %v1107 = vsub.f32 0.0, %v1105
        %v1108 = vmul.f32 %v1084, %v1073
        %v1109 = vmul.f32 %v1087, %v1075
        %v1110 = vsub.f32 %v1108, %v1109
        %v1111 = vmul.f32 %v1084, %v1075
        %v1112 = vmul.f32 %v1087, %v1073
        %v1113 = vadd.f32 %v1111, %v1112
        %v1114 = vmul.f32 %v1090, %v1076
        %v1115 = vmul.f32 %v1093, %v1077
        %v1116 = vsub.f32 %v1114, %v1115
        %v1117 = vmul.f32 %v1090, %v1077
        %v1118 = vmul.f32 %v1093, %v1076
        %v1119 = vadd.f32 %v1117, %v1118
        %v1120 = vmul.f32 %v1090, %v1073
        %v1121 = vmul.f32 %v1093, %v1075
        %v1122 = vsub.f32 %v1120, %v1121
        %v1123 = vmul.f32 %v1090, %v1075
        %v1124 = vmul.f32 %v1093, %v1073
        %v1125 = vadd.f32 %v1123, %v1124
        %v1126 = vmul.f32 %v1084, %v1076
        %v1127 = vmul.f32 %v1087, %v1077
        %v1128 = vsub.f32 %v1126, %v1127
        %v1129 = vmul.f32 %v1084, %v1077
        %v1130 = vmul.f32 %v1087, %v1076
        %v1131 = vadd.f32 %v1129, %v1130
        %v1132 = vmul.f32 %v1110, %v1096
        %v1133 = vmul.f32 %v1113, %v1099
        %v1134 = vsub.f32 %v1132, %v1133
        %v1135 = vmul.f32 %v1110, %v1099
        %v1136 = vmul.f32 %v1113, %v1096
        %v1137 = vadd.f32 %v1135, %v1136
        %v1138 = vmul.f32 %v1116, %v1106
        %v1139 = vmul.f32 %v1119, %v1107
        %v1140 = vsub.f32 %v1138, %v1139
        %v1141 = vmul.f32 %v1116, %v1107
        %v1142 = vmul.f32 %v1119, %v1106
        %v1143 = vadd.f32 %v1141, %v1142
        %v1144 = vadd.f32 %v1134, %v1140
        %v1145 = vadd.f32 %v1137, %v1143
        %v1146 = vmul.f32 %v1110, %v1106
        %v1147 = vmul.f32 %v1113, %v1107
        %v1148 = vsub.f32 %v1146, %v1147
        %v1149 = vmul.f32 %v1110, %v1107
        %v1150 = vmul.f32 %v1113, %v1106
        %v1151 = vadd.f32 %v1149, %v1150
        %v1152 = vmul.f32 %v1116, %v1096
        %v1153 = vmul.f32 %v1119, %v1099
        %v1154 = vsub.f32 %v1152, %v1153
        %v1155 = vmul.f32 %v1116, %v1099
        %v1156 = vmul.f32 %v1119, %v1096
        %v1157 = vadd.f32 %v1155, %v1156
        %v1158 = vadd.f32 %v1148, %v1154
        %v1159 = vadd.f32 %v1151, %v1157
        %v1160 = vmul.f32 %v1122, %v1096
        %v1161 = vmul.f32 %v1125, %v1099
        %v1162 = vsub.f32 %v1160, %v1161
        %v1163 = vmul.f32 %v1122, %v1099
        %v1164 = vmul.f32 %v1125, %v1096
        %v1165 = vadd.f32 %v1163, %v1164
        %v1166 = vmul.f32 %v1128, %v1106
        %v1167 = vmul.f32 %v1131, %v1107
        %v1168 = vsub.f32 %v1166, %v1167
        %v1169 = vmul.f32 %v1128, %v1107
        %v1170 = vmul.f32 %v1131, %v1106
        %v1171 = vadd.f32 %v1169, %v1170
        %v1172 = vadd.f32 %v1162, %v1168
        %v1173 = vadd.f32 %v1165, %v1171
        %v1174 = vmul.f32 %v1122, %v1106
        %v1175 = vmul.f32 %v1125, %v1107
        %v1176 = vsub.f32 %v1174, %v1175
        %v1177 = vmul.f32 %v1122, %v1107
        %v1178 = vmul.f32 %v1125, %v1106
        %v1179 = vadd.f32 %v1177, %v1178
        %v1180 = vmul.f32 %v1128, %v1096
        %v1181 = vmul.f32 %v1131, %v1099
        %v1182 = vsub.f32 %v1180, %v1181
        %v1183 = vmul.f32 %v1128, %v1099
        %v1184 = vmul.f32 %v1131, %v1096
        %v1185 = vadd.f32 %v1183, %v1184
        %v1186 = vadd.f32 %v1176, %v1182
        %v1187 = vadd.f32 %v1179, %v1185
        %v1188 = vmul.f32 %v722, %v1144
        %v1189 = vmul.f32 %v725, %v1145
        %v1190 = vsub.f32 %v1188, %v1189
        %v1191 = vmul.f32 %v722, %v1145
        %v1192 = vmul.f32 %v725, %v1144
        %v1193 = vadd.f32 %v1191, %v1192
        %v1194 = vmul.f32 %v730, %v1172
        %v1195 = vmul.f32 %v733, %v1173
        %v1196 = vsub.f32 %v1194, %v1195
        %v1197 = vmul.f32 %v730, %v1173
        %v1198 = vmul.f32 %v733, %v1172
        %v1199 = vadd.f32 %v1197, %v1198
        %v1200 = vadd.f32 %v1190, %v1196
        %v1201 = vadd.f32 %v1193, %v1199
        %v1202 = vmul.f32 %v722, %v1158
        %v1203 = vmul.f32 %v725, %v1159
        %v1204 = vsub.f32 %v1202, %v1203
        %v1205 = vmul.f32 %v722, %v1159
        %v1206 = vmul.f32 %v725, %v1158
        %v1207 = vadd.f32 %v1205, %v1206
        %v1208 = vmul.f32 %v730, %v1186
        %v1209 = vmul.f32 %v733, %v1187
        %v1210 = vsub.f32 %v1208, %v1209
        %v1211 = vmul.f32 %v730, %v1187
        %v1212 = vmul.f32 %v733, %v1186
        %v1213 = vadd.f32 %v1211, %v1212
        %v1214 = vadd.f32 %v1204, %v1210
        %v1215 = vadd.f32 %v1207, %v1213
        %v1216 = vmul.f32 %v730, %v1144
        %v1217 = vmul.f32 %v733, %v1145
        %v1218 = vsub.f32 %v1216, %v1217
        %v1219 = vmul.f32 %v730, %v1145
        %v1220 = vmul.f32 %v733, %v1144
        %v1221 = vadd.f32 %v1219, %v1220
        %v1222 = vmul.f32 %v722, %v1172
        %v1223 = vmul.f32 %v725, %v1173
        %v1224 = vsub.f32 %v1222, %v1223
        %v1225 = vmul.f32 %v722, %v1173
        %v1226 = vmul.f32 %v725, %v1172
        %v1227 = vadd.f32 %v1225, %v1226
        %v1228 = vadd.f32 %v1218, %v1224
        %v1229 = vadd.f32 %v1221, %v1227
        %v1230 = vmul.f32 %v730, %v1158
        %v1231 = vmul.f32 %v733, %v1159
        %v1232 = vsub.f32 %v1230, %v1231
        %v1233 = vmul.f32 %v730, %v1159
        %v1234 = vmul.f32 %v733, %v1158
        %v1235 = vadd.f32 %v1233, %v1234
        %v1236 = vmul.f32 %v722, %v1186
        %v1237 = vmul.f32 %v725, %v1187
        %v1238 = vsub.f32 %v1236, %v1237
        %v1239 = vmul.f32 %v722, %v1187
        %v1240 = vmul.f32 %v725, %v1186
        %v1241 = vadd.f32 %v1239, %v1240
        %v1242 = vadd.f32 %v1232, %v1238
        %v1243 = vadd.f32 %v1235, %v1241
        %v1244 = vmul.f32 %v786, %v560
        %v1245 = vmul.f32 %v793, %v573
        %v1246 = vsub.f32 %v1244, %v1245
        %v1247 = vmul.f32 %v786, %v573
        %v1248 = vmul.f32 %v793, %v560
        %v1249 = vadd.f32 %v1247, %v1248
        %v1250 = vadd.f32 %v1246, %v815
        %v1251 = vadd.f32 %v1249, %v828
        %v1252 = vsub.f32 %v1246, %v815
        %v1253 = vsub.f32 %v1249, %v828
        %v1255 = vlaneseq
        %v1256 = vshrl.u32 %v1255, 7
        %v1257 = vsub.s32 0, %v1256
        %v1258 = vrot.slane %v834, %v1257
        %v1260 = vmul.f32 %v1258, %v687
        %v1262 = vlaneseq
        %v1263 = vshrl.u32 %v1262, 7
        %v1264 = vsub.s32 0, %v1263
        %v1265 = vrot.slane %v836, %v1264
        %v1267 = vmul.f32 %v1265, %v689
        %v1268 = vsub.f32 %v1260, %v1267
        %v1269 = vmul.f32 %v1258, %v689
        %v1270 = vmul.f32 %v1265, %v687
        %v1271 = vadd.f32 %v1269, %v1270
        %v1272 = vmul.f32 %v1258, %v846
        %v1273 = vmul.f32 %v1265, %v848
        %v1274 = vsub.f32 %v1272, %v1273
        %v1275 = vmul.f32 %v1258, %v848
        %v1276 = vmul.f32 %v1265, %v846
        %v1277 = vadd.f32 %v1275, %v1276
        %v1278 = vmul.f32 %v1250, %v1268
        %v1279 = vmul.f32 %v1251, %v1271
        %v1280 = vsub.f32 %v1278, %v1279
        %v1281 = vmul.f32 %v1250, %v1271
        %v1282 = vmul.f32 %v1251, %v1268
        %v1283 = vadd.f32 %v1281, %v1282
        %v1284 = vmul.f32 %v1252, %v1268
        %v1285 = vmul.f32 %v1253, %v1271
        %v1286 = vsub.f32 %v1284, %v1285
        %v1287 = vmul.f32 %v1252, %v1271
        %v1288 = vmul.f32 %v1253, %v1268
        %v1289 = vadd.f32 %v1287, %v1288
        %v1290 = vmul.f32 %v1250, %v1274
        %v1291 = vmul.f32 %v1251, %v1277
        %v1292 = vsub.f32 %v1290, %v1291
        %v1293 = vmul.f32 %v1250, %v1277
        %v1294 = vmul.f32 %v1251, %v1274
        %v1295 = vadd.f32 %v1293, %v1294
        %v1296 = vmul.f32 %v1252, %v1274
        %v1297 = vmul.f32 %v1253, %v1277
        %v1298 = vsub.f32 %v1296, %v1297
        %v1299 = vmul.f32 %v1252, %v1277
        %v1300 = vmul.f32 %v1253, %v1274
        %v1301 = vadd.f32 %v1299, %v1300
        %v1302 = vsub.f32 0.0, %v1298
        %v1303 = vsub.f32 0.0, %v1301
        %v1304 = vmul.f32 %v1280, %v1073
        %v1305 = vmul.f32 %v1283, %v1075
        %v1306 = vsub.f32 %v1304, %v1305
        %v1307 = vmul.f32 %v1280, %v1075
        %v1308 = vmul.f32 %v1283, %v1073
        %v1309 = vadd.f32 %v1307, %v1308
        %v1310 = vmul.f32 %v1286, %v1076
        %v1311 = vmul.f32 %v1289, %v1077
        %v1312 = vsub.f32 %v1310, %v1311
        %v1313 = vmul.f32 %v1286, %v1077
        %v1314 = vmul.f32 %v1289, %v1076
        %v1315 = vadd.f32 %v1313, %v1314
        %v1316 = vmul.f32 %v1286, %v1073
        %v1317 = vmul.f32 %v1289, %v1075
        %v1318 = vsub.f32 %v1316, %v1317
        %v1319 = vmul.f32 %v1286, %v1075
        %v1320 = vmul.f32 %v1289, %v1073
        %v1321 = vadd.f32 %v1319, %v1320
        %v1322 = vmul.f32 %v1280, %v1076
        %v1323 = vmul.f32 %v1283, %v1077
        %v1324 = vsub.f32 %v1322, %v1323
        %v1325 = vmul.f32 %v1280, %v1077
        %v1326 = vmul.f32 %v1283, %v1076
        %v1327 = vadd.f32 %v1325, %v1326
        %v1328 = vmul.f32 %v1306, %v1292
        %v1329 = vmul.f32 %v1309, %v1295
        %v1330 = vsub.f32 %v1328, %v1329
        %v1331 = vmul.f32 %v1306, %v1295
        %v1332 = vmul.f32 %v1309, %v1292
        %v1333 = vadd.f32 %v1331, %v1332
        %v1334 = vmul.f32 %v1312, %v1302
        %v1335 = vmul.f32 %v1315, %v1303
        %v1336 = vsub.f32 %v1334, %v1335
        %v1337 = vmul.f32 %v1312, %v1303
        %v1338 = vmul.f32 %v1315, %v1302
        %v1339 = vadd.f32 %v1337, %v1338
        %v1340 = vadd.f32 %v1330, %v1336
        %v1341 = vadd.f32 %v1333, %v1339
        %v1342 = vmul.f32 %v1306, %v1302
        %v1343 = vmul.f32 %v1309, %v1303
        %v1344 = vsub.f32 %v1342, %v1343
        %v1345 = vmul.f32 %v1306, %v1303
        %v1346 = vmul.f32 %v1309, %v1302
        %v1347 = vadd.f32 %v1345, %v1346
        %v1348 = vmul.f32 %v1312, %v1292
        %v1349 = vmul.f32 %v1315, %v1295
        %v1350 = vsub.f32 %v1348, %v1349
        %v1351 = vmul.f32 %v1312, %v1295
        %v1352 = vmul.f32 %v1315, %v1292
        %v1353 = vadd.f32 %v1351, %v1352
        %v1354 = vadd.f32 %v1344, %v1350
        %v1355 = vadd.f32 %v1347, %v1353
        %v1356 = vmul.f32 %v1318, %v1292
        %v1357 = vmul.f32 %v1321, %v1295
        %v1358 = vsub.f32 %v1356, %v1357
        %v1359 = vmul.f32 %v1318, %v1295
        %v1360 = vmul.f32 %v1321, %v1292
        %v1361 = vadd.f32 %v1359, %v1360
        %v1362 = vmul.f32 %v1324, %v1302
        %v1363 = vmul.f32 %v1327, %v1303
        %v1364 = vsub.f32 %v1362, %v1363
        %v1365 = vmul.f32 %v1324, %v1303
        %v1366 = vmul.f32 %v1327, %v1302
        %v1367 = vadd.f32 %v1365, %v1366
        %v1368 = vadd.f32 %v1358, %v1364
        %v1369 = vadd.f32 %v1361, %v1367
        %v1370 = vmul.f32 %v1318, %v1302
        %v1371 = vmul.f32 %v1321, %v1303
        %v1372 = vsub.f32 %v1370, %v1371
        %v1373 = vmul.f32 %v1318, %v1303
        %v1374 = vmul.f32 %v1321, %v1302
        %v1375 = vadd.f32 %v1373, %v1374
        %v1376 = vmul.f32 %v1324, %v1292
        %v1377 = vmul.f32 %v1327, %v1295
        %v1378 = vsub.f32 %v1376, %v1377
        %v1379 = vmul.f32 %v1324, %v1295
        %v1380 = vmul.f32 %v1327, %v1292
        %v1381 = vadd.f32 %v1379, %v1380
        %v1382 = vadd.f32 %v1372, %v1378
        %v1383 = vadd.f32 %v1375, %v1381
        %v1384 = vmul.f32 %v762, %v1340
        %v1385 = vmul.f32 %v765, %v1341
        %v1386 = vsub.f32 %v1384, %v1385
        %v1387 = vmul.f32 %v762, %v1341
        %v1388 = vmul.f32 %v765, %v1340
        %v1389 = vadd.f32 %v1387, %v1388
        %v1390 = vmul.f32 %v770, %v1368
        %v1391 = vmul.f32 %v773, %v1369
        %v1392 = vsub.f32 %v1390, %v1391
        %v1393 = vmul.f32 %v770, %v1369
        %v1394 = vmul.f32 %v773, %v1368
        %v1395 = vadd.f32 %v1393, %v1394
        %v1396 = vadd.f32 %v1386, %v1392
        %v1397 = vadd.f32 %v1389, %v1395
        %v1398 = vmul.f32 %v762, %v1354
        %v1399 = vmul.f32 %v765, %v1355
        %v1400 = vsub.f32 %v1398, %v1399
        %v1401 = vmul.f32 %v762, %v1355
        %v1402 = vmul.f32 %v765, %v1354
        %v1403 = vadd.f32 %v1401, %v1402
        %v1404 = vmul.f32 %v770, %v1382
        %v1405 = vmul.f32 %v773, %v1383
        %v1406 = vsub.f32 %v1404, %v1405
        %v1407 = vmul.f32 %v770, %v1383
        %v1408 = vmul.f32 %v773, %v1382
        %v1409 = vadd.f32 %v1407, %v1408
        %v1410 = vadd.f32 %v1400, %v1406
        %v1411 = vadd.f32 %v1403, %v1409
        %v1412 = vmul.f32 %v770, %v1340
        %v1413 = vmul.f32 %v773, %v1341
        %v1414 = vsub.f32 %v1412, %v1413
        %v1415 = vmul.f32 %v770, %v1341
        %v1416 = vmul.f32 %v773, %v1340
        %v1417 = vadd.f32 %v1415, %v1416
        %v1418 = vmul.f32 %v762, %v1368
        %v1419 = vmul.f32 %v765, %v1369
        %v1420 = vsub.f32 %v1418, %v1419
        %v1421 = vmul.f32 %v762, %v1369
        %v1422 = vmul.f32 %v765, %v1368
        %v1423 = vadd.f32 %v1421, %v1422
        %v1424 = vadd.f32 %v1414, %v1420
        %v1425 = vadd.f32 %v1417, %v1423
        %v1426 = vmul.f32 %v770, %v1354
        %v1427 = vmul.f32 %v773, %v1355
        %v1428 = vsub.f32 %v1426, %v1427
        %v1429 = vmul.f32 %v770, %v1355
        %v1430 = vmul.f32 %v773, %v1354
        %v1431 = vadd.f32 %v1429, %v1430
        %v1432 = vmul.f32 %v762, %v1382
        %v1433 = vmul.f32 %v765, %v1383
        %v1434 = vsub.f32 %v1432, %v1433
        %v1435 = vmul.f32 %v762, %v1383
        %v1436 = vmul.f32 %v765, %v1382
        %v1437 = vadd.f32 %v1435, %v1436
        %v1438 = vadd.f32 %v1428, %v1434
        %v1439 = vadd.f32 %v1431, %v1437
        %s1440 = scalar_lea.vmem %s430, 1 [#allocation5]
        %v1441 = vld [vmem:[%s1440] sm:$0x1]
        %s1442 = scalar_lea.vmem %s437, 1 [#allocation6]
        %v1443 = vld [vmem:[%s1442] sm:$0x1]
        %s1444 = sld [smem:[#allocation2 + $0x1]]
        %v1445 = vmul.f32 %v1441, %v1441
        %v1446 = vmul.f32 %v1443, %v1443
        %v1447 = vsub.f32 %v1445, %v1446
        %v1448 = vmul.f32 %v1441, %v1443
        %v1449 = vadd.f32 %v1448, %v1448
        %v1451 = vlaneseq
        %v1452 = vshrl.u32 %v1451, 7
        %v1453 = vsub.s32 0, %v1452
        %v1454 = vrot.slane %v1447, %v1453
        %v1456 = vsub.f32 %v1454, %v536
        %v1458 = vlaneseq
        %v1459 = vshrl.u32 %v1458, 7
        %v1460 = vsub.s32 0, %v1459
        %v1461 = vrot.slane %v1449, %v1460
        %v1463 = vsub.f32 %v1461, %v538
        %v1464 = vmul.f32 %v1456, %v1456
        %v1465 = vmul.f32 %v1463, %v1463
        %v1466 = vadd.f32 %v1464, %v1465
        %v1467 = vrsqrt.pop %v1466
        %v1468 = vmul.f32 %v1466, %v1467
        %vm1469 = vcmp.eq.f32.partialorder %v1466, inf
        %v1470 = vsel %vm1469, %v1466, %v1468
        %vm1471 = vcmp.eq.f32.partialorder %v1466, 0.0
        %v1472 = vand.u32 %v1466, 2147483648
        %v1473 = vsel %vm1471, %v1472, %v1470
        %v1474 = vadd.f32 %v1473, %v1456
        %v1475 = vmul.f32 %v1474, 0.5
        %v1476 = vmax.f32 %v1475, 0.0
        %v1477 = vrsqrt.pop %v1476
        %v1478 = vmul.f32 %v1476, %v1477
        %vm1479 = vcmp.eq.f32.partialorder %v1476, inf
        %v1480 = vsel %vm1479, %v1476, %v1478
        %vm1481 = vcmp.eq.f32.partialorder %v1476, 0.0
        %v1482 = vand.u32 %v1476, 2147483648
        %v1483 = vsel %vm1481, %v1482, %v1480
        %v1484 = vsub.f32 %v1473, %v1456
        %v1485 = vmul.f32 %v1484, 0.5
        %v1486 = vmax.f32 %v1485, 0.0
        %v1487 = vrsqrt.pop %v1486
        %v1488 = vmul.f32 %v1486, %v1487
        %vm1489 = vcmp.eq.f32.partialorder %v1486, inf
        %v1490 = vsel %vm1489, %v1486, %v1488
        %vm1491 = vcmp.eq.f32.partialorder %v1486, 0.0
        %v1492 = vand.u32 %v1486, 2147483648
        %v1493 = vsel %vm1491, %v1492, %v1490
        %vm1494 = vcmp.lt.f32.partialorder %v1463, 0.0
        %v1495 = vsub.f32 0.0, %v1493
        %v1496 = vsel %vm1494, %v1495, %v1493
        %v1497 = vadd.f32 %v1445, %v1446
        %v1498 = vrcp.pop %v1497
        %v1499 = vmul.f32 %v1497, %v1498
        %v1500 = vsub.f32 2.0, %v1499
        %v1501 = vmul.f32 %v1498, %v1500
        %v1502 = vmul.f32 %v1441, %v1501
        %v1503 = vsub.f32 0.0, %v1443
        %v1504 = vmul.f32 %v1503, %v1501
        %v1505 = vmul.f32 %v1483, 2.0
        %v1506 = vmul.f32 %v1496, 2.0
        %v1507 = vmul.f32 %v1505, %v1505
        %v1508 = vmul.f32 %v1506, %v1506
        %v1509 = vadd.f32 %v1507, %v1508
        %v1510 = vrcp.pop %v1509
        %v1511 = vmul.f32 %v1509, %v1510
        %v1512 = vsub.f32 2.0, %v1511
        %v1513 = vmul.f32 %v1510, %v1512
        %v1514 = vmul.f32 %v1505, %v1513
        %v1515 = vsub.f32 0.0, %v1506
        %v1516 = vmul.f32 %v1515, %v1513
        %s1517 = smul.f32 %s1444, 6.2831855
        %v1518 = vstv %s1517
        %v1519 = vmul.f32 %v1518, %v510
        %v1521 = vlaneseq
        %v1522 = vshrl.u32 %v1521, 7
        %v1523 = vsub.s32 0, %v1522
        %v1524 = vrot.slane %v1519, %v1523
        %v1526 = vmul.f32 %v1524, %v1483
        %v1527 = vmul.f32 %v1524, %v1496
        %v1528 = vmul.f32 %v1527, 1.442695
        %v1529 = vpow.pop %v1528
        %v1530 = vrcp.pop %v1529
        %v1531 = vmul.f32 %v1529, %v1530
        %v1532 = vsub.f32 2.0, %v1531
        %v1533 = vmul.f32 %v1530, %v1532
        %v1534 = vand.u32 2147483647, %v1526
        %vm1535 = vcmp.le.f32.partialorder %v1534, 0.7853982
        %vm1536 = vcmp.lt.s32.totalorder %v1526, 0
        %v1537 = vand.u32 %v1526, 2139095040
        %v1538 = vshrl.u32 %v1537, 23
        %v1539 = vsub.s32 %v1538, 127
        %v1540 = vand.u32 2147483647, %v1526
        %v1541 = vand.u32 %v1540, 8388607
        %v1542 = vor.u32 %v1541, 8388608
        %v1543 = vsub.s32 0, %v1542
        %v1544 = vadd.s32 %v1539, 1
        %vm1545 = vcmp.gt.s32.totalorder %v1544, 0
        %v1546 = vsel %vm1545, %v1544, 0
        %v1547 = vshrl.u32 %v1546, 5
        %v1548 = vand.u32 %v1546, 31
        %v1549 = vsub.s32 32, %v1548
        %v1550 = vshrl.u32 683565275, %v1549
        %v1551 = vshll.u32 683565275, %v1548
        %v1552 = vshrl.u32 2475754826, %v1549
        %v1553 = vor.u32 %v1551, %v1552
        %v1554 = vshll.u32 2475754826, %v1548
        %v1555 = vshrl.u32 2131351028, %v1549
        %v1556 = vor.u32 %v1554, %v1555
        %v1557 = vshll.u32 2131351028, %v1548
        %v1558 = vshrl.u32 2102212464, %v1549
        %v1559 = vor.u32 %v1557, %v1558
        %v1560 = vshll.u32 2102212464, %v1548
        %v1561 = vshrl.u32 920167782, %v1549
        %v1562 = vor.u32 %v1560, %v1561
        %v1563 = vshll.u32 920167782, %v1548
        %v1564 = vshrl.u32 1326507024, %v1549
        %v1565 = vor.u32 %v1563, %v1564
        %vm1566 = vcmp.lt.s32.totalorder %v1547, 1
        %vm1567 = vcmp.lt.s32.totalorder %v1547, 2
        %vm1568 = vcmp.lt.s32.totalorder %v1547, 3
        %vm1569 = vcmp.lt.s32.totalorder %v1547, 4
        %v1570 = vsel %vm1566, %v1550, %v1553
        %v1571 = vsel %vm1569, %v1559, 2102212464
        %v1572 = vsel %vm1568, %v1556, %v1571
        %v1573 = vsel %vm1567, %v1570, %v1572
        %v1574 = vsel %vm1566, %v1553, %v1556
        %v1575 = vsel %vm1569, %v1562, 920167782
        %v1576 = vsel %vm1568, %v1559, %v1575
        %v1577 = vsel %vm1567, %v1574, %v1576
        %v1578 = vsel %vm1566, %v1556, %v1559
        %v1579 = vsel %vm1569, %v1565, 1326507024
        %v1580 = vsel %vm1568, %v1562, %v1579
        %v1581 = vsel %vm1567, %v1578, %v1580
        %v1582 = vshll.u32 %v1542, 8
        %v1583 = vmul.u32.u64.compose %v1582, %v1581
        %v1584 = vextract.low.u32 %v1583
        %v1585 = vextract.high.u32 %v1583
        %v1586 = vmul.u32.u64.compose %v1582, %v1577
        %v1587 = vextract.low.u32 %v1586
        %v1588 = vextract.high.u32 %v1586
        %v1589 = vmul.u32 %v1582, %v1573
        %v1590 = vadd.s32 %v1585, %v1587
        %vm1591 = vc.u32 %v1585, %v1587
        %v1592 = vadd.s32 %v1588, 1
        %v1593 = vsel %vm1591, %v1592, %v1588
        %v1594 = vadd.s32 %v1589, %v1593
        %v1595 = vadd.s32 %v1594, 536870912
        %v1596 = vshrl.u32 %v1595, 30
        %v1597 = vshll.u32 %v1596, 30
        %v1598 = vsub.s32 %v1594, %v1597
        %vm1599 = vcmp.lt.s32.totalorder %v1598, 0
        %v1600 = vsub.s32 0, %v1598
        %v1601 = vsel %vm1599, %v1600, %v1598
        %v1602 = vclz %v1601
        %v1603 = vsub.s32 %v1602, 2
        %vm1604 = vcmp.gt.s32.totalorder 0, %v1603
        %v1605 = vsel %vm1604, 0, %v1603
        %v1606 = vsub.s32 32, %v1605
        %v1607 = vshll.u32 %v1598, %v1605
        %v1608 = vshrl.u32 %v1590, %v1606
        %v1609 = vor.u32 %v1607, %v1608
        %v1610 = vsub.s32 4294967266, %v1605
        %v1611 = vadd.s32 %v1610, 127
        %v1612 = vshll.u32 %v1611, 23
        %v1613 = vor.u32 4788187, %v1612
        %v1614 = vand.u32 2147483647, %v1613
        %v1616 = vcvt.s32.f32 %v1609
        %v1617 = vmul.f32 %v1616, %v1614
        %v1618 = vxor.u32 %v1617, 2147483648
        %v1619 = vsel %vm1536, %v1618, %v1617
        %v1620 = vsub.s32 4, %v1596
        %v1621 = vsel %vm1536, %v1620, %v1596
        %v1622 = vsel %vm1535, %v1526, %v1619
        %v1623 = vsel %vm1535, 0, %v1621
        %v1624 = vcosq.f32.pop %v1622
        %v1625 = vsinq.f32.pop %v1622
        %vm1626 = vweird.f32 %v1526
        %v1627 = vand.u32 %v1623, 3
        %vm1628 = vcmp.lt.s32.totalorder %v1627, 2
        %vm1629 = vcmp.eq.s32.totalorder %v1627, 0
        %v1630 = vxor.u32 %v1625, 2147483648
        %v1631 = vsel %vm1629, %v1624, %v1630
        %vm1632 = vcmp.eq.s32.totalorder %v1627, 2
        %v1633 = vxor.u32 %v1624, 2147483648
        %v1634 = vsel %vm1632, %v1633, %v1625
        %v1635 = vsel %vm1628, %v1631, %v1634
        %v1636 = vsel %vm1626, nan, %v1635
        %v1637 = vand.u32 2147483647, %v1526
        %vm1638 = vcmp.le.f32.partialorder %v1637, 0.7853982
        %vm1639 = vcmp.lt.s32.totalorder %v1526, 0
        %v1640 = vand.u32 %v1526, 2139095040
        %v1641 = vshrl.u32 %v1640, 23
        %v1642 = vsub.s32 %v1641, 127
        %v1643 = vand.u32 2147483647, %v1526
        %v1644 = vand.u32 %v1643, 8388607
        %v1645 = vor.u32 %v1644, 8388608
        %v1646 = vsub.s32 0, %v1645
        %v1647 = vadd.s32 %v1642, 1
        %vm1648 = vcmp.gt.s32.totalorder %v1647, 0
        %v1649 = vsel %vm1648, %v1647, 0
        %v1650 = vshrl.u32 %v1649, 5
        %v1651 = vand.u32 %v1649, 31
        %v1652 = vsub.s32 32, %v1651
        %v1653 = vshrl.u32 683565275, %v1652
        %v1654 = vshll.u32 683565275, %v1651
        %v1655 = vshrl.u32 2475754826, %v1652
        %v1656 = vor.u32 %v1654, %v1655
        %v1657 = vshll.u32 2475754826, %v1651
        %v1658 = vshrl.u32 2131351028, %v1652
        %v1659 = vor.u32 %v1657, %v1658
        %v1660 = vshll.u32 2131351028, %v1651
        %v1661 = vshrl.u32 2102212464, %v1652
        %v1662 = vor.u32 %v1660, %v1661
        %v1663 = vshll.u32 2102212464, %v1651
        %v1664 = vshrl.u32 920167782, %v1652
        %v1665 = vor.u32 %v1663, %v1664
        %v1666 = vshll.u32 920167782, %v1651
        %v1667 = vshrl.u32 1326507024, %v1652
        %v1668 = vor.u32 %v1666, %v1667
        %vm1669 = vcmp.lt.s32.totalorder %v1650, 1
        %vm1670 = vcmp.lt.s32.totalorder %v1650, 2
        %vm1671 = vcmp.lt.s32.totalorder %v1650, 3
        %vm1672 = vcmp.lt.s32.totalorder %v1650, 4
        %v1673 = vsel %vm1669, %v1653, %v1656
        %v1674 = vsel %vm1672, %v1662, 2102212464
        %v1675 = vsel %vm1671, %v1659, %v1674
        %v1676 = vsel %vm1670, %v1673, %v1675
        %v1677 = vsel %vm1669, %v1656, %v1659
        %v1678 = vsel %vm1672, %v1665, 920167782
        %v1679 = vsel %vm1671, %v1662, %v1678
        %v1680 = vsel %vm1670, %v1677, %v1679
        %v1681 = vsel %vm1669, %v1659, %v1662
        %v1682 = vsel %vm1672, %v1668, 1326507024
        %v1683 = vsel %vm1671, %v1665, %v1682
        %v1684 = vsel %vm1670, %v1681, %v1683
        %v1685 = vshll.u32 %v1645, 8
        %v1686 = vmul.u32.u64.compose %v1685, %v1684
        %v1687 = vextract.low.u32 %v1686
        %v1688 = vextract.high.u32 %v1686
        %v1689 = vmul.u32.u64.compose %v1685, %v1680
        %v1690 = vextract.low.u32 %v1689
        %v1691 = vextract.high.u32 %v1689
        %v1692 = vmul.u32 %v1685, %v1676
        %v1693 = vadd.s32 %v1688, %v1690
        %vm1694 = vc.u32 %v1688, %v1690
        %v1695 = vadd.s32 %v1691, 1
        %v1696 = vsel %vm1694, %v1695, %v1691
        %v1697 = vadd.s32 %v1692, %v1696
        %v1698 = vadd.s32 %v1697, 536870912
        %v1699 = vshrl.u32 %v1698, 30
        %v1700 = vshll.u32 %v1699, 30
        %v1701 = vsub.s32 %v1697, %v1700
        %vm1702 = vcmp.lt.s32.totalorder %v1701, 0
        %v1703 = vsub.s32 0, %v1701
        %v1704 = vsel %vm1702, %v1703, %v1701
        %v1705 = vclz %v1704
        %v1706 = vsub.s32 %v1705, 2
        %vm1707 = vcmp.gt.s32.totalorder 0, %v1706
        %v1708 = vsel %vm1707, 0, %v1706
        %v1709 = vsub.s32 32, %v1708
        %v1710 = vshll.u32 %v1701, %v1708
        %v1711 = vshrl.u32 %v1693, %v1709
        %v1712 = vor.u32 %v1710, %v1711
        %v1713 = vsub.s32 4294967266, %v1708
        %v1714 = vadd.s32 %v1713, 127
        %v1715 = vshll.u32 %v1714, 23
        %v1716 = vor.u32 4788187, %v1715
        %v1717 = vand.u32 2147483647, %v1716
        %v1719 = vcvt.s32.f32 %v1712
        %v1720 = vmul.f32 %v1719, %v1717
        %v1721 = vxor.u32 %v1720, 2147483648
        %v1722 = vsel %vm1639, %v1721, %v1720
        %v1723 = vsub.s32 4, %v1699
        %v1724 = vsel %vm1639, %v1723, %v1699
        %v1725 = vsel %vm1638, %v1526, %v1722
        %v1726 = vsel %vm1638, 0, %v1724
        %v1727 = vcosq.f32.pop %v1725
        %v1728 = vsinq.f32.pop %v1725
        %vm1729 = vweird.f32 %v1526
        %v1730 = vadd.s32 %v1726, 3
        %v1731 = vand.u32 %v1730, 3
        %vm1732 = vcmp.lt.s32.totalorder %v1731, 2
        %vm1733 = vcmp.eq.s32.totalorder %v1731, 0
        %v1734 = vxor.u32 %v1728, 2147483648
        %v1735 = vsel %vm1733, %v1727, %v1734
        %vm1736 = vcmp.eq.s32.totalorder %v1731, 2
        %v1737 = vxor.u32 %v1727, 2147483648
        %v1738 = vsel %vm1736, %v1737, %v1728
        %v1739 = vsel %vm1732, %v1735, %v1738
        %v1740 = vsel %vm1729, nan, %v1739
        %v1741 = vmul.f32 %v1529, %v1636
        %v1742 = vsub.f32 0.0, %v1529
        %v1743 = vmul.f32 %v1742, %v1740
        %v1744 = vmul.f32 %v1533, %v1636
        %v1745 = vmul.f32 %v1533, %v1740
        %v1746 = vadd.f32 %v560, %v1483
        %v1747 = vadd.f32 %v573, %v1496
        %v1748 = vsub.f32 %v560, %v1483
        %v1749 = vsub.f32 %v573, %v1496
        %v1750 = vmul.f32 %v1746, %v687
        %v1751 = vmul.f32 %v1747, %v689
        %v1752 = vsub.f32 %v1750, %v1751
        %v1753 = vmul.f32 %v1746, %v689
        %v1754 = vmul.f32 %v1747, %v687
        %v1755 = vadd.f32 %v1753, %v1754
        %v1756 = vmul.f32 %v1748, %v687
        %v1757 = vmul.f32 %v1749, %v689
        %v1758 = vsub.f32 %v1756, %v1757
        %v1759 = vmul.f32 %v1748, %v689
        %v1760 = vmul.f32 %v1749, %v687
        %v1761 = vadd.f32 %v1759, %v1760
        %v1762 = vmul.f32 %v1746, %v1514
        %v1763 = vmul.f32 %v1747, %v1516
        %v1764 = vsub.f32 %v1762, %v1763
        %v1765 = vmul.f32 %v1746, %v1516
        %v1766 = vmul.f32 %v1747, %v1514
        %v1767 = vadd.f32 %v1765, %v1766
        %v1768 = vmul.f32 %v1748, %v1514
        %v1769 = vmul.f32 %v1749, %v1516
        %v1770 = vsub.f32 %v1768, %v1769
        %v1771 = vmul.f32 %v1748, %v1516
        %v1772 = vmul.f32 %v1749, %v1514
        %v1773 = vadd.f32 %v1771, %v1772
        %v1774 = vsub.f32 0.0, %v1770
        %v1775 = vsub.f32 0.0, %v1773
        %v1776 = vmul.f32 %v1752, %v1741
        %v1777 = vmul.f32 %v1755, %v1743
        %v1778 = vsub.f32 %v1776, %v1777
        %v1779 = vmul.f32 %v1752, %v1743
        %v1780 = vmul.f32 %v1755, %v1741
        %v1781 = vadd.f32 %v1779, %v1780
        %v1782 = vmul.f32 %v1758, %v1744
        %v1783 = vmul.f32 %v1761, %v1745
        %v1784 = vsub.f32 %v1782, %v1783
        %v1785 = vmul.f32 %v1758, %v1745
        %v1786 = vmul.f32 %v1761, %v1744
        %v1787 = vadd.f32 %v1785, %v1786
        %v1788 = vmul.f32 %v1758, %v1741
        %v1789 = vmul.f32 %v1761, %v1743
        %v1790 = vsub.f32 %v1788, %v1789
        %v1791 = vmul.f32 %v1758, %v1743
        %v1792 = vmul.f32 %v1761, %v1741
        %v1793 = vadd.f32 %v1791, %v1792
        %v1794 = vmul.f32 %v1752, %v1744
        %v1795 = vmul.f32 %v1755, %v1745
        %v1796 = vsub.f32 %v1794, %v1795
        %v1797 = vmul.f32 %v1752, %v1745
        %v1798 = vmul.f32 %v1755, %v1744
        %v1799 = vadd.f32 %v1797, %v1798
        %v1800 = vmul.f32 %v1778, %v1764
        %v1801 = vmul.f32 %v1781, %v1767
        %v1802 = vsub.f32 %v1800, %v1801
        %v1803 = vmul.f32 %v1778, %v1767
        %v1804 = vmul.f32 %v1781, %v1764
        %v1805 = vadd.f32 %v1803, %v1804
        %v1806 = vmul.f32 %v1784, %v1774
        %v1807 = vmul.f32 %v1787, %v1775
        %v1808 = vsub.f32 %v1806, %v1807
        %v1809 = vmul.f32 %v1784, %v1775
        %v1810 = vmul.f32 %v1787, %v1774
        %v1811 = vadd.f32 %v1809, %v1810
        %v1812 = vadd.f32 %v1802, %v1808
        %v1813 = vadd.f32 %v1805, %v1811
        %v1814 = vmul.f32 %v1778, %v1774
        %v1815 = vmul.f32 %v1781, %v1775
        %v1816 = vsub.f32 %v1814, %v1815
        %v1817 = vmul.f32 %v1778, %v1775
        %v1818 = vmul.f32 %v1781, %v1774
        %v1819 = vadd.f32 %v1817, %v1818
        %v1820 = vmul.f32 %v1784, %v1764
        %v1821 = vmul.f32 %v1787, %v1767
        %v1822 = vsub.f32 %v1820, %v1821
        %v1823 = vmul.f32 %v1784, %v1767
        %v1824 = vmul.f32 %v1787, %v1764
        %v1825 = vadd.f32 %v1823, %v1824
        %v1826 = vadd.f32 %v1816, %v1822
        %v1827 = vadd.f32 %v1819, %v1825
        %v1828 = vmul.f32 %v1790, %v1764
        %v1829 = vmul.f32 %v1793, %v1767
        %v1830 = vsub.f32 %v1828, %v1829
        %v1831 = vmul.f32 %v1790, %v1767
        %v1832 = vmul.f32 %v1793, %v1764
        %v1833 = vadd.f32 %v1831, %v1832
        %v1834 = vmul.f32 %v1796, %v1774
        %v1835 = vmul.f32 %v1799, %v1775
        %v1836 = vsub.f32 %v1834, %v1835
        %v1837 = vmul.f32 %v1796, %v1775
        %v1838 = vmul.f32 %v1799, %v1774
        %v1839 = vadd.f32 %v1837, %v1838
        %v1840 = vadd.f32 %v1830, %v1836
        %v1841 = vadd.f32 %v1833, %v1839
        %v1842 = vmul.f32 %v1790, %v1774
        %v1843 = vmul.f32 %v1793, %v1775
        %v1844 = vsub.f32 %v1842, %v1843
        %v1845 = vmul.f32 %v1790, %v1775
        %v1846 = vmul.f32 %v1793, %v1774
        %v1847 = vadd.f32 %v1845, %v1846
        %v1848 = vmul.f32 %v1796, %v1764
        %v1849 = vmul.f32 %v1799, %v1767
        %v1850 = vsub.f32 %v1848, %v1849
        %v1851 = vmul.f32 %v1796, %v1767
        %v1852 = vmul.f32 %v1799, %v1764
        %v1853 = vadd.f32 %v1851, %v1852
        %v1854 = vadd.f32 %v1844, %v1850
        %v1855 = vadd.f32 %v1847, %v1853
        %v1856 = vmul.f32 %v1200, %v1812
        %v1857 = vmul.f32 %v1201, %v1813
        %v1858 = vsub.f32 %v1856, %v1857
        %v1859 = vmul.f32 %v1200, %v1813
        %v1860 = vmul.f32 %v1201, %v1812
        %v1861 = vadd.f32 %v1859, %v1860
        %v1862 = vmul.f32 %v1214, %v1840
        %v1863 = vmul.f32 %v1215, %v1841
        %v1864 = vsub.f32 %v1862, %v1863
        %v1865 = vmul.f32 %v1214, %v1841
        %v1866 = vmul.f32 %v1215, %v1840
        %v1867 = vadd.f32 %v1865, %v1866
        %v1868 = vadd.f32 %v1858, %v1864
        %v1869 = vadd.f32 %v1861, %v1867
        %v1870 = vmul.f32 %v1200, %v1826
        %v1871 = vmul.f32 %v1201, %v1827
        %v1872 = vsub.f32 %v1870, %v1871
        %v1873 = vmul.f32 %v1200, %v1827
        %v1874 = vmul.f32 %v1201, %v1826
        %v1875 = vadd.f32 %v1873, %v1874
        %v1876 = vmul.f32 %v1214, %v1854
        %v1877 = vmul.f32 %v1215, %v1855
        %v1878 = vsub.f32 %v1876, %v1877
        %v1879 = vmul.f32 %v1214, %v1855
        %v1880 = vmul.f32 %v1215, %v1854
        %v1881 = vadd.f32 %v1879, %v1880
        %v1882 = vadd.f32 %v1872, %v1878
        %v1883 = vadd.f32 %v1875, %v1881
        %v1884 = vmul.f32 %v1228, %v1812
        %v1885 = vmul.f32 %v1229, %v1813
        %v1886 = vsub.f32 %v1884, %v1885
        %v1887 = vmul.f32 %v1228, %v1813
        %v1888 = vmul.f32 %v1229, %v1812
        %v1889 = vadd.f32 %v1887, %v1888
        %v1890 = vmul.f32 %v1242, %v1840
        %v1891 = vmul.f32 %v1243, %v1841
        %v1892 = vsub.f32 %v1890, %v1891
        %v1893 = vmul.f32 %v1242, %v1841
        %v1894 = vmul.f32 %v1243, %v1840
        %v1895 = vadd.f32 %v1893, %v1894
        %v1896 = vadd.f32 %v1886, %v1892
        %v1897 = vadd.f32 %v1889, %v1895
        %v1898 = vmul.f32 %v1228, %v1826
        %v1899 = vmul.f32 %v1229, %v1827
        %v1900 = vsub.f32 %v1898, %v1899
        %v1901 = vmul.f32 %v1228, %v1827
        %v1902 = vmul.f32 %v1229, %v1826
        %v1903 = vadd.f32 %v1901, %v1902
        %v1904 = vmul.f32 %v1242, %v1854
        %v1905 = vmul.f32 %v1243, %v1855
        %v1906 = vsub.f32 %v1904, %v1905
        %v1907 = vmul.f32 %v1242, %v1855
        %v1908 = vmul.f32 %v1243, %v1854
        %v1909 = vadd.f32 %v1907, %v1908
        %v1910 = vadd.f32 %v1900, %v1906
        %v1911 = vadd.f32 %v1903, %v1909
        %v1912 = vmul.f32 %v1454, %v560
        %v1913 = vmul.f32 %v1461, %v573
        %v1914 = vsub.f32 %v1912, %v1913
        %v1915 = vmul.f32 %v1454, %v573
        %v1916 = vmul.f32 %v1461, %v560
        %v1917 = vadd.f32 %v1915, %v1916
        %v1918 = vadd.f32 %v1914, %v1483
        %v1919 = vadd.f32 %v1917, %v1496
        %v1920 = vsub.f32 %v1914, %v1483
        %v1921 = vsub.f32 %v1917, %v1496
        %v1923 = vlaneseq
        %v1924 = vshrl.u32 %v1923, 7
        %v1925 = vsub.s32 0, %v1924
        %v1926 = vrot.slane %v1502, %v1925
        %v1928 = vmul.f32 %v1926, %v687
        %v1930 = vlaneseq
        %v1931 = vshrl.u32 %v1930, 7
        %v1932 = vsub.s32 0, %v1931
        %v1933 = vrot.slane %v1504, %v1932
        %v1935 = vmul.f32 %v1933, %v689
        %v1936 = vsub.f32 %v1928, %v1935
        %v1937 = vmul.f32 %v1926, %v689
        %v1938 = vmul.f32 %v1933, %v687
        %v1939 = vadd.f32 %v1937, %v1938
        %v1940 = vmul.f32 %v1926, %v1514
        %v1941 = vmul.f32 %v1933, %v1516
        %v1942 = vsub.f32 %v1940, %v1941
        %v1943 = vmul.f32 %v1926, %v1516
        %v1944 = vmul.f32 %v1933, %v1514
        %v1945 = vadd.f32 %v1943, %v1944
        %v1946 = vmul.f32 %v1918, %v1936
        %v1947 = vmul.f32 %v1919, %v1939
        %v1948 = vsub.f32 %v1946, %v1947
        %v1949 = vmul.f32 %v1918, %v1939
        %v1950 = vmul.f32 %v1919, %v1936
        %v1951 = vadd.f32 %v1949, %v1950
        %v1952 = vmul.f32 %v1920, %v1936
        %v1953 = vmul.f32 %v1921, %v1939
        %v1954 = vsub.f32 %v1952, %v1953
        %v1955 = vmul.f32 %v1920, %v1939
        %v1956 = vmul.f32 %v1921, %v1936
        %v1957 = vadd.f32 %v1955, %v1956
        %v1958 = vmul.f32 %v1918, %v1942
        %v1959 = vmul.f32 %v1919, %v1945
        %v1960 = vsub.f32 %v1958, %v1959
        %v1961 = vmul.f32 %v1918, %v1945
        %v1962 = vmul.f32 %v1919, %v1942
        %v1963 = vadd.f32 %v1961, %v1962
        %v1964 = vmul.f32 %v1920, %v1942
        %v1965 = vmul.f32 %v1921, %v1945
        %v1966 = vsub.f32 %v1964, %v1965
        %v1967 = vmul.f32 %v1920, %v1945
        %v1968 = vmul.f32 %v1921, %v1942
        %v1969 = vadd.f32 %v1967, %v1968
        %v1970 = vsub.f32 0.0, %v1966
        %v1971 = vsub.f32 0.0, %v1969
        %v1972 = vmul.f32 %v1948, %v1741
        %v1973 = vmul.f32 %v1951, %v1743
        %v1974 = vsub.f32 %v1972, %v1973
        %v1975 = vmul.f32 %v1948, %v1743
        %v1976 = vmul.f32 %v1951, %v1741
        %v1977 = vadd.f32 %v1975, %v1976
        %v1978 = vmul.f32 %v1954, %v1744
        %v1979 = vmul.f32 %v1957, %v1745
        %v1980 = vsub.f32 %v1978, %v1979
        %v1981 = vmul.f32 %v1954, %v1745
        %v1982 = vmul.f32 %v1957, %v1744
        %v1983 = vadd.f32 %v1981, %v1982
        %v1984 = vmul.f32 %v1954, %v1741
        %v1985 = vmul.f32 %v1957, %v1743
        %v1986 = vsub.f32 %v1984, %v1985
        %v1987 = vmul.f32 %v1954, %v1743
        %v1988 = vmul.f32 %v1957, %v1741
        %v1989 = vadd.f32 %v1987, %v1988
        %v1990 = vmul.f32 %v1948, %v1744
        %v1991 = vmul.f32 %v1951, %v1745
        %v1992 = vsub.f32 %v1990, %v1991
        %v1993 = vmul.f32 %v1948, %v1745
        %v1994 = vmul.f32 %v1951, %v1744
        %v1995 = vadd.f32 %v1993, %v1994
        %v1996 = vmul.f32 %v1974, %v1960
        %v1997 = vmul.f32 %v1977, %v1963
        %v1998 = vsub.f32 %v1996, %v1997
        %v1999 = vmul.f32 %v1974, %v1963
        %v2000 = vmul.f32 %v1977, %v1960
        %v2001 = vadd.f32 %v1999, %v2000
        %v2002 = vmul.f32 %v1980, %v1970
        %v2003 = vmul.f32 %v1983, %v1971
        %v2004 = vsub.f32 %v2002, %v2003
        %v2005 = vmul.f32 %v1980, %v1971
        %v2006 = vmul.f32 %v1983, %v1970
        %v2007 = vadd.f32 %v2005, %v2006
        %v2008 = vadd.f32 %v1998, %v2004
        %v2009 = vadd.f32 %v2001, %v2007
        %v2010 = vmul.f32 %v1974, %v1970
        %v2011 = vmul.f32 %v1977, %v1971
        %v2012 = vsub.f32 %v2010, %v2011
        %v2013 = vmul.f32 %v1974, %v1971
        %v2014 = vmul.f32 %v1977, %v1970
        %v2015 = vadd.f32 %v2013, %v2014
        %v2016 = vmul.f32 %v1980, %v1960
        %v2017 = vmul.f32 %v1983, %v1963
        %v2018 = vsub.f32 %v2016, %v2017
        %v2019 = vmul.f32 %v1980, %v1963
        %v2020 = vmul.f32 %v1983, %v1960
        %v2021 = vadd.f32 %v2019, %v2020
        %v2022 = vadd.f32 %v2012, %v2018
        %v2023 = vadd.f32 %v2015, %v2021
        %v2024 = vmul.f32 %v1986, %v1960
        %v2025 = vmul.f32 %v1989, %v1963
        %v2026 = vsub.f32 %v2024, %v2025
        %v2027 = vmul.f32 %v1986, %v1963
        %v2028 = vmul.f32 %v1989, %v1960
        %v2029 = vadd.f32 %v2027, %v2028
        %v2030 = vmul.f32 %v1992, %v1970
        %v2031 = vmul.f32 %v1995, %v1971
        %v2032 = vsub.f32 %v2030, %v2031
        %v2033 = vmul.f32 %v1992, %v1971
        %v2034 = vmul.f32 %v1995, %v1970
        %v2035 = vadd.f32 %v2033, %v2034
        %v2036 = vadd.f32 %v2026, %v2032
        %v2037 = vadd.f32 %v2029, %v2035
        %v2038 = vmul.f32 %v1986, %v1970
        %v2039 = vmul.f32 %v1989, %v1971
        %v2040 = vsub.f32 %v2038, %v2039
        %v2041 = vmul.f32 %v1986, %v1971
        %v2042 = vmul.f32 %v1989, %v1970
        %v2043 = vadd.f32 %v2041, %v2042
        %v2044 = vmul.f32 %v1992, %v1960
        %v2045 = vmul.f32 %v1995, %v1963
        %v2046 = vsub.f32 %v2044, %v2045
        %v2047 = vmul.f32 %v1992, %v1963
        %v2048 = vmul.f32 %v1995, %v1960
        %v2049 = vadd.f32 %v2047, %v2048
        %v2050 = vadd.f32 %v2040, %v2046
        %v2051 = vadd.f32 %v2043, %v2049
        %v2052 = vmul.f32 %v1396, %v2008
        %v2053 = vmul.f32 %v1397, %v2009
        %v2054 = vsub.f32 %v2052, %v2053
        %v2055 = vmul.f32 %v1396, %v2009
        %v2056 = vmul.f32 %v1397, %v2008
        %v2057 = vadd.f32 %v2055, %v2056
        %v2058 = vmul.f32 %v1410, %v2036
        %v2059 = vmul.f32 %v1411, %v2037
        %v2060 = vsub.f32 %v2058, %v2059
        %v2061 = vmul.f32 %v1410, %v2037
        %v2062 = vmul.f32 %v1411, %v2036
        %v2063 = vadd.f32 %v2061, %v2062
        %v2064 = vadd.f32 %v2054, %v2060
        %v2065 = vadd.f32 %v2057, %v2063
        %v2066 = vmul.f32 %v1396, %v2022
        %v2067 = vmul.f32 %v1397, %v2023
        %v2068 = vsub.f32 %v2066, %v2067
        %v2069 = vmul.f32 %v1396, %v2023
        %v2070 = vmul.f32 %v1397, %v2022
        %v2071 = vadd.f32 %v2069, %v2070
        %v2072 = vmul.f32 %v1410, %v2050
        %v2073 = vmul.f32 %v1411, %v2051
        %v2074 = vsub.f32 %v2072, %v2073
        %v2075 = vmul.f32 %v1410, %v2051
        %v2076 = vmul.f32 %v1411, %v2050
        %v2077 = vadd.f32 %v2075, %v2076
        %v2078 = vadd.f32 %v2068, %v2074
        %v2079 = vadd.f32 %v2071, %v2077
        %v2080 = vmul.f32 %v1424, %v2008
        %v2081 = vmul.f32 %v1425, %v2009
        %v2082 = vsub.f32 %v2080, %v2081
        %v2083 = vmul.f32 %v1424, %v2009
        %v2084 = vmul.f32 %v1425, %v2008
        %v2085 = vadd.f32 %v2083, %v2084
        %v2086 = vmul.f32 %v1438, %v2036
        %v2087 = vmul.f32 %v1439, %v2037
        %v2088 = vsub.f32 %v2086, %v2087
        %v2089 = vmul.f32 %v1438, %v2037
        %v2090 = vmul.f32 %v1439, %v2036
        %v2091 = vadd.f32 %v2089, %v2090
        %v2092 = vadd.f32 %v2082, %v2088
        %v2093 = vadd.f32 %v2085, %v2091
        %v2094 = vmul.f32 %v1424, %v2022
        %v2095 = vmul.f32 %v1425, %v2023
        %v2096 = vsub.f32 %v2094, %v2095
        %v2097 = vmul.f32 %v1424, %v2023
        %v2098 = vmul.f32 %v1425, %v2022
        %v2099 = vadd.f32 %v2097, %v2098
        %v2100 = vmul.f32 %v1438, %v2050
        %v2101 = vmul.f32 %v1439, %v2051
        %v2102 = vsub.f32 %v2100, %v2101
        %v2103 = vmul.f32 %v1438, %v2051
        %v2104 = vmul.f32 %v1439, %v2050
        %v2105 = vadd.f32 %v2103, %v2104
        %v2106 = vadd.f32 %v2096, %v2102
        %v2107 = vadd.f32 %v2099, %v2105
        %v2108 = vadd.f32 %v560, %v664
        %v2109 = vadd.f32 %v573, %v677
        %v2110 = vmul.f32 %v2108, %v687
        %v2111 = vmul.f32 %v2109, %v689
        %v2112 = vsub.f32 %v2110, %v2111
        %v2113 = vmul.f32 %v2108, %v689
        %v2114 = vmul.f32 %v2109, %v687
        %v2115 = vadd.f32 %v2113, %v2114
        %v2116 = vsub.f32 %v560, %v664
        %v2117 = vsub.f32 %v573, %v677
        %v2118 = vmul.f32 %v2116, %v687
        %v2119 = vmul.f32 %v2117, %v689
        %v2120 = vsub.f32 %v2118, %v2119
        %v2121 = vmul.f32 %v2116, %v689
        %v2122 = vmul.f32 %v2117, %v687
        %v2123 = vadd.f32 %v2121, %v2122
        %v2124 = vmul.f32 %v1868, %v2112
        %v2125 = vmul.f32 %v1869, %v2115
        %v2126 = vsub.f32 %v2124, %v2125
        %v2127 = vmul.f32 %v1868, %v2115
        %v2128 = vmul.f32 %v1869, %v2112
        %v2129 = vadd.f32 %v2127, %v2128
        %v2130 = vmul.f32 %v1882, %v2120
        %v2131 = vmul.f32 %v1883, %v2123
        %v2132 = vsub.f32 %v2130, %v2131
        %v2133 = vmul.f32 %v1882, %v2123
        %v2134 = vmul.f32 %v1883, %v2120
        %v2135 = vadd.f32 %v2133, %v2134
        %v2136 = vadd.f32 %v2126, %v2132
        %v2137 = vadd.f32 %v2129, %v2135
        %v2138 = vmul.f32 %v1868, %v2120
        %v2139 = vmul.f32 %v1869, %v2123
        %v2140 = vsub.f32 %v2138, %v2139
        %v2141 = vmul.f32 %v1868, %v2123
        %v2142 = vmul.f32 %v1869, %v2120
        %v2143 = vadd.f32 %v2141, %v2142
        %v2144 = vmul.f32 %v1882, %v2112
        %v2145 = vmul.f32 %v1883, %v2115
        %v2146 = vsub.f32 %v2144, %v2145
        %v2147 = vmul.f32 %v1882, %v2115
        %v2148 = vmul.f32 %v1883, %v2112
        %v2149 = vadd.f32 %v2147, %v2148
        %v2150 = vadd.f32 %v2140, %v2146
        %v2151 = vadd.f32 %v2143, %v2149
        %v2152 = vmul.f32 %v1896, %v2112
        %v2153 = vmul.f32 %v1897, %v2115
        %v2154 = vsub.f32 %v2152, %v2153
        %v2155 = vmul.f32 %v1896, %v2115
        %v2156 = vmul.f32 %v1897, %v2112
        %v2157 = vadd.f32 %v2155, %v2156
        %v2158 = vmul.f32 %v1910, %v2120
        %v2159 = vmul.f32 %v1911, %v2123
        %v2160 = vsub.f32 %v2158, %v2159
        %v2161 = vmul.f32 %v1910, %v2123
        %v2162 = vmul.f32 %v1911, %v2120
        %v2163 = vadd.f32 %v2161, %v2162
        %v2164 = vadd.f32 %v2154, %v2160
        %v2165 = vadd.f32 %v2157, %v2163
        %v2166 = vmul.f32 %v1896, %v2120
        %v2167 = vmul.f32 %v1897, %v2123
        %v2168 = vsub.f32 %v2166, %v2167
        %v2169 = vmul.f32 %v1896, %v2123
        %v2170 = vmul.f32 %v1897, %v2120
        %v2171 = vadd.f32 %v2169, %v2170
        %v2172 = vmul.f32 %v1910, %v2112
        %v2173 = vmul.f32 %v1911, %v2115
        %v2174 = vsub.f32 %v2172, %v2173
        %v2175 = vmul.f32 %v1910, %v2115
        %v2176 = vmul.f32 %v1911, %v2112
        %v2177 = vadd.f32 %v2175, %v2176
        %v2178 = vadd.f32 %v2168, %v2174
        %v2179 = vadd.f32 %v2171, %v2177
        %v2180 = vmul.f32 %v635, %v560
        %v2181 = vmul.f32 %v642, %v573
        %v2182 = vsub.f32 %v2180, %v2181
        %v2183 = vmul.f32 %v635, %v573
        %v2184 = vmul.f32 %v642, %v560
        %v2185 = vadd.f32 %v2183, %v2184
        %v2187 = vlaneseq
        %v2188 = vshrl.u32 %v2187, 7
        %v2189 = vsub.s32 0, %v2188
        %v2190 = vrot.slane %v715, %v2189
        %v2192 = vmul.f32 %v2190, %v687
        %v2194 = vlaneseq
        %v2195 = vshrl.u32 %v2194, 7
        %v2196 = vsub.s32 0, %v2195
        %v2197 = vrot.slane %v717, %v2196
        %v2199 = vmul.f32 %v2197, %v689
        %v2200 = vsub.f32 %v2192, %v2199
        %v2201 = vmul.f32 %v2190, %v689
        %v2202 = vmul.f32 %v2197, %v687
        %v2203 = vadd.f32 %v2201, %v2202
        %v2204 = vadd.f32 %v2182, %v664
        %v2205 = vadd.f32 %v2185, %v677
        %v2206 = vmul.f32 %v2204, %v2200
        %v2207 = vmul.f32 %v2205, %v2203
        %v2208 = vsub.f32 %v2206, %v2207
        %v2209 = vmul.f32 %v2204, %v2203
        %v2210 = vmul.f32 %v2205, %v2200
        %v2211 = vadd.f32 %v2209, %v2210
        %v2212 = vsub.f32 %v2182, %v664
        %v2213 = vsub.f32 %v2185, %v677
        %v2214 = vmul.f32 %v2212, %v2200
        %v2215 = vmul.f32 %v2213, %v2203
        %v2216 = vsub.f32 %v2214, %v2215
        %v2217 = vmul.f32 %v2212, %v2203
        %v2218 = vmul.f32 %v2213, %v2200
        %v2219 = vadd.f32 %v2217, %v2218
        %v2220 = vmul.f32 %v2064, %v2208
        %v2221 = vmul.f32 %v2065, %v2211
        %v2222 = vsub.f32 %v2220, %v2221
        %v2223 = vmul.f32 %v2064, %v2211
        %v2224 = vmul.f32 %v2065, %v2208
        %v2225 = vadd.f32 %v2223, %v2224
        %v2226 = vmul.f32 %v2078, %v2216
        %v2227 = vmul.f32 %v2079, %v2219
        %v2228 = vsub.f32 %v2226, %v2227
        %v2229 = vmul.f32 %v2078, %v2219
        %v2230 = vmul.f32 %v2079, %v2216
        %v2231 = vadd.f32 %v2229, %v2230
        %v2232 = vadd.f32 %v2222, %v2228
        %v2233 = vadd.f32 %v2225, %v2231
        %v2234 = vmul.f32 %v2064, %v2216
        %v2235 = vmul.f32 %v2065, %v2219
        %v2236 = vsub.f32 %v2234, %v2235
        %v2237 = vmul.f32 %v2064, %v2219
        %v2238 = vmul.f32 %v2065, %v2216
        %v2239 = vadd.f32 %v2237, %v2238
        %v2240 = vmul.f32 %v2078, %v2208
        %v2241 = vmul.f32 %v2079, %v2211
        %v2242 = vsub.f32 %v2240, %v2241
        %v2243 = vmul.f32 %v2078, %v2211
        %v2244 = vmul.f32 %v2079, %v2208
        %v2245 = vadd.f32 %v2243, %v2244
        %v2246 = vadd.f32 %v2236, %v2242
        %v2247 = vadd.f32 %v2239, %v2245
        %v2248 = vmul.f32 %v2092, %v2208
        %v2249 = vmul.f32 %v2093, %v2211
        %v2250 = vsub.f32 %v2248, %v2249
        %v2251 = vmul.f32 %v2092, %v2211
        %v2252 = vmul.f32 %v2093, %v2208
        %v2253 = vadd.f32 %v2251, %v2252
        %v2254 = vmul.f32 %v2106, %v2216
        %v2255 = vmul.f32 %v2107, %v2219
        %v2256 = vsub.f32 %v2254, %v2255
        %v2257 = vmul.f32 %v2106, %v2219
        %v2258 = vmul.f32 %v2107, %v2216
        %v2259 = vadd.f32 %v2257, %v2258
        %v2260 = vadd.f32 %v2250, %v2256
        %v2261 = vadd.f32 %v2253, %v2259
        %v2262 = vmul.f32 %v2092, %v2216
        %v2263 = vmul.f32 %v2093, %v2219
        %v2264 = vsub.f32 %v2262, %v2263
        %v2265 = vmul.f32 %v2092, %v2219
        %v2266 = vmul.f32 %v2093, %v2216
        %v2267 = vadd.f32 %v2265, %v2266
        %v2268 = vmul.f32 %v2106, %v2208
        %v2269 = vmul.f32 %v2107, %v2211
        %v2270 = vsub.f32 %v2268, %v2269
        %v2271 = vmul.f32 %v2106, %v2211
        %v2272 = vmul.f32 %v2107, %v2208
        %v2273 = vadd.f32 %v2271, %v2272
        %v2274 = vadd.f32 %v2264, %v2270
        %v2275 = vadd.f32 %v2267, %v2273
        %2276 = vst [vmem:[%s489] sm:$0xff] %v2136
        %s2277 = scalar_lea.vmem %s489, 8 [#allocation7]
        %2278 = vst [vmem:[%s2277] sm:$0xff] %v2137
        %s2279 = scalar_lea.vmem %s489, 64 [#allocation7]
        %2280 = vst [vmem:[%s2279] sm:$0xff] %v2232
        %s2281 = scalar_lea.vmem %s489, 72 [#allocation7]
        %2282 = vst [vmem:[%s2281] sm:$0xff] %v2233
        %s2283 = scalar_lea.vmem %s489, 16 [#allocation7]
        %2284 = vst [vmem:[%s2283] sm:$0xff] %v2150
        %s2285 = scalar_lea.vmem %s489, 24 [#allocation7]
        %2286 = vst [vmem:[%s2285] sm:$0xff] %v2151
        %s2287 = scalar_lea.vmem %s489, 80 [#allocation7]
        %2288 = vst [vmem:[%s2287] sm:$0xff] %v2246
        %s2289 = scalar_lea.vmem %s489, 88 [#allocation7]
        %2290 = vst [vmem:[%s2289] sm:$0xff] %v2247
        %s2291 = scalar_lea.vmem %s489, 32 [#allocation7]
        %2292 = vst [vmem:[%s2291] sm:$0xff] %v2164
        %s2293 = scalar_lea.vmem %s489, 40 [#allocation7]
        %2294 = vst [vmem:[%s2293] sm:$0xff] %v2165
        %s2295 = scalar_lea.vmem %s489, 96 [#allocation7]
        %2296 = vst [vmem:[%s2295] sm:$0xff] %v2260
        %s2297 = scalar_lea.vmem %s489, 104 [#allocation7]
        %2298 = vst [vmem:[%s2297] sm:$0xff] %v2261
        %s2299 = scalar_lea.vmem %s489, 48 [#allocation7]
        %2300 = vst [vmem:[%s2299] sm:$0xff] %v2178
        %s2301 = scalar_lea.vmem %s489, 56 [#allocation7]
        %2302 = vst [vmem:[%s2301] sm:$0xff] %v2179
        %s2303 = scalar_lea.vmem %s489, 112 [#allocation7]
        %2304 = vst [vmem:[%s2303] sm:$0xff] %v2274
        %s2305 = scalar_lea.vmem %s489, 120 [#allocation7]
        %2306 = vst [vmem:[%s2305] sm:$0xff] %v2275
        %s2307 = sand.u32 %s256, 1
        %s2308 = scalar_lea.sflag [#allocation3], %s2307
        %s2309 = sand.u32 %s256, 1
        %s2310 = smul.addr %s2309, 128
        %s2311 = scalar_lea.vmem [#allocation7], %s2310
        // Predicated region
        $region129: #{tpu_custom_call.1} parent=115 // pred_check
          %p2312 = pneg %p266
        $region130: #{tpu_custom_call.1} parent=115 // pred_check_branch
          %2314 = sbr.rel (%p2312) target = $region132
        $region131: #{tpu_custom_call.1} parent=115 // pred_region
          %s2316 = ssub.s32 2048, 2048
          %2317 = vsyncadd %s2308, %s2316
          %s2318 = smul.addr %s24, 128
          %s2319 = scalar_lea.hbm %s9, %s2318
          %s2320 = sshll.u32 %s2311, 4
          %s2321 = int_to_ptr.vmem [resolvable:$true] %s2320
          %2326 = dma.vmem_to_hbm [thread:$0]  %s2321, 2048, %s2319, %s2308, 128, 256, 8
        $region132: #{tpu_custom_call.1} parent=115 // pred_fallthru
          _
      $region116: #{tpu_custom_call.1} parent=5 // pred_fallthru
        _
      %p2327 = scmp.le.s32.totalorder 2, %s19
      // Predicated region
      $region133: #{tpu_custom_call.1} parent=5 // pred_check
        %p2328 = pneg %p2327
      $region134: #{tpu_custom_call.1} parent=5 // pred_check_branch
        %2330 = sbr.rel (%p2328) target = $region136
      $region135: #{tpu_custom_call.1} parent=5 // pred_region
        %s2331 = ssub.s32 %s19, 2
        // Predicated region
        $region137: #{tpu_custom_call.1} parent=135 // pred_check
          %p2332 = pneg %p272
        $region138: #{tpu_custom_call.1} parent=135 // pred_check_branch
          %2334 = sbr.rel (%p2332) target = $region140
        $region139: #{tpu_custom_call.1} parent=135 // pred_region
          %s2335 = sand.u32 %s257, 1
          %s2336 = scalar_lea.sflag [#allocation3], %s2335
          %s2337 = sand.u32 %s257, 1
          %s2338 = smul.addr %s2337, 128
          %s2339 = scalar_lea.vmem [#allocation7], %s2338
          %2340 = dma.done %s2336, 2048
        $region140: #{tpu_custom_call.1} parent=135 // pred_fallthru
          _
      $region136: #{tpu_custom_call.1} parent=5 // pred_fallthru
        _
    $region6: #{tpu_custom_call.1} parent=1 // loop_footer
      %s23 = sadd.s32 1, %s19
    $region7: #{tpu_custom_call.1} parent=1 // loop_footer_branch
      %18 = sbr.rel target = $region3
    $region8: #{tpu_custom_call.1} parent=1 // loop_exit
      _
    %2341 = vsyncpa [#allocation3], 1
    %s2342 = scalar_lea.sflag [#allocation3], 1
    %2343 = vsyncpa %s2342, 1
    %2344 = vsyncpa [#allocation4], 1
    %s2345 = scalar_lea.sflag [#allocation4], 1
    %2346 = vsyncpa %s2345, 1

</llo_original>
